<compile_context>
chip_gen: v7x
topology: tpu7x:2x2x1
jax: 0.10.0
libtpu: 0.0.40
codegen_flags: <defaults>
</compile_context>

<pallas_src>
import math

import numpy as np
import jax
import jax.numpy as jnp
from jax.experimental import pallas as pl
from jax.experimental.pallas import tpu as pltpu

EPS = 1e-5


def _round_up(x, m):
    return ((x + m - 1) // m) * m


# ----------------------------------------------------------------------------
# Kernel 1: fused ffp/ffq/ffa — single pallas_call over all token tiles.
#   * bf16 activation streaming, bf16 weights, f32 MXU accumulation.
#   * Weight/bias stacks are VMEM-resident (constant BlockSpec); the branch
#     (ffp/ffq/ffa) is selected in-kernel from the scalar-prefetched id array.
# ----------------------------------------------------------------------------
def _mlp3_kernel(bid_ref, x_ref, w_ref, b_ref, o_ref):
    bidx = bid_ref[pl.program_id(0)]                     # 0=ffp, 1=ffq, 2=ffa
    h = x_ref[...]                                       # (tm, d) bf16
    for l in range(3):                                   # static unroll
        w = w_ref[bidx * 3 + l]                          # (d, d) bf16 (VMEM select)
        b = b_ref[bidx * 3 + l]                          # (1, d) f32
        acc = jnp.dot(h, w, preferred_element_type=jnp.float32) + b
        acc = jnp.maximum(acc, 0.0)                      # ReLU
        h = acc.astype(jnp.bfloat16) if l < 2 else acc
    o_ref[...] = h                                       # (tm, d) f32


def fused_mlp3_apply(x_pre, x_q, x_a, w_stack, b_stack):
    """x_*: [T_i, d] f32; w_stack: [9,d,d] bf16; b_stack: [9,1,d] f32."""
    d = x_pre.shape[1]
    segs = (x_pre, x_q, x_a)
    Ts = [int(s.shape[0]) for s in segs]
    tm = min(1024, _round_up(max(Ts), 16))               # 16 sublanes (bf16 tile)
    padded, tiles = [], []
    for s, T in zip(segs, Ts):
        Tp = _round_up(T, tm)
        s = s.astype(jnp.bfloat16)                       # bf16 activation streaming
        padded.append(jnp.pad(s, ((0, Tp - T), (0, 0))) if Tp != T else s)
        tiles.append(Tp // tm)
    x_cat = jnp.concatenate(padded, axis=0)
    branch_ids = jnp.asarray(
        np.concatenate([np.full((n,), i, np.int32) for i, n in enumerate(tiles)]))
    num_tiles = int(sum(tiles))

    out = pl.pallas_call(
        _mlp3_kernel,
        out_shape=jax.ShapeDtypeStruct((x_cat.shape[0], d), jnp.float32),
        grid_spec=pltpu.PrefetchScalarGridSpec(
            num_scalar_prefetch=1,
            grid=(num_tiles,),
            in_specs=[
                pl.BlockSpec((tm, d), lambda i, bid: (i, 0)),
                # whole weight / bias stacks resident in VMEM (constant block)
                pl.BlockSpec(w_stack.shape, lambda i, bid: (0, 0, 0)),
                pl.BlockSpec(b_stack.shape, lambda i, bid: (0, 0, 0)),
            ],
            out_specs=pl.BlockSpec((tm, d), lambda i, bid: (i, 0)),
        ),
        # each tile writes a unique output block -> legal to shard across
        # v7x's two TensorCores; neutral on v5e/v6e.
        compiler_params=pltpu.CompilerParams(dimension_semantics=("parallel",)),
    )(branch_ids, x_cat, w_stack, b_stack)

    offs = np.cumsum([0] + [t * tm for t in tiles])
    return tuple(out[int(offs[i]):int(offs[i]) + Ts[i]] for i in range(3))


# ----------------------------------------------------------------------------
# Kernel 2: fused attention + ffr head, batched over Bt batch elements/step.
#   per batch element b:
#     topic_aware_p_b = softmax_sentences(score(L, P_b)) @ P_b      [K, d]
#     att_qa_b        = softmax_topics(score(L, mean_qa_b))         [K]
#     tilde_pre_b     = sum_k att_qa_b[k] * topic_aware_p_b[k]      [d]   (VPU)
#     mean_p_b        = mean(P_b, sentences)                        [d]
#     out_b           = ffr(mean_qa_b + mean_p_b)                   [1]
#   topic_aware_p and mean_p never leave VMEM.
# ----------------------------------------------------------------------------
def _make_att_ffr_kernel(n_hidden):
    def kernel(L_ref, par_ref, P_ref, M_ref, *refs):
        tilde_ref, out_ref = refs[-2], refs[-1]
        ffr_refs = refs[:2 * n_hidden + 2]

        L = L_ref[...]                                   # [K, d]
        P = P_ref[...]                                   # [Bt, Np, d]
        M = M_ref[...]                                   # [Bt, d]  (mean_qa)
        wp1 = par_ref[0:1, :]
        wp2 = par_ref[1:2, :]
        wq1 = par_ref[2:3, :]
        wq2 = par_ref[3:4, :]
        bp = par_ref[4:5, 0:1]                           # (1, 1)
        bq = par_ref[5:6, 0:1]                           # (1, 1)

        # --- att_pre: softmax over premise sentences (per topic, per batch) ---
        sL = jnp.sum(L * wp1, axis=-1)                   # [K]
        sP = jnp.sum(P * wp2[None], axis=-1)             # [Bt, Np]
        sc = sL[None, :, None] + sP[:, None, :] + bp     # [Bt, K, Np]
        sc = sc - jnp.max(sc, axis=-1, keepdims=True)
        e = jnp.exp(sc)
        att_p = e * pl.reciprocal(jnp.sum(e, axis=-1, keepdims=True), approx=True)
        TP = jnp.einsum('bkn,bnd->bkd', att_p, P,
                        preferred_element_type=jnp.float32)   # [Bt, K, d]

        # --- att_qa: softmax over topics ---
        sL2 = jnp.sum(L * wq1, axis=-1)                  # [K]
        sM = jnp.sum(M * wq2, axis=-1)                   # [Bt]
        sc2 = sL2[None, :] + sM[:, None] + bq            # [Bt, K]
        sc2 = sc2 - jnp.max(sc2, axis=-1, keepdims=True)
        e2 = jnp.exp(sc2)
        att_q = e2 * pl.reciprocal(jnp.sum(e2, axis=-1, keepdims=True), approx=True)

        # tilde_pre: broadcast-multiply + reduce over topics (no 1xK matmul)
        tilde_ref[...] = jnp.sum(att_q[:, :, None] * TP, axis=1)   # [Bt, d]

        # --- ffr head fused in the epilogue (mean_p stays in VMEM) ---
        mean_p = jnp.mean(P, axis=1)                     # [Bt, d]
        h = M + mean_p
        for l in range(n_hidden):
            w, b = ffr_refs[2 * l], ffr_refs[2 * l + 1]
            h = jnp.dot(h.astype(jnp.bfloat16), w[...],
                        preferred_element_type=jnp.float32) + b[...]
            h = jnp.maximum(h, 0.0)
        w_last, b_last = ffr_refs[-2], ffr_refs[-1]
        # final Linear(hidden, 1): VPU multiply + lane reduce (no N=1 matmul)
        out_ref[...] = jnp.sum(h * w_last[...], axis=-1, keepdims=True) + b_last[...]
    return kernel


def att_ffr_apply(L, att_pack, P, mean_qa, ffr):
    B, Np, d = P.shape
    K = L.shape[0]
    Bt = B if B <= 8 else 8
    B_pad = _round_up(B, Bt)
    if B_pad != B:
        P = jnp.pad(P, ((0, B_pad - B), (0, 0), (0, 0)))
        mean_qa = jnp.pad(mean_qa, ((0, B_pad - B), (0, 0)))

    n_hidden = len(ffr["hidden"])
    flat, ffr_specs = [], []
    for (w, b) in ffr["hidden"]:
        flat += [w, b]
        ffr_specs += [pl.BlockSpec(w.shape, lambda g: (0, 0)),
                      pl.BlockSpec(b.shape, lambda g: (0, 0))]
    flat += [ffr["w_last"], ffr["b_last"]]
    ffr_specs += [pl.BlockSpec(ffr["w_last"].shape, lambda g: (0, 0)),
                  pl.BlockSpec(ffr["b_last"].shape, lambda g: (0, 0))]

    tilde, out = pl.pallas_call(
        _make_att_ffr_kernel(n_hidden),
        out_shape=(jax.ShapeDtypeStruct((B_pad, d), jnp.float32),
                   jax.ShapeDtypeStruct((B_pad, 1), jnp.float32)),
        grid=(B_pad // Bt,),
        in_specs=[
            pl.BlockSpec((K, d), lambda g: (0, 0)),
            pl.BlockSpec((8, d), lambda g: (0, 0)),          # packed scorer params
            pl.BlockSpec((Bt, Np, d), lambda g: (g, 0, 0)),
            pl.BlockSpec((Bt, d), lambda g: (g, 0)),
        ] + ffr_specs,
        out_specs=(pl.BlockSpec((Bt, d), lambda g: (g, 0)),
                   pl.BlockSpec((Bt, 1), lambda g: (g, 0))),
        compiler_params=pltpu.CompilerParams(dimension_semantics=("parallel",)),
    )(L, att_pack, P, mean_qa, *flat)
    return tilde[:B], out[:B]


# ----------------------------------------------------------------------------
# Forward pass (glue in plain JAX, hot paths in the kernels above)
# ----------------------------------------------------------------------------
def contrastive_multi_mlp_forward(params, pre_vec, pre_num, q_vec, q_num, a_vec, a_num):
    del pre_num, q_num, a_num  # unused in the simplified reference forward
    B, Np, d = pre_vec.shape
    Nqa = q_vec.shape[1]

    pre_sentence, q_round, a_round = fused_mlp3_apply(
        pre_vec.reshape(-1, d), q_vec.reshape(-1, d), a_vec.reshape(-1, d),
        params["mlp3_w"], params["mlp3_b"])

    mean_q = jnp.mean(q_round.reshape(B, Nqa, d), axis=1)               # [B, d]
    mean_a = jnp.mean(a_round.reshape(B, Nqa, d), axis=1)               # [B, d]
    mean_qa = mean_q + mean_a                                           # [B, d]

    P = pre_sentence.reshape(B, Np, d)
    tilde_pre, out = att_ffr_apply(
        params["latent"], params["att_pack"], P, mean_qa, params["ffr"])

    return out, a_round, q_round, mean_a, mean_q, mean_qa, tilde_pre


# ----------------------------------------------------------------------------
# Deterministic parameter construction with BatchNorm folding
# ----------------------------------------------------------------------------
def _linear(key, in_dim, out_dim):
    kw, kb = jax.random.split(key)
    bound = 1.0 / math.sqrt(in_dim)
    w = jax.random.uniform(kw, (in_dim, out_dim), jnp.float32, -bound, bound)
    b = jax.random.uniform(kb, (out_dim,), jnp.float32, -bound, bound)
    return w, b


def _bn_fold(dim):
    # PyTorch BatchNorm1d fresh-init defaults, eval mode, folded to affine.
    gamma, beta = jnp.ones((dim,), jnp.float32), jnp.zeros((dim,), jnp.float32)
    mean, var = jnp.zeros((dim,), jnp.float32), jnp.ones((dim,), jnp.float32)
    scale = gamma / jnp.sqrt(var + EPS)
    shift = beta - mean * scale
    return scale, shift


def _fold_linear(scale, shift, w, b):
    # BN precedes the Linear in the module:
    # y = (x*scale + shift) @ W + b == x @ (scale[:,None]*W) + (shift@W + b)
    return scale[:, None] * w, shift @ w + b


def _mlp3_params(key, d):
    ws, bs = [], []
    for l in range(3):
        s, t = _bn_fold(d)
        w, b = _linear(jax.random.fold_in(key, l), d, d)
        wf, bf = _fold_linear(s, t, w, b)
        ws.append(wf)
        bs.append(bf)
    return jnp.stack(ws), jnp.stack(bs)          # [3,d,d] f32, [3,d] f32


def _ffr_params(key, d, hidden_size):
    dims = [d] + list(hidden_size)
    hidden = []
    for l in range(len(dims) - 1):
        s, t = _bn_fold(dims[l])
        w, b = _linear(jax.random.fold_in(key, l), dims[l], dims[l + 1])
        wf, bf = _fold_linear(s, t, w, b)
        hidden.append((wf.astype(jnp.bfloat16), bf.reshape(1, -1)))
    # output block: BN(last_hidden) -> Linear(last_hidden, 1), no ReLU
    s, t = _bn_fold(dims[-1])
    w, b = _linear(jax.random.fold_in(key, len(dims) - 1), dims[-1], 1)
    wf, bf = _fold_linear(s, t, w, b)
    return {"hidden": hidden,
            "w_last": wf.reshape(1, -1),         # [1, last_hidden] f32 (VPU path)
            "b_last": bf.reshape(1, 1)}


def _att_params(key, d):
    # concat scorer: score = topic @ w1 + x @ w2 + bias
    bound = 1.0 / math.sqrt(2 * d)
    k1, k2, k3 = jax.random.split(key, 3)
    w1 = jax.random.uniform(k1, (1, d), jnp.float32, -bound, bound)
    w2 = jax.random.uniform(k2, (1, d), jnp.float32, -bound, bound)
    bias = jax.random.uniform(k3, (1, 1), jnp.float32, -bound, bound)
    return w1, w2, bias


def _att_pack(key_pre, key_qa, d):
    wp1, wp2, bp = _att_params(key_pre, d)
    wq1, wq2, bq = _att_params(key_qa, d)
    pack = jnp.zeros((8, d), jnp.float32)
    pack = pack.at[0].set(wp1[0]).at[1].set(wp2[0])
    pack = pack.at[2].set(wq1[0]).at[3].set(wq2[0])
    pack = pack.at[4, 0].set(bp[0, 0]).at[5, 0].set(bq[0, 0])
    return pack


def init_params(key, d, K, hidden_size):
    ks = jax.random.split(key, 7)
    wp, bp = _mlp3_params(ks[1], d)   # ffp
    wq, bq = _mlp3_params(ks[2], d)   # ffq
    wa, ba = _mlp3_params(ks[3], d)   # ffa
    return {
        "latent": jax.random.uniform(ks[0], (K, d), jnp.float32),       # torch.rand([K, d])
        "mlp3_w": jnp.concatenate([wp, wq, wa], 0).astype(jnp.bfloat16),  # [9,d,d] bf16
        "mlp3_b": jnp.concatenate([bp, bq, ba], 0).reshape(9, 1, d),      # [9,1,d] f32
        "ffr": _ffr_params(ks[4], d, hidden_size),
        "att_pack": _att_pack(ks[5], ks[6], d),                          # [8, d] f32
    }


if __name__ == "__main__":
    B, Np, Nqa = 2, 8, 8
    d = 384            # embedding_size (ffp/ffq/ffa are hard-coded to 384 in the module)
    K = 10             # codebook_size
    hidden_size = (256, 256)   # ffr: hidden_layers=2

    key = jax.random.PRNGKey(0)
    kp, kq, ka, kparams = jax.random.split(key, 4)
    params = init_params(kparams, d, K, hidden_size)

    pre_vec = jax.random.normal(kp, (B, Np, d), jnp.float32)
    q_vec = jax.random.normal(kq, (B, Nqa, d), jnp.float32)
    a_vec = jax.random.normal(ka, (B, Nqa, d), jnp.float32)
    pre_num = jnp.full((B,), Np, dtype=jnp.int32)
    q_num = jnp.full((B,), Nqa, dtype=jnp.int32)
    a_num = jnp.full((B,), Nqa, dtype=jnp.int32)

    fwd = jax.jit(contrastive_multi_mlp_forward)
    outs = fwd(params, pre_vec, pre_num, q_vec, q_num, a_vec, a_num)
    jax.block_until_ready(outs)

    out, a_round, q_round, mean_a, mean_q, mean_qa, tilde_pre = outs
    assert out.shape == (B, 1)
    assert a_round.shape == (B * Nqa, d) and q_round.shape == (B * Nqa, d)
    assert mean_a.shape == (B, d) and mean_q.shape == (B, d) and mean_qa.shape == (B, d)
    assert tilde_pre.shape == (B, d)
    assert all(bool(jnp.all(jnp.isfinite(x))) for x in
               (out, a_round, q_round, mean_a, mean_q, mean_qa, tilde_pre))
    print("KERNEL_OK")
</pallas_src>

<mosaic_0001>
module attributes {stable_mosaic.version = 11 : i64} {
  func.func @kernel(%arg0: i32, %arg1: memref<10x384xf32, #tpu.memory_space<vmem>>, %arg2: memref<8x384xf32, #tpu.memory_space<vmem>>, %arg3: memref<2x8x384xf32, #tpu.memory_space<vmem>>, %arg4: memref<2x384xf32, #tpu.memory_space<vmem>>, %arg5: memref<384x256xbf16, #tpu.memory_space<vmem>>, %arg6: memref<1x256xf32, #tpu.memory_space<vmem>>, %arg7: memref<256x256xbf16, #tpu.memory_space<vmem>>, %arg8: memref<1x256xf32, #tpu.memory_space<vmem>>, %arg9: memref<1x256xf32, #tpu.memory_space<vmem>>, %arg10: memref<1x1xf32, #tpu.memory_space<vmem>>, %arg11: memref<2x384xf32, #tpu.memory_space<vmem>>, %arg12: memref<2x1xf32, #tpu.memory_space<vmem>>) attributes {dimension_semantics = [#tpu.dimension_semantics<parallel>], iteration_bounds = array<i64: 1>, scalar_prefetch = 0 : i64, scratch_operands = 0 : i64, tpu.core_type = #tpu.core_type<tc>, window_params = [{pipeline_mode = #tpu.pipeline_mode<synchronous>, transform_indices = @transform_0, window_bounds = array<i64: 10, 384>}, {pipeline_mode = #tpu.pipeline_mode<synchronous>, transform_indices = @transform_1, window_bounds = array<i64: 8, 384>}, {transform_indices = @transform_2, window_bounds = array<i64: 2, 8, 384>}, {transform_indices = @transform_3, window_bounds = array<i64: 2, 384>}, {pipeline_mode = #tpu.pipeline_mode<synchronous>, transform_indices = @transform_4, window_bounds = array<i64: 384, 256>}, {pipeline_mode = #tpu.pipeline_mode<synchronous>, transform_indices = @transform_5, window_bounds = array<i64: 1, 256>}, {pipeline_mode = #tpu.pipeline_mode<synchronous>, transform_indices = @transform_6, window_bounds = array<i64: 256, 256>}, {pipeline_mode = #tpu.pipeline_mode<synchronous>, transform_indices = @transform_7, window_bounds = array<i64: 1, 256>}, {pipeline_mode = #tpu.pipeline_mode<synchronous>, transform_indices = @transform_8, window_bounds = array<i64: 1, 256>}, {pipeline_mode = #tpu.pipeline_mode<synchronous>, transform_indices = @transform_9, window_bounds = array<i64: 1, 1>}, {transform_indices = @transform_10, window_bounds = array<i64: 2, 384>}, {transform_indices = @transform_11, window_bounds = array<i64: 2, 1>}]} {
    %c0 = arith.constant 0 : index
    %c0_0 = arith.constant 0 : index
    %0 = vector.load %arg1[%c0, %c0_0] : memref<10x384xf32, #tpu.memory_space<vmem>>, vector<10x384xf32>
    %c0_1 = arith.constant 0 : index
    %c0_2 = arith.constant 0 : index
    %c0_3 = arith.constant 0 : index
    %1 = vector.load %arg3[%c0_1, %c0_2, %c0_3] : memref<2x8x384xf32, #tpu.memory_space<vmem>>, vector<2x8x384xf32>
    %c0_4 = arith.constant 0 : index
    %c0_5 = arith.constant 0 : index
    %2 = vector.load %arg4[%c0_4, %c0_5] : memref<2x384xf32, #tpu.memory_space<vmem>>, vector<2x384xf32>
    %c0_6 = arith.constant 0 : index
    %c0_7 = arith.constant 0 : index
    %3 = vector.load %arg2[%c0_6, %c0_7] : memref<8x384xf32, #tpu.memory_space<vmem>>, vector<1x384xf32>
    %c1 = arith.constant 1 : index
    %c0_8 = arith.constant 0 : index
    %4 = vector.load %arg2[%c1, %c0_8] : memref<8x384xf32, #tpu.memory_space<vmem>>, vector<1x384xf32>
    %c2 = arith.constant 2 : index
    %c0_9 = arith.constant 0 : index
    %5 = vector.load %arg2[%c2, %c0_9] : memref<8x384xf32, #tpu.memory_space<vmem>>, vector<1x384xf32>
    %c3 = arith.constant 3 : index
    %c0_10 = arith.constant 0 : index
    %6 = vector.load %arg2[%c3, %c0_10] : memref<8x384xf32, #tpu.memory_space<vmem>>, vector<1x384xf32>
    %c4 = arith.constant 4 : index
    %c0_11 = arith.constant 0 : index
    %7 = vector.load %arg2[%c4, %c0_11] : memref<8x384xf32, #tpu.memory_space<vmem>>, vector<1x1xf32>
    %c5 = arith.constant 5 : index
    %c0_12 = arith.constant 0 : index
    %8 = vector.load %arg2[%c5, %c0_12] : memref<8x384xf32, #tpu.memory_space<vmem>>, vector<1x1xf32>
    %9 = vector.broadcast %3 : vector<1x384xf32> to vector<10x384xf32>
    %10 = arith.mulf %0, %9 : vector<10x384xf32>
    %cst = arith.constant dense<0.000000e+00> : vector<10xf32>
    %11 = vector.multi_reduction <add>, %10, %cst [1] : vector<10x384xf32> to vector<10xf32>
    %12 = vector.shape_cast %4 : vector<1x384xf32> to vector<1x1x384xf32>
    %13 = vector.broadcast %12 : vector<1x1x384xf32> to vector<2x8x384xf32>
    %14 = arith.mulf %1, %13 : vector<2x8x384xf32>
    %cst_13 = arith.constant dense<0.000000e+00> : vector<2x8xf32>
    %15 = vector.multi_reduction <add>, %14, %cst_13 [2] : vector<2x8x384xf32> to vector<2x8xf32>
    %16 = vector.shape_cast %11 : vector<10xf32> to vector<1x10x1xf32>
    %17 = vector.shape_cast %15 : vector<2x8xf32> to vector<2x1x8xf32>
    %18 = vector.broadcast %16 : vector<1x10x1xf32> to vector<2x10x8xf32>
    %19 = vector.broadcast %17 : vector<2x1x8xf32> to vector<2x10x8xf32>
    %20 = arith.addf %18, %19 : vector<2x10x8xf32>
    %21 = vector.shape_cast %7 : vector<1x1xf32> to vector<1x1x1xf32>
    %22 = vector.broadcast %21 : vector<1x1x1xf32> to vector<2x10x8xf32>
    %23 = arith.addf %20, %22 : vector<2x10x8xf32>
    %cst_14 = arith.constant dense<0xFF800000> : vector<2x10xf32>
    %24 = vector.multi_reduction <maximumf>, %23, %cst_14 [2] : vector<2x10x8xf32> to vector<2x10xf32>
    %25 = vector.shape_cast %24 : vector<2x10xf32> to vector<2x10x1xf32>
    %26 = vector.broadcast %25 : vector<2x10x1xf32> to vector<2x10x8xf32>
    %27 = arith.subf %23, %26 : vector<2x10x8xf32>
    %28 = math.exp %27 : vector<2x10x8xf32>
    %cst_15 = arith.constant dense<0.000000e+00> : vector<2x10xf32>
    %29 = vector.multi_reduction <add>, %28, %cst_15 [2] : vector<2x10x8xf32> to vector<2x10xf32>
    %30 = vector.shape_cast %29 : vector<2x10xf32> to vector<2x10x1xf32>
    %31 = tpu.reciprocal %30 {approx = true} : vector<2x10x1xf32> -> vector<2x10x1xf32>
    %32 = vector.broadcast %31 : vector<2x10x1xf32> to vector<2x10x8xf32>
    %33 = arith.mulf %28, %32 : vector<2x10x8xf32>
    "tpu.trace_start"() <{level = 10 : i32, message = "bkn,bnd->bkd"}> : () -> ()
    %cst_16 = arith.constant dense<0.000000e+00> : vector<2x10x384xf32>
    %34 = tpu.matmul %33, %1, %cst_16 {dimension_numbers = #tpu.dot_dimension_numbers<[2], [1], [1], [2], [0, 0, 0, 1, 1, 2], [0], [0]>} : vector<2x10x8xf32>, vector<2x8x384xf32>, vector<2x10x384xf32> -> vector<2x10x384xf32>
    "tpu.trace_stop"() : () -> ()
    %35 = vector.broadcast %5 : vector<1x384xf32> to vector<10x384xf32>
    %36 = arith.mulf %0, %35 : vector<10x384xf32>
    %cst_17 = arith.constant dense<0.000000e+00> : vector<10xf32>
    %37 = vector.multi_reduction <add>, %36, %cst_17 [1] : vector<10x384xf32> to vector<10xf32>
    %38 = vector.broadcast %6 : vector<1x384xf32> to vector<2x384xf32>
    %39 = arith.mulf %2, %38 : vector<2x384xf32>
    %cst_18 = arith.constant dense<0.000000e+00> : vector<2xf32>
    %40 = vector.multi_reduction <add>, %39, %cst_18 [1] : vector<2x384xf32> to vector<2xf32>
    %41 = vector.shape_cast %37 : vector<10xf32> to vector<1x10xf32>
    %42 = vector.shape_cast %40 : vector<2xf32> to vector<2x1xf32>
    %43 = vector.broadcast %41 : vector<1x10xf32> to vector<2x10xf32>
    %44 = vector.broadcast %42 : vector<2x1xf32> to vector<2x10xf32>
    %45 = arith.addf %43, %44 : vector<2x10xf32>
    %46 = vector.broadcast %8 : vector<1x1xf32> to vector<2x10xf32>
    %47 = arith.addf %45, %46 : vector<2x10xf32>
    %cst_19 = arith.constant dense<0xFF800000> : vector<2xf32>
    %48 = vector.multi_reduction <maximumf>, %47, %cst_19 [1] : vector<2x10xf32> to vector<2xf32>
    %49 = vector.shape_cast %48 : vector<2xf32> to vector<2x1xf32>
    %50 = vector.broadcast %49 : vector<2x1xf32> to vector<2x10xf32>
    %51 = arith.subf %47, %50 : vector<2x10xf32>
    %52 = math.exp %51 : vector<2x10xf32>
    %cst_20 = arith.constant dense<0.000000e+00> : vector<2xf32>
    %53 = vector.multi_reduction <add>, %52, %cst_20 [1] : vector<2x10xf32> to vector<2xf32>
    %54 = vector.shape_cast %53 : vector<2xf32> to vector<2x1xf32>
    %55 = tpu.reciprocal %54 {approx = true} : vector<2x1xf32> -> vector<2x1xf32>
    %56 = vector.broadcast %55 : vector<2x1xf32> to vector<2x10xf32>
    %57 = arith.mulf %52, %56 : vector<2x10xf32>
    %58 = vector.shape_cast %57 : vector<2x10xf32> to vector<2x10x1xf32>
    %59 = vector.broadcast %58 : vector<2x10x1xf32> to vector<2x10x384xf32>
    %60 = arith.mulf %59, %34 : vector<2x10x384xf32>
    %cst_21 = arith.constant dense<0.000000e+00> : vector<2x384xf32>
    %61 = vector.multi_reduction <add>, %60, %cst_21 [1] : vector<2x10x384xf32> to vector<2x384xf32>
    %c0_22 = arith.constant 0 : index
    %c0_23 = arith.constant 0 : index
    %62 = vector.load %arg11[%c0_22, %c0_23] : memref<2x384xf32, #tpu.memory_space<vmem>>, vector<2x384xf32>
    tpu.vector_store %arg11[%c0_22, %c0_23], %61 {strides = array<i32>} : memref<2x384xf32, #tpu.memory_space<vmem>>, vector<2x384xf32>,
    %cst_24 = arith.constant dense<0.000000e+00> : vector<2x384xf32>
    %63 = vector.multi_reduction <add>, %1, %cst_24 [1] : vector<2x8x384xf32> to vector<2x384xf32>
    %cst_25 = arith.constant 8.000000e+00 : f32
    %64 = vector.broadcast %cst_25 : f32 to vector<2x384xf32>
    %65 = arith.divf %63, %64 : vector<2x384xf32>
    %66 = arith.addf %2, %65 : vector<2x384xf32>
    %67 = arith.truncf %66 : vector<2x384xf32> to vector<2x384xbf16>
    %c0_26 = arith.constant 0 : index
    %c0_27 = arith.constant 0 : index
    %68 = vector.load %arg5[%c0_26, %c0_27] : memref<384x256xbf16, #tpu.memory_space<vmem>>, vector<384x256xbf16>
    %cst_28 = arith.constant dense<0.000000e+00> : vector<2x256xf32>
    %69 = tpu.matmul %67, %68, %cst_28 {dimension_numbers = #tpu.dot_dimension_numbers<[1], [0], [0], [1], [0, 0, 1, 1], [], []>} : vector<2x384xbf16>, vector<384x256xbf16>, vector<2x256xf32> -> vector<2x256xf32>
    %c0_29 = arith.constant 0 : index
    %c0_30 = arith.constant 0 : index
    %70 = vector.load %arg6[%c0_29, %c0_30] : memref<1x256xf32, #tpu.memory_space<vmem>>, vector<1x256xf32>
    %71 = vector.broadcast %70 : vector<1x256xf32> to vector<2x256xf32>
    %72 = arith.addf %69, %71 : vector<2x256xf32>
    %cst_31 = arith.constant 0.000000e+00 : f32
    %73 = vector.broadcast %cst_31 : f32 to vector<2x256xf32>
    %74 = arith.maximumf %72, %73 : vector<2x256xf32>
    %75 = arith.truncf %74 : vector<2x256xf32> to vector<2x256xbf16>
    %c0_32 = arith.constant 0 : index
    %c0_33 = arith.constant 0 : index
    %76 = vector.load %arg7[%c0_32, %c0_33] : memref<256x256xbf16, #tpu.memory_space<vmem>>, vector<256x256xbf16>
    %cst_34 = arith.constant dense<0.000000e+00> : vector<2x256xf32>
    %77 = tpu.matmul %75, %76, %cst_34 {dimension_numbers = #tpu.dot_dimension_numbers<[1], [0], [0], [1], [0, 0, 1, 1], [], []>} : vector<2x256xbf16>, vector<256x256xbf16>, vector<2x256xf32> -> vector<2x256xf32>
    %c0_35 = arith.constant 0 : index
    %c0_36 = arith.constant 0 : index
    %78 = vector.load %arg8[%c0_35, %c0_36] : memref<1x256xf32, #tpu.memory_space<vmem>>, vector<1x256xf32>
    %79 = vector.broadcast %78 : vector<1x256xf32> to vector<2x256xf32>
    %80 = arith.addf %77, %79 : vector<2x256xf32>
    %cst_37 = arith.constant 0.000000e+00 : f32
    %81 = vector.broadcast %cst_37 : f32 to vector<2x256xf32>
    %82 = arith.maximumf %80, %81 : vector<2x256xf32>
    %c0_38 = arith.constant 0 : index
    %c0_39 = arith.constant 0 : index
    %83 = vector.load %arg9[%c0_38, %c0_39] : memref<1x256xf32, #tpu.memory_space<vmem>>, vector<1x256xf32>
    %84 = vector.broadcast %83 : vector<1x256xf32> to vector<2x256xf32>
    %85 = arith.mulf %82, %84 : vector<2x256xf32>
    %cst_40 = arith.constant dense<0.000000e+00> : vector<2xf32>
    %86 = vector.multi_reduction <add>, %85, %cst_40 [1] : vector<2x256xf32> to vector<2xf32>
    %87 = vector.shape_cast %86 : vector<2xf32> to vector<2x1xf32>
    %c0_41 = arith.constant 0 : index
    %c0_42 = arith.constant 0 : index
    %88 = vector.load %arg10[%c0_41, %c0_42] : memref<1x1xf32, #tpu.memory_space<vmem>>, vector<1x1xf32>
    %89 = vector.broadcast %88 : vector<1x1xf32> to vector<2x1xf32>
    %90 = arith.addf %87, %89 : vector<2x1xf32>
    %c0_43 = arith.constant 0 : index
    %c0_44 = arith.constant 0 : index
    %91 = vector.load %arg12[%c0_43, %c0_44] : memref<2x1xf32, #tpu.memory_space<vmem>>, vector<2x1xf32>
    tpu.vector_store %arg12[%c0_43, %c0_44], %90 {strides = array<i32>} : memref<2x1xf32, #tpu.memory_space<vmem>>, vector<2x1xf32>,
    return
  }
  func.func @transform_0(%arg0: i32) -> (i32, i32) {
    %c0_i32 = arith.constant 0 : i32
    %c0_i32_0 = arith.constant 0 : i32
    %c0_i32_1 = arith.constant 0 : i32
    return %c0_i32, %c0_i32_0 : i32, i32
  }
  func.func @transform_1(%arg0: i32) -> (i32, i32) {
    %c0_i32 = arith.constant 0 : i32
    %c0_i32_0 = arith.constant 0 : i32
    %c0_i32_1 = arith.constant 0 : i32
    return %c0_i32, %c0_i32_0 : i32, i32
  }
  func.func @transform_2(%arg0: i32) -> (i32, i32, i32) {
    %c0_i32 = arith.constant 0 : i32
    %c0_i32_0 = arith.constant 0 : i32
    %c0_i32_1 = arith.constant 0 : i32
    return %arg0, %c0_i32, %c0_i32_0 : i32, i32, i32
  }
  func.func @transform_3(%arg0: i32) -> (i32, i32) {
    %c0_i32 = arith.constant 0 : i32
    %c0_i32_0 = arith.constant 0 : i32
    return %arg0, %c0_i32 : i32, i32
  }
  func.func @transform_4(%arg0: i32) -> (i32, i32) {
    %c0_i32 = arith.constant 0 : i32
    %c0_i32_0 = arith.constant 0 : i32
    %c0_i32_1 = arith.constant 0 : i32
    return %c0_i32, %c0_i32_0 : i32, i32
  }
  func.func @transform_5(%arg0: i32) -> (i32, i32) {
    %c0_i32 = arith.constant 0 : i32
    %c0_i32_0 = arith.constant 0 : i32
    %c0_i32_1 = arith.constant 0 : i32
    return %c0_i32, %c0_i32_0 : i32, i32
  }
  func.func @transform_6(%arg0: i32) -> (i32, i32) {
    %c0_i32 = arith.constant 0 : i32
    %c0_i32_0 = arith.constant 0 : i32
    %c0_i32_1 = arith.constant 0 : i32
    return %c0_i32, %c0_i32_0 : i32, i32
  }
  func.func @transform_7(%arg0: i32) -> (i32, i32) {
    %c0_i32 = arith.constant 0 : i32
    %c0_i32_0 = arith.constant 0 : i32
    %c0_i32_1 = arith.constant 0 : i32
    return %c0_i32, %c0_i32_0 : i32, i32
  }
  func.func @transform_8(%arg0: i32) -> (i32, i32) {
    %c0_i32 = arith.constant 0 : i32
    %c0_i32_0 = arith.constant 0 : i32
    %c0_i32_1 = arith.constant 0 : i32
    return %c0_i32, %c0_i32_0 : i32, i32
  }
  func.func @transform_9(%arg0: i32) -> (i32, i32) {
    %c0_i32 = arith.constant 0 : i32
    %c0_i32_0 = arith.constant 0 : i32
    %c0_i32_1 = arith.constant 0 : i32
    return %c0_i32, %c0_i32_0 : i32, i32
  }
  func.func @transform_10(%arg0: i32) -> (i32, i32) {
    %c0_i32 = arith.constant 0 : i32
    %c0_i32_0 = arith.constant 0 : i32
    return %arg0, %c0_i32 : i32, i32
  }
  func.func @transform_11(%arg0: i32) -> (i32, i32) {
    %c0_i32 = arith.constant 0 : i32
    %c0_i32_0 = arith.constant 0 : i32
    return %arg0, %c0_i32 : i32, i32
  }
}

module attributes {stable_mosaic.version = 11 : i64} {
  func.func @_mlp3_kernel(%arg0: i32, %arg1: memref<3xi32, #tpu.memory_space<smem>>, %arg2: memref<16x384xbf16, #tpu.memory_space<vmem>>, %arg3: memref<9x384x384xbf16, #tpu.memory_space<vmem>>, %arg4: memref<9x1x384xf32, #tpu.memory_space<vmem>>, %arg5: memref<16x384xf32, #tpu.memory_space<vmem>>) attributes {dimension_semantics = [#tpu.dimension_semantics<parallel>], iteration_bounds = array<i64: 3>, scalar_prefetch = 1 : i64, scratch_operands = 0 : i64, tpu.core_type = #tpu.core_type<tc>, window_params = [{transform_indices = @transform_0, window_bounds = array<i64: 16, 384>}, {pipeline_mode = #tpu.pipeline_mode<synchronous>, transform_indices = @transform_1, window_bounds = array<i64: 9, 384, 384>}, {pipeline_mode = #tpu.pipeline_mode<synchronous>, transform_indices = @transform_2, window_bounds = array<i64: 9, 1, 384>}, {transform_indices = @transform_3, window_bounds = array<i64: 16, 384>}]} {
    %0 = arith.index_cast %arg0 : i32 to index
    %1 = memref.load %arg1[%0] : memref<3xi32, #tpu.memory_space<smem>>
    %c0 = arith.constant 0 : index
    %c0_0 = arith.constant 0 : index
    %2 = vector.load %arg2[%c0, %c0_0] : memref<16x384xbf16, #tpu.memory_space<vmem>>, vector<16x384xbf16>
    %c3_i32 = arith.constant 3 : i32
    %3 = arith.muli %1, %c3_i32 : i32
    %c0_i32 = arith.constant 0 : i32
    %4 = arith.addi %3, %c0_i32 : i32
    %5 = arith.index_cast %4 : i32 to index
    %c0_1 = arith.constant 0 : index
    %c0_2 = arith.constant 0 : index
    %6 = vector.load %arg3[%5, %c0_1, %c0_2] : memref<9x384x384xbf16, #tpu.memory_space<vmem>>, vector<1x384x384xbf16>
    %7 = vector.shape_cast %6 : vector<1x384x384xbf16> to vector<384x384xbf16>
    %c3_i32_3 = arith.constant 3 : i32
    %8 = arith.muli %1, %c3_i32_3 : i32
    %c0_i32_4 = arith.constant 0 : i32
    %9 = arith.addi %8, %c0_i32_4 : i32
    %10 = arith.index_cast %9 : i32 to index
    %c0_5 = arith.constant 0 : index
    %c0_6 = arith.constant 0 : index
    %11 = vector.load %arg4[%10, %c0_5, %c0_6] : memref<9x1x384xf32, #tpu.memory_space<vmem>>, vector<1x1x384xf32>
    %12 = vector.shape_cast %11 : vector<1x1x384xf32> to vector<1x384xf32>
    %cst = arith.constant dense<0.000000e+00> : vector<16x384xf32>
    %13 = tpu.matmul %2, %7, %cst {dimension_numbers = #tpu.dot_dimension_numbers<[1], [0], [0], [1], [0, 0, 1, 1], [], []>} : vector<16x384xbf16>, vector<384x384xbf16>, vector<16x384xf32> -> vector<16x384xf32>
    %14 = vector.broadcast %12 : vector<1x384xf32> to vector<16x384xf32>
    %15 = arith.addf %13, %14 : vector<16x384xf32>
    %cst_7 = arith.constant 0.000000e+00 : f32
    %16 = vector.broadcast %cst_7 : f32 to vector<16x384xf32>
    %17 = arith.maximumf %15, %16 : vector<16x384xf32>
    %18 = arith.truncf %17 : vector<16x384xf32> to vector<16x384xbf16>
    %c3_i32_8 = arith.constant 3 : i32
    %19 = arith.muli %1, %c3_i32_8 : i32
    %c1_i32 = arith.constant 1 : i32
    %20 = arith.addi %19, %c1_i32 : i32
    %21 = arith.index_cast %20 : i32 to index
    %c0_9 = arith.constant 0 : index
    %c0_10 = arith.constant 0 : index
    %22 = vector.load %arg3[%21, %c0_9, %c0_10] : memref<9x384x384xbf16, #tpu.memory_space<vmem>>, vector<1x384x384xbf16>
    %23 = vector.shape_cast %22 : vector<1x384x384xbf16> to vector<384x384xbf16>
    %c3_i32_11 = arith.constant 3 : i32
    %24 = arith.muli %1, %c3_i32_11 : i32
    %c1_i32_12 = arith.constant 1 : i32
    %25 = arith.addi %24, %c1_i32_12 : i32
    %26 = arith.index_cast %25 : i32 to index
    %c0_13 = arith.constant 0 : index
    %c0_14 = arith.constant 0 : index
    %27 = vector.load %arg4[%26, %c0_13, %c0_14] : memref<9x1x384xf32, #tpu.memory_space<vmem>>, vector<1x1x384xf32>
    %28 = vector.shape_cast %27 : vector<1x1x384xf32> to vector<1x384xf32>
    %cst_15 = arith.constant dense<0.000000e+00> : vector<16x384xf32>
    %29 = tpu.matmul %18, %23, %cst_15 {dimension_numbers = #tpu.dot_dimension_numbers<[1], [0], [0], [1], [0, 0, 1, 1], [], []>} : vector<16x384xbf16>, vector<384x384xbf16>, vector<16x384xf32> -> vector<16x384xf32>
    %30 = vector.broadcast %28 : vector<1x384xf32> to vector<16x384xf32>
    %31 = arith.addf %29, %30 : vector<16x384xf32>
    %cst_16 = arith.constant 0.000000e+00 : f32
    %32 = vector.broadcast %cst_16 : f32 to vector<16x384xf32>
    %33 = arith.maximumf %31, %32 : vector<16x384xf32>
    %34 = arith.truncf %33 : vector<16x384xf32> to vector<16x384xbf16>
    %c3_i32_17 = arith.constant 3 : i32
    %35 = arith.muli %1, %c3_i32_17 : i32
    %c2_i32 = arith.constant 2 : i32
    %36 = arith.addi %35, %c2_i32 : i32
    %37 = arith.index_cast %36 : i32 to index
    %c0_18 = arith.constant 0 : index
    %c0_19 = arith.constant 0 : index
    %38 = vector.load %arg3[%37, %c0_18, %c0_19] : memref<9x384x384xbf16, #tpu.memory_space<vmem>>, vector<1x384x384xbf16>
    %39 = vector.shape_cast %38 : vector<1x384x384xbf16> to vector<384x384xbf16>
    %c3_i32_20 = arith.constant 3 : i32
    %40 = arith.muli %1, %c3_i32_20 : i32
    %c2_i32_21 = arith.constant 2 : i32
    %41 = arith.addi %40, %c2_i32_21 : i32
    %42 = arith.index_cast %41 : i32 to index
    %c0_22 = arith.constant 0 : index
    %c0_23 = arith.constant 0 : index
    %43 = vector.load %arg4[%42, %c0_22, %c0_23] : memref<9x1x384xf32, #tpu.memory_space<vmem>>, vector<1x1x384xf32>
    %44 = vector.shape_cast %43 : vector<1x1x384xf32> to vector<1x384xf32>
    %cst_24 = arith.constant dense<0.000000e+00> : vector<16x384xf32>
    %45 = tpu.matmul %34, %39, %cst_24 {dimension_numbers = #tpu.dot_dimension_numbers<[1], [0], [0], [1], [0, 0, 1, 1], [], []>} : vector<16x384xbf16>, vector<384x384xbf16>, vector<16x384xf32> -> vector<16x384xf32>
    %46 = vector.broadcast %44 : vector<1x384xf32> to vector<16x384xf32>
    %47 = arith.addf %45, %46 : vector<16x384xf32>
    %cst_25 = arith.constant 0.000000e+00 : f32
    %48 = vector.broadcast %cst_25 : f32 to vector<16x384xf32>
    %49 = arith.maximumf %47, %48 : vector<16x384xf32>
    %c0_26 = arith.constant 0 : index
    %c0_27 = arith.constant 0 : index
    %50 = vector.load %arg5[%c0_26, %c0_27] : memref<16x384xf32, #tpu.memory_space<vmem>>, vector<16x384xf32>
    tpu.vector_store %arg5[%c0_26, %c0_27], %49 {strides = array<i32>} : memref<16x384xf32, #tpu.memory_space<vmem>>, vector<16x384xf32>,
    return
  }
  func.func @transform_0(%arg0: i32, %arg1: memref<3xi32, #tpu.memory_space<smem>>) -> (i32, i32) {
    %c0_i32 = arith.constant 0 : i32
    %c0_i32_0 = arith.constant 0 : i32
    return %arg0, %c0_i32 : i32, i32
  }
  func.func @transform_1(%arg0: i32, %arg1: memref<3xi32, #tpu.memory_space<smem>>) -> (i32, i32, i32) {
    %c0_i32 = arith.constant 0 : i32
    %c0_i32_0 = arith.constant 0 : i32
    %c0_i32_1 = arith.constant 0 : i32
    %c0_i32_2 = arith.constant 0 : i32
    return %c0_i32, %c0_i32_0, %c0_i32_1 : i32, i32, i32
  }
  func.func @transform_2(%arg0: i32, %arg1: memref<3xi32, #tpu.memory_space<smem>>) -> (i32, i32, i32) {
    %c0_i32 = arith.constant 0 : i32
    %c0_i32_0 = arith.constant 0 : i32
    %c0_i32_1 = arith.constant 0 : i32
    %c0_i32_2 = arith.constant 0 : i32
    return %c0_i32, %c0_i32_0, %c0_i32_1 : i32, i32, i32
  }
  func.func @transform_3(%arg0: i32, %arg1: memref<3xi32, #tpu.memory_space<smem>>) -> (i32, i32) {
    %c0_i32 = arith.constant 0 : i32
    %c0_i32_0 = arith.constant 0 : i32
    return %arg0, %c0_i32 : i32, i32
  }
}

</mosaic_0001>

<llo_original>
// kernel: contrastive_multi_mlp_forward.3
$region0: #{contrastive_multi_mlp_forward.3}
  #allocation0 [shape = 'u32[]', space=smem, size = 0x4, offset = 0x4, fixed_abs, tag = 'smem constant byte address 0x4 - core index']
  #allocation1 [shape = 'u32[144,128]{1,0:T(1,128)}', space=vmem, size = 0x12000, scoped, tag = 'internal scratch']
  #allocation2 [shape = 'f32[1,1]{1,0:T(1,128)S(1)}', space=vmem, size = 0x200, scoped, tag = 'scoped memory for contrastive_multi_mlp_forward.3']
  %s0 = inlined_call_operand.vmem [shape: f32[10,384], index: 0, kind: input, shape index: {}]
  %s1 = inlined_call_operand.vmem [shape: f32[8,384], index: 1, kind: input, shape index: {}]
  %s2 = inlined_call_operand.vmem [shape: f32[2,8,384], index: 2, kind: input, shape index: {}]
  %s3 = inlined_call_operand.vmem [shape: f32[2,384], index: 3, kind: input, shape index: {}]
  %s4 = inlined_call_operand.vmem [shape: bf16[384,256], index: 4, kind: input, shape index: {}]
  %s5 = inlined_call_operand.vmem [shape: f32[1,256], index: 5, kind: input, shape index: {}]
  %s6 = inlined_call_operand.vmem [shape: bf16[256,256], index: 6, kind: input, shape index: {}]
  %s7 = inlined_call_operand.vmem [shape: f32[1,256], index: 7, kind: input, shape index: {}]
  %s8 = inlined_call_operand.vmem [shape: f32[1,256], index: 8, kind: input, shape index: {}]
  %s9 = inlined_call_operand.<no memory space> [shape: f32[1,1], index: 9, kind: input, shape index: {}]
  %s10 = inlined_call_operand.hbm [shape: f32[2,384], index: 10, kind: output, shape index: {0}]
  %s11 = inlined_call_operand.vmem [shape: f32[2,1], index: 11, kind: output, shape index: {1}]
  %12 = xla_tuple %s10, %s11
  %s13 = sld [smem:[#allocation0]]
  $region58: #{contrastive_multi_mlp_forward.3} parent=0
    _
  %s15 = ssub.s32 1, %s13
  %s16 = scalar_select 0, %s15, %s13
  %v17 = vstv %s9
  %18 = vst [vmem:[#allocation2] sm:$0x1] %v17
  $region1: #{contrastive_multi_mlp_forward.3} parent=0
    #allocation3 [shape = 'u8[3072]{0}', space=vmem, size = 0xc00, scoped, tag = 'output window, operand 0, single buffered']
    #allocation4 [shape = 's32[1]{0}', space=sflag, size = 0x4, scoped, tag = 'scoped memory for contrastive_multi_mlp_forward.3']
    %19 = vsyncpa [#allocation4], 0
    // Predicated region
    $region2: #{contrastive_multi_mlp_forward.3} parent=1 // pred_check
      _
    $region3: #{contrastive_multi_mlp_forward.3} parent=1 // pred_check_branch
      %21 = sbr.rel (0) target = $region5
    $region4: #{contrastive_multi_mlp_forward.3} parent=1 // pred_region
      _
    $region5: #{contrastive_multi_mlp_forward.3} parent=1 // pred_fallthru
      _
    // Predicated region
    $region6: #{contrastive_multi_mlp_forward.3} parent=1 // pred_check
      _
    $region7: #{contrastive_multi_mlp_forward.3} parent=1 // pred_check_branch
      %23 = sbr.rel (0) target = $region9
    $region8: #{contrastive_multi_mlp_forward.3} parent=1 // pred_region
      _
    $region9: #{contrastive_multi_mlp_forward.3} parent=1 // pred_fallthru
      _
    // Predicated region
    $region10: #{contrastive_multi_mlp_forward.3} parent=1 // pred_check
      _
    $region11: #{contrastive_multi_mlp_forward.3} parent=1 // pred_check_branch
      %25 = sbr.rel (0) target = $region13
    $region12: #{contrastive_multi_mlp_forward.3} parent=1 // pred_region
      _
    $region13: #{contrastive_multi_mlp_forward.3} parent=1 // pred_fallthru
      _
    // Predicated region
    $region14: #{contrastive_multi_mlp_forward.3} parent=1 // pred_check
      _
    $region15: #{contrastive_multi_mlp_forward.3} parent=1 // pred_check_branch
      %27 = sbr.rel (0) target = $region17
    $region16: #{contrastive_multi_mlp_forward.3} parent=1 // pred_region
      _
    $region17: #{contrastive_multi_mlp_forward.3} parent=1 // pred_fallthru
      _
    // Predicated region
    $region18: #{contrastive_multi_mlp_forward.3} parent=1 // pred_check
      _
    $region19: #{contrastive_multi_mlp_forward.3} parent=1 // pred_check_branch
      %29 = sbr.rel (0) target = $region21
    $region20: #{contrastive_multi_mlp_forward.3} parent=1 // pred_region
      _
    $region21: #{contrastive_multi_mlp_forward.3} parent=1 // pred_fallthru
      _
    // Predicated region
    $region22: #{contrastive_multi_mlp_forward.3} parent=1 // pred_check
      _
    $region23: #{contrastive_multi_mlp_forward.3} parent=1 // pred_check_branch
      %31 = sbr.rel (0) target = $region25
    $region24: #{contrastive_multi_mlp_forward.3} parent=1 // pred_region
      _
    $region25: #{contrastive_multi_mlp_forward.3} parent=1 // pred_fallthru
      _
    // Predicated region
    $region26: #{contrastive_multi_mlp_forward.3} parent=1 // pred_check
      _
    $region27: #{contrastive_multi_mlp_forward.3} parent=1 // pred_check_branch
      %33 = sbr.rel (0) target = $region29
    $region28: #{contrastive_multi_mlp_forward.3} parent=1 // pred_region
      _
    $region29: #{contrastive_multi_mlp_forward.3} parent=1 // pred_fallthru
      _
    // Predicated region
    $region30: #{contrastive_multi_mlp_forward.3} parent=1 // pred_check
      _
    $region31: #{contrastive_multi_mlp_forward.3} parent=1 // pred_check_branch
      %35 = sbr.rel (0) target = $region33
    $region32: #{contrastive_multi_mlp_forward.3} parent=1 // pred_region
      _
    $region33: #{contrastive_multi_mlp_forward.3} parent=1 // pred_fallthru
      _
    // Predicated region
    $region34: #{contrastive_multi_mlp_forward.3} parent=1 // pred_check
      _
    $region35: #{contrastive_multi_mlp_forward.3} parent=1 // pred_check_branch
      %37 = sbr.rel (0) target = $region37
    $region36: #{contrastive_multi_mlp_forward.3} parent=1 // pred_region
      _
    $region37: #{contrastive_multi_mlp_forward.3} parent=1 // pred_fallthru
      _
    // Predicated region
    $region38: #{contrastive_multi_mlp_forward.3} parent=1 // pred_check
      _
    $region39: #{contrastive_multi_mlp_forward.3} parent=1 // pred_check_branch
      %39 = sbr.rel (0) target = $region41
    $region40: #{contrastive_multi_mlp_forward.3} parent=1 // pred_region
      _
    $region41: #{contrastive_multi_mlp_forward.3} parent=1 // pred_fallthru
      _
    %v41 = vld [vmem:[%s0] sm:$0xff]
    %v42 = vld [vmem:[%s0 + $0x8] sm:$0xff]
    %v43 = vld [vmem:[%s0 + $0x10] sm:$0xff]
    %v44 = vld [vmem:[%s0 + $0x18] sm:$0x3]
    %v45 = vld [vmem:[%s0 + $0x20] sm:$0x3]
    %v46 = vld [vmem:[%s0 + $0x28] sm:$0x3]
    %v47 = vld [vmem:[%s2] sm:$0xff]
    %v48 = vld [vmem:[%s2 + $0x8] sm:$0xff]
    %v49 = vld [vmem:[%s2 + $0x10] sm:$0xff]
    %v50 = vld [vmem:[%s2 + $0x18] sm:$0xff]
    %v51 = vld [vmem:[%s2 + $0x20] sm:$0xff]
    %v52 = vld [vmem:[%s2 + $0x28] sm:$0xff]
    %v53 = vld [vmem:[%s3] sm:$0x3f]
    %v54 = vld [vmem:[%s1] ss:$8 sm:$0x7]
    %s55 = scalar_lea.vmem %s1, 1
    %v56 = vld [vmem:[%s55] ss:$8 sm:$0x7]
    %s57 = scalar_lea.vmem %s1, 2
    %v58 = vld [vmem:[%s57] ss:$8 sm:$0x7]
    %s59 = scalar_lea.vmem %s1, 3
    %v60 = vld [vmem:[%s59] ss:$8 sm:$0x7]
    %v61 = vld [vmem:[%s1 + $0x4] ss:$0 sm:$0xff]
    %v62 = vld [vmem:[%s1 + $0x5] ss:$0 sm:$0xff]
    %v64 = vlaneseq
    %v65 = vshrl.u32 %v64, 7
    %v66 = vsub.s32 0, %v65
    %v67 = vrot.slane %v54, %v66
    %v68 = vlaneseq
    %v69 = vshrl.u32 %v68, 7
    %v70 = vsub.s32 1, %v69
    %v71 = vrot.slane %v54, %v70
    %v72 = vlaneseq
    %v73 = vshrl.u32 %v72, 7
    %v74 = vsub.s32 2, %v73
    %v75 = vrot.slane %v54, %v74
    %v79 = vmul.f32 %v41, %v67
    %v80 = vmul.f32 %v42, %v71
    %v81 = vmul.f32 %v43, %v75
    %v82 = vmul.f32 %v44, %v67
    %v83 = vmul.f32 %v45, %v71
    %v84 = vmul.f32 %v46, %v75
    %v85 = vadd.f32 %v79, %v80
    %v86 = vadd.f32 %v85, %v81
    %87 = vadd.xlane.f32.xlu0 %v86
    %v88 = vpop.xlane.xlu0 %87
    %vm89 = vcmask 1041408
    %v90 = vsel %vm89, %v82, 0.0
    %v91 = vsel %vm89, %v83, 0.0
    %v92 = vadd.f32 %v90, %v91
    %v93 = vsel %vm89, %v84, 0.0
    %v94 = vadd.f32 %v92, %v93
    %95 = vadd.xlane.f32.xlu0 %v94
    %v96 = vpop.xlane.xlu0 %95
    %v98 = vlaneseq
    %v99 = vshrl.u32 %v98, 7
    %v100 = vsub.s32 0, %v99
    %v101 = vrot.slane %v56, %v100
    %v102 = vlaneseq
    %v103 = vshrl.u32 %v102, 7
    %v104 = vsub.s32 1, %v103
    %v105 = vrot.slane %v56, %v104
    %v106 = vlaneseq
    %v107 = vshrl.u32 %v106, 7
    %v108 = vsub.s32 2, %v107
    %v109 = vrot.slane %v56, %v108
    %v113 = vmul.f32 %v47, %v101
    %v114 = vmul.f32 %v48, %v105
    %v115 = vmul.f32 %v49, %v109
    %v116 = vmul.f32 %v50, %v101
    %v117 = vmul.f32 %v51, %v105
    %v118 = vmul.f32 %v52, %v109
    %v119 = vadd.f32 %v113, %v114
    %v120 = vadd.f32 %v119, %v115
    %121 = vadd.xlane.f32.xlu0 %v120
    %v122 = vpop.xlane.xlu0 %121
    %v123 = vadd.f32 %v116, %v117
    %v124 = vadd.f32 %v123, %v118
    %125 = vadd.xlane.f32.xlu0 %v124
    %v126 = vpop.xlane.xlu0 %125
    %v129 = vlaneseq
    %v130 = vand.u32 %v129, 127
    %v131 = vlaneseq
    %v132 = vshrl.u32 %v131, 7
    %v133 = vsub.s32 %v130, %v132
    %v134 = vrot.slane %v122, %v133
    %v135 = vlaneseq
    %v136 = vshrl.u32 %v135, 7
    %v137 = vsub.s32 %v130, %v136
    %v138 = vrot.slane %v126, %v137
    %vm139 = vcmask 1041409
    %vm140 = vcmask 1042434
    %v141 = vsel %vm140, %v134, %v134
    %vm142 = vcmask 1043459
    %v143 = vsel %vm142, %v134, %v141
    %vm144 = vcmask 1044484
    %v145 = vsel %vm144, %v134, %v143
    %vm146 = vcmask 1045509
    %v147 = vsel %vm146, %v134, %v145
    %vm148 = vcmask 1046534
    %v149 = vsel %vm148, %v134, %v147
    %vm150 = vcmask 1047559
    %v151 = vsel %vm150, %v134, %v149
    %v152 = vsel %vm140, %v138, %v138
    %v153 = vsel %vm142, %v138, %v152
    %v154 = vsel %vm144, %v138, %v153
    %v155 = vsel %vm146, %v138, %v154
    %v156 = vsel %vm148, %v138, %v155
    %v157 = vsel %vm150, %v138, %v156
    %v162 = vadd.f32 %v88, %v151
    %v163 = vadd.f32 %v96, %v134
    %v164 = vadd.f32 %v88, %v157
    %v165 = vadd.f32 %v96, %v138
    %167 = vset.pattern.permute.xlu0 0
    %168 = vperm.xlu0 %167, %v61
    %v169 = vpop.permute.xlu0 %168
    %v171 = vadd.f32 %v162, %v169
    %v172 = vadd.f32 %v163, %v169
    %v173 = vadd.f32 %v164, %v169
    %v174 = vadd.f32 %v165, %v169
    %vm175 = vcmask 64512
    %v176 = vsel %vm175, %v171, -inf
    %177 = vmax.xlane.f32.xlu0 %v176
    %v178 = vpop.xlane.xlu0 %177
    %vm179 = vcmask 58368
    %v180 = vsel %vm179, %v172, -inf
    %181 = vmax.xlane.f32.xlu0 %v180
    %v182 = vpop.xlane.xlu0 %181
    %v183 = vsel %vm175, %v173, -inf
    %184 = vmax.xlane.f32.xlu0 %v183
    %v185 = vpop.xlane.xlu0 %184
    %v186 = vsel %vm179, %v174, -inf
    %187 = vmax.xlane.f32.xlu0 %v186
    %v188 = vpop.xlane.xlu0 %187
    %v189 = vsub.f32 %v171, %v178
    %v190 = vsub.f32 %v172, %v182
    %v191 = vsub.f32 %v173, %v185
    %v192 = vsub.f32 %v174, %v188
    %v193 = vmul.f32 %v189, 1.442695
    %v194 = vpow.pop %v193
    %v195 = vmul.f32 %v190, 1.442695
    %v196 = vpow.pop %v195
    %v197 = vmul.f32 %v191, 1.442695
    %v198 = vpow.pop %v197
    %v199 = vmul.f32 %v192, 1.442695
    %v200 = vpow.pop %v199
    %v201 = vsel %vm175, %v194, 0.0
    %202 = vadd.xlane.f32.xlu0 %v201
    %v203 = vpop.xlane.xlu0 %202
    %v204 = vsel %vm179, %v196, 0.0
    %205 = vadd.xlane.f32.xlu0 %v204
    %v206 = vpop.xlane.xlu0 %205
    %v207 = vsel %vm175, %v198, 0.0
    %208 = vadd.xlane.f32.xlu0 %v207
    %v209 = vpop.xlane.xlu0 %208
    %v210 = vsel %vm179, %v200, 0.0
    %211 = vadd.xlane.f32.xlu0 %v210
    %v212 = vpop.xlane.xlu0 %211
    %v213 = vrcp.pop %v203
    %v214 = vrcp.pop %v206
    %v215 = vrcp.pop %v209
    %v216 = vrcp.pop %v212
    %v217 = vmul.f32 %v194, %v213
    %v218 = vmul.f32 %v196, %v214
    %v219 = vmul.f32 %v198, %v215
    %v220 = vmul.f32 %v200, %v216
    %v222 = vsel %vm175, %v217, 0
    %v225 = vsel %vm175, %v218, 0
    %227 = vmatprep.subr.mxu0 %v48
    %228 = vmatpush1.msra.mxu0 %v47
    %229 = vmatprep.subr.mxu0 0.0
    %230 = vmatpush1.msra.mxu0 0.0
    %231 = vmatprep.subr.mxu0 0.0
    %232 = vmatpush1.msra.mxu0 0.0
    %233 = vmatprep.subr.mxu0 0.0
    %234 = vmatpush1.msra.mxu0 0.0
    %235 = vmatprep.subr.mxu0 0.0
    %236 = vmatpush1.msra.mxu0 0.0
    %237 = vmatprep.subr.mxu0 0.0
    %238 = vmatpush1.msra.mxu0 0.0
    %239 = vmatprep.subr.mxu0 0.0
    %240 = vmatpush1.msra.mxu0 0.0
    %241 = vmatprep.subr.mxu0 0.0
    %242 = vmatpush1.msra.mxu0 0.0
    %243 = vmatprep.subr.mxu0 0.0
    %244 = vmatpush1.msra.mxu0 0.0
    %245 = vmatprep.subr.mxu0 0.0
    %246 = vmatpush1.msra.mxu0 0.0
    %247 = vmatprep.subr.mxu0 0.0
    %248 = vmatpush1.msra.mxu0 0.0
    %249 = vmatprep.subr.mxu0 0.0
    %250 = vmatpush1.msra.mxu0 0.0
    %251 = vmatprep.subr.mxu0 0.0
    %252 = vmatpush1.msra.mxu0 0.0
    %253 = vmatprep.subr.mxu0 0.0
    %254 = vmatpush1.msra.mxu0 0.0
    %255 = vmatprep.subr.mxu0 0.0
    %256 = vmatpush1.msra.mxu0 0.0
    %257 = vmatprep.subr.mxu0 0.0
    %258 = vmatpush1.msra.mxu0 0.0
    %259 = vmatprep.subr.mxu0 0.0
    %260 = vmatpush1.msra.mxu0 0.0
    %261 = vmatprep.subr.mxu0 0.0
    %262 = vmatpush1.msra.mxu0 0.0
    %263 = vmatprep.subr.mxu0 0.0
    %264 = vmatpush1.msra.mxu0 0.0
    %265 = vmatprep.subr.mxu0 0.0
    %266 = vmatpush1.msra.mxu0 0.0
    %267 = vmatprep.subr.mxu0 0.0
    %268 = vmatpush1.msra.mxu0 0.0
    %269 = vmatprep.subr.mxu0 0.0
    %270 = vmatpush1.msra.mxu0 0.0
    %271 = vmatprep.subr.mxu0 0.0
    %272 = vmatpush1.msra.mxu0 0.0
    %273 = vmatprep.subr.mxu0 0.0
    %274 = vmatpush1.msra.mxu0 0.0
    %275 = vmatprep.subr.mxu0 0.0
    %276 = vmatpush1.msra.mxu0 0.0
    %277 = vmatprep.subr.mxu0 0.0
    %278 = vmatpush1.msra.mxu0 0.0
    %279 = vmatprep.subr.mxu0 0.0
    %280 = vmatpush1.msra.mxu0 0.0
    %281 = vmatprep.subr.mxu0 0.0
    %282 = vmatpush1.msra.mxu0 0.0
    %283 = vmatprep.subr.mxu0 0.0
    %284 = vmatpush1.msra.mxu0 0.0
    %285 = vmatprep.subr.mxu0 0.0
    %286 = vmatpush1.msra.mxu0 0.0
    %287 = vmatprep.subr.mxu0 0.0
    %288 = vmatpush1.msra.mxu0 0.0
    %289 = vmatprep.subr.mxu0 0.0
    %290 = vmatpush1.msra.mxu0 0.0
    %291 = vmatprep.mubr.f32.mxu0 0.0
    %292 = vmatmul.mubr.f32.gmra.mrb[0].mxu0 %v222
    %v293 = vpop.f32.mrb[0].mxu0
    %v294 = vadd.f32 0.0, %v293
    %v295 = vpop.f32.mrb[0].mxu0
    %v296 = vadd.f32 0.0, %v295
    %297 = vmatprep.mubr.f32.mxu0 0.0
    %298 = vmatmul.mubr.f32.gmra.mrb[0].mxu0 %v225
    %v299 = vpop.f32.mrb[0].mxu0
    %v300 = vadd.f32 0.0, %v299
    %v301 = vpop.f32.mrb[0].mxu0
    %v302 = vadd.f32 0.0, %v301
    %303 = vdwg.mxu0
    %304 = vmatprep.subr.mxu0 0.0
    %305 = vmatpush1.msra.mxu0 %v49
    %306 = vmatprep.subr.mxu0 0.0
    %307 = vmatpush1.msra.mxu0 0.0
    %308 = vmatprep.subr.mxu0 0.0
    %309 = vmatpush1.msra.mxu0 0.0
    %310 = vmatprep.subr.mxu0 0.0
    %311 = vmatpush1.msra.mxu0 0.0
    %312 = vmatprep.subr.mxu0 0.0
    %313 = vmatpush1.msra.mxu0 0.0
    %314 = vmatprep.subr.mxu0 0.0
    %315 = vmatpush1.msra.mxu0 0.0
    %316 = vmatprep.subr.mxu0 0.0
    %317 = vmatpush1.msra.mxu0 0.0
    %318 = vmatprep.subr.mxu0 0.0
    %319 = vmatpush1.msra.mxu0 0.0
    %320 = vmatprep.subr.mxu0 0.0
    %321 = vmatpush1.msra.mxu0 0.0
    %322 = vmatprep.subr.mxu0 0.0
    %323 = vmatpush1.msra.mxu0 0.0
    %324 = vmatprep.subr.mxu0 0.0
    %325 = vmatpush1.msra.mxu0 0.0
    %326 = vmatprep.subr.mxu0 0.0
    %327 = vmatpush1.msra.mxu0 0.0
    %328 = vmatprep.subr.mxu0 0.0
    %329 = vmatpush1.msra.mxu0 0.0
    %330 = vmatprep.subr.mxu0 0.0
    %331 = vmatpush1.msra.mxu0 0.0
    %332 = vmatprep.subr.mxu0 0.0
    %333 = vmatpush1.msra.mxu0 0.0
    %334 = vmatprep.subr.mxu0 0.0
    %335 = vmatpush1.msra.mxu0 0.0
    %336 = vmatprep.subr.mxu0 0.0
    %337 = vmatpush1.msra.mxu0 0.0
    %338 = vmatprep.subr.mxu0 0.0
    %339 = vmatpush1.msra.mxu0 0.0
    %340 = vmatprep.subr.mxu0 0.0
    %341 = vmatpush1.msra.mxu0 0.0
    %342 = vmatprep.subr.mxu0 0.0
    %343 = vmatpush1.msra.mxu0 0.0
    %344 = vmatprep.subr.mxu0 0.0
    %345 = vmatpush1.msra.mxu0 0.0
    %346 = vmatprep.subr.mxu0 0.0
    %347 = vmatpush1.msra.mxu0 0.0
    %348 = vmatprep.subr.mxu0 0.0
    %349 = vmatpush1.msra.mxu0 0.0
    %350 = vmatprep.subr.mxu0 0.0
    %351 = vmatpush1.msra.mxu0 0.0
    %352 = vmatprep.subr.mxu0 0.0
    %353 = vmatpush1.msra.mxu0 0.0
    %354 = vmatprep.subr.mxu0 0.0
    %355 = vmatpush1.msra.mxu0 0.0
    %356 = vmatprep.subr.mxu0 0.0
    %357 = vmatpush1.msra.mxu0 0.0
    %358 = vmatprep.subr.mxu0 0.0
    %359 = vmatpush1.msra.mxu0 0.0
    %360 = vmatprep.subr.mxu0 0.0
    %361 = vmatpush1.msra.mxu0 0.0
    %362 = vmatprep.subr.mxu0 0.0
    %363 = vmatpush1.msra.mxu0 0.0
    %364 = vmatprep.subr.mxu0 0.0
    %365 = vmatpush1.msra.mxu0 0.0
    %366 = vmatprep.subr.mxu0 0.0
    %367 = vmatpush1.msra.mxu0 0.0
    %368 = vmatprep.mubr.f32.mxu0 0.0
    %369 = vmatmul.mubr.f32.gmra.mrb[0].mxu0 %v222
    %v370 = vpop.f32.mrb[0].mxu0
    %v371 = vadd.f32 0.0, %v370
    %v372 = vpop.f32.mrb[0].mxu0
    %373 = vmatprep.mubr.f32.mxu0 0.0
    %374 = vmatmul.mubr.f32.gmra.mrb[0].mxu0 %v225
    %v375 = vpop.f32.mrb[0].mxu0
    %v376 = vadd.f32 0.0, %v375
    %v377 = vpop.f32.mrb[0].mxu0
    %378 = vdwg.mxu0
    %v380 = vsel %vm175, %v219, 0
    %v383 = vsel %vm175, %v220, 0
    %385 = vmatprep.subr.mxu0 %v51
    %386 = vmatpush1.msra.mxu0 %v50
    %387 = vmatprep.subr.mxu0 0.0
    %388 = vmatpush1.msra.mxu0 0.0
    %389 = vmatprep.subr.mxu0 0.0
    %390 = vmatpush1.msra.mxu0 0.0
    %391 = vmatprep.subr.mxu0 0.0
    %392 = vmatpush1.msra.mxu0 0.0
    %393 = vmatprep.subr.mxu0 0.0
    %394 = vmatpush1.msra.mxu0 0.0
    %395 = vmatprep.subr.mxu0 0.0
    %396 = vmatpush1.msra.mxu0 0.0
    %397 = vmatprep.subr.mxu0 0.0
    %398 = vmatpush1.msra.mxu0 0.0
    %399 = vmatprep.subr.mxu0 0.0
    %400 = vmatpush1.msra.mxu0 0.0
    %401 = vmatprep.subr.mxu0 0.0
    %402 = vmatpush1.msra.mxu0 0.0
    %403 = vmatprep.subr.mxu0 0.0
    %404 = vmatpush1.msra.mxu0 0.0
    %405 = vmatprep.subr.mxu0 0.0
    %406 = vmatpush1.msra.mxu0 0.0
    %407 = vmatprep.subr.mxu0 0.0
    %408 = vmatpush1.msra.mxu0 0.0
    %409 = vmatprep.subr.mxu0 0.0
    %410 = vmatpush1.msra.mxu0 0.0
    %411 = vmatprep.subr.mxu0 0.0
    %412 = vmatpush1.msra.mxu0 0.0
    %413 = vmatprep.subr.mxu0 0.0
    %414 = vmatpush1.msra.mxu0 0.0
    %415 = vmatprep.subr.mxu0 0.0
    %416 = vmatpush1.msra.mxu0 0.0
    %417 = vmatprep.subr.mxu0 0.0
    %418 = vmatpush1.msra.mxu0 0.0
    %419 = vmatprep.subr.mxu0 0.0
    %420 = vmatpush1.msra.mxu0 0.0
    %421 = vmatprep.subr.mxu0 0.0
    %422 = vmatpush1.msra.mxu0 0.0
    %423 = vmatprep.subr.mxu0 0.0
    %424 = vmatpush1.msra.mxu0 0.0
    %425 = vmatprep.subr.mxu0 0.0
    %426 = vmatpush1.msra.mxu0 0.0
    %427 = vmatprep.subr.mxu0 0.0
    %428 = vmatpush1.msra.mxu0 0.0
    %429 = vmatprep.subr.mxu0 0.0
    %430 = vmatpush1.msra.mxu0 0.0
    %431 = vmatprep.subr.mxu0 0.0
    %432 = vmatpush1.msra.mxu0 0.0
    %433 = vmatprep.subr.mxu0 0.0
    %434 = vmatpush1.msra.mxu0 0.0
    %435 = vmatprep.subr.mxu0 0.0
    %436 = vmatpush1.msra.mxu0 0.0
    %437 = vmatprep.subr.mxu0 0.0
    %438 = vmatpush1.msra.mxu0 0.0
    %439 = vmatprep.subr.mxu0 0.0
    %440 = vmatpush1.msra.mxu0 0.0
    %441 = vmatprep.subr.mxu0 0.0
    %442 = vmatpush1.msra.mxu0 0.0
    %443 = vmatprep.subr.mxu0 0.0
    %444 = vmatpush1.msra.mxu0 0.0
    %445 = vmatprep.subr.mxu0 0.0
    %446 = vmatpush1.msra.mxu0 0.0
    %447 = vmatprep.subr.mxu0 0.0
    %448 = vmatpush1.msra.mxu0 0.0
    %449 = vmatprep.mubr.f32.mxu0 0.0
    %450 = vmatmul.mubr.f32.gmra.mrb[0].mxu0 %v380
    %v451 = vpop.f32.mrb[0].mxu0
    %v452 = vadd.f32 0.0, %v451
    %v453 = vpop.f32.mrb[0].mxu0
    %v454 = vadd.f32 0.0, %v453
    %455 = vmatprep.mubr.f32.mxu0 0.0
    %456 = vmatmul.mubr.f32.gmra.mrb[0].mxu0 %v383
    %v457 = vpop.f32.mrb[0].mxu0
    %v458 = vadd.f32 0.0, %v457
    %v459 = vpop.f32.mrb[0].mxu0
    %v460 = vadd.f32 0.0, %v459
    %461 = vdwg.mxu0
    %462 = vmatprep.subr.mxu0 0.0
    %463 = vmatpush1.msra.mxu0 %v52
    %464 = vmatprep.subr.mxu0 0.0
    %465 = vmatpush1.msra.mxu0 0.0
    %466 = vmatprep.subr.mxu0 0.0
    %467 = vmatpush1.msra.mxu0 0.0
    %468 = vmatprep.subr.mxu0 0.0
    %469 = vmatpush1.msra.mxu0 0.0
    %470 = vmatprep.subr.mxu0 0.0
    %471 = vmatpush1.msra.mxu0 0.0
    %472 = vmatprep.subr.mxu0 0.0
    %473 = vmatpush1.msra.mxu0 0.0
    %474 = vmatprep.subr.mxu0 0.0
    %475 = vmatpush1.msra.mxu0 0.0
    %476 = vmatprep.subr.mxu0 0.0
    %477 = vmatpush1.msra.mxu0 0.0
    %478 = vmatprep.subr.mxu0 0.0
    %479 = vmatpush1.msra.mxu0 0.0
    %480 = vmatprep.subr.mxu0 0.0
    %481 = vmatpush1.msra.mxu0 0.0
    %482 = vmatprep.subr.mxu0 0.0
    %483 = vmatpush1.msra.mxu0 0.0
    %484 = vmatprep.subr.mxu0 0.0
    %485 = vmatpush1.msra.mxu0 0.0
    %486 = vmatprep.subr.mxu0 0.0
    %487 = vmatpush1.msra.mxu0 0.0
    %488 = vmatprep.subr.mxu0 0.0
    %489 = vmatpush1.msra.mxu0 0.0
    %490 = vmatprep.subr.mxu0 0.0
    %491 = vmatpush1.msra.mxu0 0.0
    %492 = vmatprep.subr.mxu0 0.0
    %493 = vmatpush1.msra.mxu0 0.0
    %494 = vmatprep.subr.mxu0 0.0
    %495 = vmatpush1.msra.mxu0 0.0
    %496 = vmatprep.subr.mxu0 0.0
    %497 = vmatpush1.msra.mxu0 0.0
    %498 = vmatprep.subr.mxu0 0.0
    %499 = vmatpush1.msra.mxu0 0.0
    %500 = vmatprep.subr.mxu0 0.0
    %501 = vmatpush1.msra.mxu0 0.0
    %502 = vmatprep.subr.mxu0 0.0
    %503 = vmatpush1.msra.mxu0 0.0
    %504 = vmatprep.subr.mxu0 0.0
    %505 = vmatpush1.msra.mxu0 0.0
    %506 = vmatprep.subr.mxu0 0.0
    %507 = vmatpush1.msra.mxu0 0.0
    %508 = vmatprep.subr.mxu0 0.0
    %509 = vmatpush1.msra.mxu0 0.0
    %510 = vmatprep.subr.mxu0 0.0
    %511 = vmatpush1.msra.mxu0 0.0
    %512 = vmatprep.subr.mxu0 0.0
    %513 = vmatpush1.msra.mxu0 0.0
    %514 = vmatprep.subr.mxu0 0.0
    %515 = vmatpush1.msra.mxu0 0.0
    %516 = vmatprep.subr.mxu0 0.0
    %517 = vmatpush1.msra.mxu0 0.0
    %518 = vmatprep.subr.mxu0 0.0
    %519 = vmatpush1.msra.mxu0 0.0
    %520 = vmatprep.subr.mxu0 0.0
    %521 = vmatpush1.msra.mxu0 0.0
    %522 = vmatprep.subr.mxu0 0.0
    %523 = vmatpush1.msra.mxu0 0.0
    %524 = vmatprep.subr.mxu0 0.0
    %525 = vmatpush1.msra.mxu0 0.0
    %526 = vmatprep.mubr.f32.mxu0 0.0
    %527 = vmatmul.mubr.f32.gmra.mrb[0].mxu0 %v380
    %v528 = vpop.f32.mrb[0].mxu0
    %v529 = vadd.f32 0.0, %v528
    %v530 = vpop.f32.mrb[0].mxu0
    %531 = vmatprep.mubr.f32.mxu0 0.0
    %532 = vmatmul.mubr.f32.gmra.mrb[0].mxu0 %v383
    %v533 = vpop.f32.mrb[0].mxu0
    %v534 = vadd.f32 0.0, %v533
    %v535 = vpop.f32.mrb[0].mxu0
    %536 = vdwg.mxu0
    %v538 = vlaneseq
    %v539 = vshrl.u32 %v538, 7
    %v540 = vsub.s32 0, %v539
    %v541 = vrot.slane %v58, %v540
    %v542 = vlaneseq
    %v543 = vshrl.u32 %v542, 7
    %v544 = vsub.s32 1, %v543
    %v545 = vrot.slane %v58, %v544
    %v546 = vlaneseq
    %v547 = vshrl.u32 %v546, 7
    %v548 = vsub.s32 2, %v547
    %v549 = vrot.slane %v58, %v548
    %v553 = vmul.f32 %v41, %v541
    %v554 = vmul.f32 %v42, %v545
    %v555 = vmul.f32 %v43, %v549
    %v556 = vmul.f32 %v44, %v541
    %v557 = vmul.f32 %v45, %v545
    %v558 = vmul.f32 %v46, %v549
    %v559 = vadd.f32 %v553, %v554
    %v560 = vadd.f32 %v559, %v555
    %561 = vadd.xlane.f32.xlu0 %v560
    %v562 = vpop.xlane.xlu0 %561
    %v563 = vsel %vm89, %v556, 0.0
    %v564 = vsel %vm89, %v557, 0.0
    %v565 = vadd.f32 %v563, %v564
    %v566 = vsel %vm89, %v558, 0.0
    %v567 = vadd.f32 %v565, %v566
    %568 = vadd.xlane.f32.xlu0 %v567
    %v569 = vpop.xlane.xlu0 %568
    %v571 = vlaneseq
    %v572 = vshrl.u32 %v571, 7
    %v573 = vsub.s32 0, %v572
    %v574 = vrot.slane %v60, %v573
    %v575 = vlaneseq
    %v576 = vshrl.u32 %v575, 7
    %v577 = vsub.s32 1, %v576
    %v578 = vrot.slane %v60, %v577
    %v579 = vlaneseq
    %v580 = vshrl.u32 %v579, 7
    %v581 = vsub.s32 2, %v580
    %v582 = vrot.slane %v60, %v581
    %v583 = vcombine.low %v574, %v578
    %v585 = vunpack.c.l.s4 1983009808
    %v586 = vunpack.c.0.s8 %v585
    %v587 = vlaneseq
    %v588 = vshrl.u32 %v587, 7
    %v589 = vsub.s32 %v586, %v588
    %v590 = vrot.slane %v583, %v589
    %v592 = vunpack.c.l.s4 1983009808
    %v593 = vunpack.c.0.s8 %v592
    %v594 = vlaneseq
    %v595 = vshrl.u32 %v594, 7
    %v596 = vsub.s32 %v593, %v595
    %v597 = vrot.slane %v582, %v596
    %v598 = vcombine.low %v590, %v597
    %v600 = vmul.f32 %v53, %v598
    %v602 = vcombine.high %v600, %v600
    %v604 = vunpack.c.l.s4 1983009808
    %v605 = vunpack.c.0.s8 %v604
    %v606 = vlaneseq
    %v607 = vshrl.u32 %v606, 7
    %v608 = vsub.s32 %v605, %v607
    %v609 = vrot.slane %v600, %v608
    %v611 = vunpack.c.l.s4 1983009808
    %v612 = vunpack.c.0.s8 %v611
    %v613 = vlaneseq
    %v614 = vshrl.u32 %v613, 7
    %v615 = vsub.s32 %v612, %v614
    %v616 = vrot.slane %v602, %v615
    %v617 = vcombine.high %v609, %v609
    %v621 = vsel %vm89, %v609, 0.0
    %v622 = vsel %vm89, %v617, 0.0
    %v623 = vadd.f32 %v621, %v622
    %v624 = vsel %vm89, %v616, 0.0
    %v625 = vadd.f32 %v623, %v624
    %626 = vadd.xlane.f32.xlu0 %v625
    %v627 = vpop.xlane.xlu0 %626
    %v629 = vlaneseq
    %v630 = vshrl.u32 %v629, 7
    %v631 = vsub.s32 0, %v630
    %v632 = vrot.slane %v627, %v631
    %v633 = vlaneseq
    %v634 = vshrl.u32 %v633, 7
    %v635 = vsub.s32 1, %v634
    %v636 = vrot.slane %v627, %v635
    %v639 = vadd.f32 %v562, %v632
    %v640 = vadd.f32 %v569, %v632
    %v641 = vadd.f32 %v562, %v636
    %v642 = vadd.f32 %v569, %v636
    %644 = vset.pattern.permute.xlu0 0
    %645 = vperm.xlu0 %644, %v62
    %v646 = vpop.permute.xlu0 %645
    %v648 = vadd.f32 %v639, %v646
    %v649 = vadd.f32 %v640, %v646
    %v650 = vadd.f32 %v641, %v646
    %v651 = vadd.f32 %v642, %v646
    %656 = vset.pattern.permute.xlu0 0
    %657 = vperm.xlu0 %656, %v648
    %v658 = vpop.permute.xlu0 %657
    %659 = vset.pattern.permute.xlu0 0
    %660 = vperm.xlu0 %659, %v649
    %v661 = vpop.permute.xlu0 %660
    %662 = vset.pattern.permute.xlu0 0
    %663 = vperm.xlu0 %662, %v650
    %v664 = vpop.permute.xlu0 %663
    %665 = vset.pattern.permute.xlu0 0
    %666 = vperm.xlu0 %665, %v651
    %v667 = vpop.permute.xlu0 %666
    %v668 = vlaneseq
    %v669 = vshrl.u32 %v668, 7
    %v670 = vsub.s32 %v130, %v669
    %v671 = vrot.slane %v658, %v670
    %v672 = vadd.s32 %v130, 4294967288
    %v673 = vlaneseq
    %v674 = vshrl.u32 %v673, 7
    %v675 = vsub.s32 %v672, %v674
    %v676 = vrot.slane %v661, %v675
    %vm677 = vcmask 130112
    %v678 = vsel %vm677, %v676, %v671
    %v679 = vlaneseq
    %v680 = vshrl.u32 %v679, 7
    %v681 = vsub.s32 %v130, %v680
    %v682 = vrot.slane %v664, %v681
    %v683 = vlaneseq
    %v684 = vshrl.u32 %v683, 7
    %v685 = vsub.s32 %v672, %v684
    %v686 = vrot.slane %v667, %v685
    %v687 = vsel %vm677, %v686, %v682
    %v688 = vsel %vm139, %v687, %v678
    %vm690 = vcmask 74752
    %v691 = vsel %vm690, %v688, -inf
    %692 = vmax.xlane.f32.xlu0 %v691
    %v693 = vpop.xlane.xlu0 %692
    %v695 = vlaneseq
    %v696 = vshrl.u32 %v695, 7
    %v697 = vsub.s32 0, %v696
    %v698 = vrot.slane %v693, %v697
    %v699 = vlaneseq
    %v700 = vshrl.u32 %v699, 7
    %v701 = vsub.s32 1, %v700
    %v702 = vrot.slane %v693, %v701
    %v705 = vsub.f32 %v648, %v698
    %v706 = vsub.f32 %v649, %v698
    %v707 = vsub.f32 %v650, %v702
    %v708 = vsub.f32 %v651, %v702
    %v709 = vmul.f32 %v705, 1.442695
    %v710 = vpow.pop %v709
    %v711 = vmul.f32 %v706, 1.442695
    %v712 = vpow.pop %v711
    %v713 = vmul.f32 %v707, 1.442695
    %v714 = vpow.pop %v713
    %v715 = vmul.f32 %v708, 1.442695
    %v716 = vpow.pop %v715
    %721 = vset.pattern.permute.xlu0 0
    %722 = vperm.xlu0 %721, %v710
    %v723 = vpop.permute.xlu0 %722
    %724 = vset.pattern.permute.xlu0 0
    %725 = vperm.xlu0 %724, %v712
    %v726 = vpop.permute.xlu0 %725
    %727 = vset.pattern.permute.xlu0 0
    %728 = vperm.xlu0 %727, %v714
    %v729 = vpop.permute.xlu0 %728
    %730 = vset.pattern.permute.xlu0 0
    %731 = vperm.xlu0 %730, %v716
    %v732 = vpop.permute.xlu0 %731
    %v733 = vlaneseq
    %v734 = vshrl.u32 %v733, 7
    %v735 = vsub.s32 %v130, %v734
    %v736 = vrot.slane %v723, %v735
    %v737 = vlaneseq
    %v738 = vshrl.u32 %v737, 7
    %v739 = vsub.s32 %v672, %v738
    %v740 = vrot.slane %v726, %v739
    %v741 = vsel %vm677, %v740, %v736
    %v742 = vlaneseq
    %v743 = vshrl.u32 %v742, 7
    %v744 = vsub.s32 %v130, %v743
    %v745 = vrot.slane %v729, %v744
    %v746 = vlaneseq
    %v747 = vshrl.u32 %v746, 7
    %v748 = vsub.s32 %v672, %v747
    %v749 = vrot.slane %v732, %v748
    %v750 = vsel %vm677, %v749, %v745
    %v751 = vsel %vm139, %v750, %v741
    %v753 = vsel %vm690, %v751, 0.0
    %754 = vadd.xlane.f32.xlu0 %v753
    %v755 = vpop.xlane.xlu0 %754
    %v756 = vrcp.pop %v755
    %v758 = vlaneseq
    %v759 = vshrl.u32 %v758, 7
    %v760 = vsub.s32 0, %v759
    %v761 = vrot.slane %v756, %v760
    %v762 = vlaneseq
    %v763 = vshrl.u32 %v762, 7
    %v764 = vsub.s32 1, %v763
    %v765 = vrot.slane %v756, %v764
    %v768 = vmul.f32 %v710, %v761
    %v769 = vmul.f32 %v712, %v761
    %v770 = vmul.f32 %v714, %v765
    %v771 = vmul.f32 %v716, %v765
    %773 = vset.pattern.permute.xlu0 0
    %774 = vperm.xlu0 %773, %v768
    %v775 = vpop.permute.xlu0 %774
    %778 = vset.pattern.permute.xlu0 0
    %779 = vperm.xlu0 %778, %v769
    %v780 = vpop.permute.xlu0 %779
    %783 = vset.pattern.permute.xlu0 0
    %784 = vperm.xlu0 %783, %v770
    %v785 = vpop.permute.xlu0 %784
    %788 = vset.pattern.permute.xlu0 0
    %789 = vperm.xlu0 %788, %v771
    %v790 = vpop.permute.xlu0 %789
    %v792 = vmul.f32 %v775, %v294
    %v793 = vmul.f32 %v775, %v296
    %v794 = vmul.f32 %v775, %v371
    %v795 = vmul.f32 %v780, %v300
    %v796 = vmul.f32 %v780, %v302
    %v797 = vmul.f32 %v780, %v376
    %v798 = vmul.f32 %v785, %v452
    %v799 = vmul.f32 %v785, %v454
    %v800 = vmul.f32 %v785, %v529
    %v801 = vmul.f32 %v790, %v458
    %v802 = vmul.f32 %v790, %v460
    %v803 = vmul.f32 %v790, %v534
    %v804 = vsel %vm89, %v795, 0.0
    %v805 = vadd.f32 %v792, %v804
    %v806 = vrot.slane %v805, 4
    %v807 = vadd.f32 %v805, %v806
    %v808 = vrot.slane %v807, 2
    %v809 = vadd.f32 %v807, %v808
    %v810 = vrot.slane %v809, 1
    %v811 = vadd.f32 %v809, %v810
    %v812 = vsel %vm89, %v796, 0.0
    %v813 = vadd.f32 %v793, %v812
    %v814 = vrot.slane %v813, 4
    %v815 = vadd.f32 %v813, %v814
    %v816 = vrot.slane %v815, 2
    %v817 = vadd.f32 %v815, %v816
    %v818 = vrot.slane %v817, 1
    %v819 = vadd.f32 %v817, %v818
    %v820 = vsel %vm89, %v797, 0.0
    %v821 = vadd.f32 %v794, %v820
    %v822 = vrot.slane %v821, 4
    %v823 = vadd.f32 %v821, %v822
    %v824 = vrot.slane %v823, 2
    %v825 = vadd.f32 %v823, %v824
    %v826 = vrot.slane %v825, 1
    %v827 = vadd.f32 %v825, %v826
    %v828 = vsel %vm89, %v801, 0.0
    %v829 = vadd.f32 %v798, %v828
    %v830 = vrot.slane %v829, 4
    %v831 = vadd.f32 %v829, %v830
    %v832 = vrot.slane %v831, 2
    %v833 = vadd.f32 %v831, %v832
    %v834 = vrot.slane %v833, 1
    %v835 = vadd.f32 %v833, %v834
    %v836 = vsel %vm89, %v802, 0.0
    %v837 = vadd.f32 %v799, %v836
    %v838 = vrot.slane %v837, 4
    %v839 = vadd.f32 %v837, %v838
    %v840 = vrot.slane %v839, 2
    %v841 = vadd.f32 %v839, %v840
    %v842 = vrot.slane %v841, 1
    %v843 = vadd.f32 %v841, %v842
    %v844 = vsel %vm89, %v803, 0.0
    %v845 = vadd.f32 %v800, %v844
    %v846 = vrot.slane %v845, 4
    %v847 = vadd.f32 %v845, %v846
    %v848 = vrot.slane %v847, 2
    %v849 = vadd.f32 %v847, %v848
    %v850 = vrot.slane %v849, 1
    %v851 = vadd.f32 %v849, %v850
    %v858 = vcombine.low %v811, %v819
    %v860 = vunpack.c.l.s4 1983009808
    %v861 = vunpack.c.0.s8 %v860
    %v862 = vlaneseq
    %v863 = vshrl.u32 %v862, 7
    %v864 = vsub.s32 %v861, %v863
    %v865 = vrot.slane %v858, %v864
    %v867 = vunpack.c.l.s4 1983009808
    %v868 = vunpack.c.0.s8 %v867
    %v869 = vlaneseq
    %v870 = vshrl.u32 %v869, 7
    %v871 = vsub.s32 %v868, %v870
    %v872 = vrot.slane %v827, %v871
    %v873 = vcombine.low %v865, %v872
    %v874 = vcombine.low %v835, %v843
    %v876 = vunpack.c.l.s4 1983009808
    %v877 = vunpack.c.0.s8 %v876
    %v878 = vlaneseq
    %v879 = vshrl.u32 %v878, 7
    %v880 = vsub.s32 %v877, %v879
    %v881 = vrot.slane %v874, %v880
    %v883 = vunpack.c.l.s4 1983009808
    %v884 = vunpack.c.0.s8 %v883
    %v885 = vlaneseq
    %v886 = vshrl.u32 %v885, 7
    %v887 = vsub.s32 %v884, %v886
    %v888 = vrot.slane %v851, %v887
    %v889 = vcombine.low %v881, %v888
    %v890 = vsel %vm144, %v873, %v873
    %v891 = vsel %vm148, %v873, %v890
    %v892 = vrot.slane %v889, 7
    %v893 = vsel %vm139, %v892, %v891
    %v894 = vsel %vm142, %v892, %v893
    %v895 = vsel %vm146, %v892, %v894
    %v896 = vsel %vm150, %v892, %v895
    %898 = vst [vmem:[#allocation3] sm:$0x3f] %v896
    %v899 = vrot.slane %v47, 4
    %v900 = vadd.f32 %v47, %v899
    %v901 = vrot.slane %v900, 2
    %v902 = vadd.f32 %v900, %v901
    %v903 = vrot.slane %v902, 1
    %v904 = vadd.f32 %v902, %v903
    %v905 = vrot.slane %v48, 4
    %v906 = vadd.f32 %v48, %v905
    %v907 = vrot.slane %v906, 2
    %v908 = vadd.f32 %v906, %v907
    %v909 = vrot.slane %v908, 1
    %v910 = vadd.f32 %v908, %v909
    %v911 = vrot.slane %v49, 4
    %v912 = vadd.f32 %v49, %v911
    %v913 = vrot.slane %v912, 2
    %v914 = vadd.f32 %v912, %v913
    %v915 = vrot.slane %v914, 1
    %v916 = vadd.f32 %v914, %v915
    %v917 = vrot.slane %v50, 4
    %v918 = vadd.f32 %v50, %v917
    %v919 = vrot.slane %v918, 2
    %v920 = vadd.f32 %v918, %v919
    %v921 = vrot.slane %v920, 1
    %v922 = vadd.f32 %v920, %v921
    %v923 = vrot.slane %v51, 4
    %v924 = vadd.f32 %v51, %v923
    %v925 = vrot.slane %v924, 2
    %v926 = vadd.f32 %v924, %v925
    %v927 = vrot.slane %v926, 1
    %v928 = vadd.f32 %v926, %v927
    %v929 = vrot.slane %v52, 4
    %v930 = vadd.f32 %v52, %v929
    %v931 = vrot.slane %v930, 2
    %v932 = vadd.f32 %v930, %v931
    %v933 = vrot.slane %v932, 1
    %v934 = vadd.f32 %v932, %v933
    %v935 = vrcp.pop 8.0
    %v936 = vmul.f32 %v904, %v935
    %v937 = vmul.f32 %v910, %v935
    %v938 = vmul.f32 %v916, %v935
    %v939 = vmul.f32 %v922, %v935
    %v940 = vmul.f32 %v928, %v935
    %v941 = vmul.f32 %v934, %v935
    %v948 = vcombine.low %v936, %v937
    %v950 = vunpack.c.l.s4 1983009808
    %v951 = vunpack.c.0.s8 %v950
    %v952 = vlaneseq
    %v953 = vshrl.u32 %v952, 7
    %v954 = vsub.s32 %v951, %v953
    %v955 = vrot.slane %v948, %v954
    %v957 = vunpack.c.l.s4 1983009808
    %v958 = vunpack.c.0.s8 %v957
    %v959 = vlaneseq
    %v960 = vshrl.u32 %v959, 7
    %v961 = vsub.s32 %v958, %v960
    %v962 = vrot.slane %v938, %v961
    %v963 = vcombine.low %v955, %v962
    %v964 = vcombine.low %v939, %v940
    %v966 = vunpack.c.l.s4 1983009808
    %v967 = vunpack.c.0.s8 %v966
    %v968 = vlaneseq
    %v969 = vshrl.u32 %v968, 7
    %v970 = vsub.s32 %v967, %v969
    %v971 = vrot.slane %v964, %v970
    %v973 = vunpack.c.l.s4 1983009808
    %v974 = vunpack.c.0.s8 %v973
    %v975 = vlaneseq
    %v976 = vshrl.u32 %v975, 7
    %v977 = vsub.s32 %v974, %v976
    %v978 = vrot.slane %v941, %v977
    %v979 = vcombine.low %v971, %v978
    %v980 = vsel %vm144, %v963, %v963
    %v981 = vsel %vm148, %v963, %v980
    %v982 = vrot.slane %v979, 7
    %v983 = vsel %vm139, %v982, %v981
    %v984 = vsel %vm142, %v982, %v983
    %v985 = vsel %vm146, %v982, %v984
    %v986 = vsel %vm150, %v982, %v985
    %v988 = vadd.f32 %v53, %v986
    %v990 = vcombine.high %v988, %v988
    %v992 = vunpack.c.l.s4 1983009808
    %v993 = vunpack.c.0.s8 %v992
    %v994 = vlaneseq
    %v995 = vshrl.u32 %v994, 7
    %v996 = vsub.s32 %v993, %v995
    %v997 = vrot.slane %v988, %v996
    %v999 = vunpack.c.l.s4 1983009808
    %v1000 = vunpack.c.0.s8 %v999
    %v1001 = vlaneseq
    %v1002 = vshrl.u32 %v1001, 7
    %v1003 = vsub.s32 %v1000, %v1002
    %v1004 = vrot.slane %v990, %v1003
    %v1005 = vcombine.high %v997, %v997
    %v1009 = vpack.c.bf16 %v997, %v997
    %v1010 = vpack.c.bf16 %v1005, %v1005
    %v1011 = vpack.c.bf16 %v1004, %v1004
    %v1012 = vld [vmem:[%s4] sm:$0xff]
    %v1013 = vld [vmem:[%s4 + $0x8] sm:$0xff]
    %v1014 = vld [vmem:[%s4 + $0x10] sm:$0xff]
    %v1015 = vld [vmem:[%s4 + $0x18] sm:$0xff]
    %v1016 = vld [vmem:[%s4 + $0x20] sm:$0xff]
    %v1017 = vld [vmem:[%s4 + $0x28] sm:$0xff]
    %v1018 = vld [vmem:[%s4 + $0x30] sm:$0xff]
    %v1019 = vld [vmem:[%s4 + $0x38] sm:$0xff]
    %v1020 = vld [vmem:[%s4 + $0x40] sm:$0xff]
    %v1021 = vld [vmem:[%s4 + $0x48] sm:$0xff]
    %v1022 = vld [vmem:[%s4 + $0x50] sm:$0xff]
    %v1023 = vld [vmem:[%s4 + $0x58] sm:$0xff]
    %v1024 = vld [vmem:[%s4 + $0x60] sm:$0xff]
    %v1025 = vld [vmem:[%s4 + $0x68] sm:$0xff]
    %v1026 = vld [vmem:[%s4 + $0x70] sm:$0xff]
    %v1027 = vld [vmem:[%s4 + $0x78] sm:$0xff]
    %v1028 = vld [vmem:[%s4 + $0x80] sm:$0xff]
    %v1029 = vld [vmem:[%s4 + $0x88] sm:$0xff]
    %v1030 = vld [vmem:[%s4 + $0x90] sm:$0xff]
    %v1031 = vld [vmem:[%s4 + $0x98] sm:$0xff]
    %v1032 = vld [vmem:[%s4 + $0xa0] sm:$0xff]
    %v1033 = vld [vmem:[%s4 + $0xa8] sm:$0xff]
    %v1034 = vld [vmem:[%s4 + $0xb0] sm:$0xff]
    %v1035 = vld [vmem:[%s4 + $0xb8] sm:$0xff]
    %v1036 = vld [vmem:[%s4 + $0xc0] sm:$0xff]
    %v1037 = vld [vmem:[%s4 + $0xc8] sm:$0xff]
    %v1038 = vld [vmem:[%s4 + $0xd0] sm:$0xff]
    %v1039 = vld [vmem:[%s4 + $0xd8] sm:$0xff]
    %v1040 = vld [vmem:[%s4 + $0xe0] sm:$0xff]
    %v1041 = vld [vmem:[%s4 + $0xe8] sm:$0xff]
    %v1042 = vld [vmem:[%s4 + $0xf0] sm:$0xff]
    %v1043 = vld [vmem:[%s4 + $0xf8] sm:$0xff]
    %v1044 = vld [vmem:[%s4 + $0x100] sm:$0xff]
    %v1045 = vld [vmem:[%s4 + $0x108] sm:$0xff]
    %v1046 = vld [vmem:[%s4 + $0x110] sm:$0xff]
    %v1047 = vld [vmem:[%s4 + $0x118] sm:$0xff]
    %v1048 = vld [vmem:[%s4 + $0x120] sm:$0xff]
    %v1049 = vld [vmem:[%s4 + $0x128] sm:$0xff]
    %v1050 = vld [vmem:[%s4 + $0x130] sm:$0xff]
    %v1051 = vld [vmem:[%s4 + $0x138] sm:$0xff]
    %v1052 = vld [vmem:[%s4 + $0x140] sm:$0xff]
    %v1053 = vld [vmem:[%s4 + $0x148] sm:$0xff]
    %v1054 = vld [vmem:[%s4 + $0x150] sm:$0xff]
    %v1055 = vld [vmem:[%s4 + $0x158] sm:$0xff]
    %v1056 = vld [vmem:[%s4 + $0x160] sm:$0xff]
    %v1057 = vld [vmem:[%s4 + $0x168] sm:$0xff]
    %v1058 = vld [vmem:[%s4 + $0x170] sm:$0xff]
    %v1059 = vld [vmem:[%s4 + $0x178] sm:$0xff]
    %v1060 = vld [vmem:[%s5] sm:$0x3]
    %v1062 = vlaneseq
    %v1063 = vshrl.u32 %v1062, 7
    %v1064 = vsub.s32 0, %v1063
    %v1065 = vrot.slane %v1060, %v1064
    %v1066 = vlaneseq
    %v1067 = vshrl.u32 %v1066, 7
    %v1068 = vsub.s32 1, %v1067
    %v1069 = vrot.slane %v1060, %v1068
    %v1120 = vunpack.c.l.b16 %v1012
    %v1121 = vunpack.c.h.b16 %v1012
    %v1122 = vunpack.c.l.b16 %v1013
    %v1123 = vunpack.c.h.b16 %v1013
    %v1124 = vunpack.c.l.b16 %v1014
    %v1125 = vunpack.c.h.b16 %v1014
    %v1126 = vunpack.c.l.b16 %v1015
    %v1127 = vunpack.c.h.b16 %v1015
    %v1128 = vunpack.c.l.b16 %v1016
    %v1129 = vunpack.c.h.b16 %v1016
    %v1130 = vunpack.c.l.b16 %v1017
    %v1131 = vunpack.c.h.b16 %v1017
    %v1132 = vunpack.c.l.b16 %v1018
    %v1133 = vunpack.c.h.b16 %v1018
    %v1134 = vunpack.c.l.b16 %v1019
    %v1135 = vunpack.c.h.b16 %v1019
    %v1136 = vunpack.c.l.b16 %v1020
    %v1137 = vunpack.c.h.b16 %v1020
    %v1138 = vunpack.c.l.b16 %v1021
    %v1139 = vunpack.c.h.b16 %v1021
    %v1140 = vunpack.c.l.b16 %v1022
    %v1141 = vunpack.c.h.b16 %v1022
    %v1142 = vunpack.c.l.b16 %v1023
    %v1143 = vunpack.c.h.b16 %v1023
    %v1144 = vunpack.c.l.b16 %v1024
    %v1145 = vunpack.c.h.b16 %v1024
    %v1146 = vunpack.c.l.b16 %v1025
    %v1147 = vunpack.c.h.b16 %v1025
    %v1148 = vunpack.c.l.b16 %v1026
    %v1149 = vunpack.c.h.b16 %v1026
    %v1150 = vunpack.c.l.b16 %v1027
    %v1151 = vunpack.c.h.b16 %v1027
    %v1152 = vunpack.c.l.b16 %v1028
    %v1153 = vunpack.c.h.b16 %v1028
    %v1154 = vunpack.c.l.b16 %v1029
    %v1155 = vunpack.c.h.b16 %v1029
    %v1156 = vunpack.c.l.b16 %v1030
    %v1157 = vunpack.c.h.b16 %v1030
    %v1158 = vunpack.c.l.b16 %v1031
    %v1159 = vunpack.c.h.b16 %v1031
    %v1160 = vunpack.c.l.b16 %v1032
    %v1161 = vunpack.c.h.b16 %v1032
    %v1162 = vunpack.c.l.b16 %v1033
    %v1163 = vunpack.c.h.b16 %v1033
    %v1164 = vunpack.c.l.b16 %v1034
    %v1165 = vunpack.c.h.b16 %v1034
    %v1166 = vunpack.c.l.b16 %v1035
    %v1167 = vunpack.c.h.b16 %v1035
    %v1168 = vunpack.c.l.b16 %v1036
    %v1169 = vunpack.c.h.b16 %v1036
    %v1170 = vunpack.c.l.b16 %v1037
    %v1171 = vunpack.c.h.b16 %v1037
    %v1172 = vunpack.c.l.b16 %v1038
    %v1173 = vunpack.c.h.b16 %v1038
    %v1174 = vunpack.c.l.b16 %v1039
    %v1175 = vunpack.c.h.b16 %v1039
    %v1176 = vunpack.c.l.b16 %v1040
    %v1177 = vunpack.c.h.b16 %v1040
    %v1178 = vunpack.c.l.b16 %v1041
    %v1179 = vunpack.c.h.b16 %v1041
    %v1180 = vunpack.c.l.b16 %v1042
    %v1181 = vunpack.c.h.b16 %v1042
    %v1182 = vunpack.c.l.b16 %v1043
    %v1183 = vunpack.c.h.b16 %v1043
    %v1184 = vunpack.c.l.b16 %v1044
    %v1185 = vunpack.c.h.b16 %v1044
    %v1186 = vunpack.c.l.b16 %v1045
    %v1187 = vunpack.c.h.b16 %v1045
    %v1188 = vunpack.c.l.b16 %v1046
    %v1189 = vunpack.c.h.b16 %v1046
    %v1190 = vunpack.c.l.b16 %v1047
    %v1191 = vunpack.c.h.b16 %v1047
    %v1192 = vunpack.c.l.b16 %v1048
    %v1193 = vunpack.c.h.b16 %v1048
    %v1194 = vunpack.c.l.b16 %v1049
    %v1195 = vunpack.c.h.b16 %v1049
    %v1196 = vunpack.c.l.b16 %v1050
    %v1197 = vunpack.c.h.b16 %v1050
    %v1198 = vunpack.c.l.b16 %v1051
    %v1199 = vunpack.c.h.b16 %v1051
    %v1200 = vunpack.c.l.b16 %v1052
    %v1201 = vunpack.c.h.b16 %v1052
    %v1202 = vunpack.c.l.b16 %v1053
    %v1203 = vunpack.c.h.b16 %v1053
    %v1204 = vunpack.c.l.b16 %v1054
    %v1205 = vunpack.c.h.b16 %v1054
    %v1206 = vunpack.c.l.b16 %v1055
    %v1207 = vunpack.c.h.b16 %v1055
    %v1208 = vunpack.c.l.b16 %v1056
    %v1209 = vunpack.c.h.b16 %v1056
    %v1210 = vunpack.c.l.b16 %v1057
    %v1211 = vunpack.c.h.b16 %v1057
    %v1212 = vunpack.c.l.b16 %v1058
    %v1213 = vunpack.c.h.b16 %v1058
    %v1214 = vunpack.c.l.b16 %v1059
    %v1215 = vunpack.c.h.b16 %v1059
    %v1216 = vpack.c.b16 %v1122, %v1120
    %v1217 = vpack.c.b16 %v1123, %v1121
    %v1218 = vpack.c.b16 %v1126, %v1124
    %v1219 = vpack.c.b16 %v1127, %v1125
    %v1220 = vpack.c.b16 %v1130, %v1128
    %v1221 = vpack.c.b16 %v1131, %v1129
    %v1222 = vpack.c.b16 %v1134, %v1132
    %v1223 = vpack.c.b16 %v1135, %v1133
    %v1224 = vpack.c.b16 %v1138, %v1136
    %v1225 = vpack.c.b16 %v1139, %v1137
    %v1226 = vpack.c.b16 %v1142, %v1140
    %v1227 = vpack.c.b16 %v1143, %v1141
    %v1228 = vpack.c.b16 %v1146, %v1144
    %v1229 = vpack.c.b16 %v1147, %v1145
    %v1230 = vpack.c.b16 %v1150, %v1148
    %v1231 = vpack.c.b16 %v1151, %v1149
    %v1232 = vpack.c.b16 %v1154, %v1152
    %v1233 = vpack.c.b16 %v1155, %v1153
    %v1234 = vpack.c.b16 %v1158, %v1156
    %v1235 = vpack.c.b16 %v1159, %v1157
    %v1236 = vpack.c.b16 %v1162, %v1160
    %v1237 = vpack.c.b16 %v1163, %v1161
    %v1238 = vpack.c.b16 %v1166, %v1164
    %v1239 = vpack.c.b16 %v1167, %v1165
    %v1240 = vpack.c.b16 %v1170, %v1168
    %v1241 = vpack.c.b16 %v1171, %v1169
    %v1242 = vpack.c.b16 %v1174, %v1172
    %v1243 = vpack.c.b16 %v1175, %v1173
    %v1244 = vpack.c.b16 %v1178, %v1176
    %v1245 = vpack.c.b16 %v1179, %v1177
    %v1246 = vpack.c.b16 %v1182, %v1180
    %v1247 = vpack.c.b16 %v1183, %v1181
    %v1248 = vpack.c.b16 %v1186, %v1184
    %v1249 = vpack.c.b16 %v1187, %v1185
    %v1250 = vpack.c.b16 %v1190, %v1188
    %v1251 = vpack.c.b16 %v1191, %v1189
    %v1252 = vpack.c.b16 %v1194, %v1192
    %v1253 = vpack.c.b16 %v1195, %v1193
    %v1254 = vpack.c.b16 %v1198, %v1196
    %v1255 = vpack.c.b16 %v1199, %v1197
    %v1256 = vpack.c.b16 %v1202, %v1200
    %v1257 = vpack.c.b16 %v1203, %v1201
    %v1258 = vpack.c.b16 %v1206, %v1204
    %v1259 = vpack.c.b16 %v1207, %v1205
    %v1260 = vpack.c.b16 %v1210, %v1208
    %v1261 = vpack.c.b16 %v1211, %v1209
    %v1262 = vpack.c.b16 %v1214, %v1212
    %v1263 = vpack.c.b16 %v1215, %v1213
    %1312 = vmatprep.subr.bf16.mxu0 %v1217
    %1313 = vmatpush1.bf16.msra.mxu0 %v1216
    %1314 = vmatprep.subr.bf16.mxu0 %v1219
    %1315 = vmatpush1.bf16.msra.mxu0 %v1218
    %1316 = vmatprep.subr.bf16.mxu0 %v1221
    %1317 = vmatpush1.bf16.msra.mxu0 %v1220
    %1318 = vmatprep.subr.bf16.mxu0 %v1223
    %1319 = vmatpush1.bf16.msra.mxu0 %v1222
    %1320 = vmatprep.subr.bf16.mxu0 %v1225
    %1321 = vmatpush1.bf16.msra.mxu0 %v1224
    %1322 = vmatprep.subr.bf16.mxu0 %v1227
    %1323 = vmatpush1.bf16.msra.mxu0 %v1226
    %1324 = vmatprep.subr.bf16.mxu0 %v1229
    %1325 = vmatpush1.bf16.msra.mxu0 %v1228
    %1326 = vmatprep.subr.bf16.mxu0 %v1231
    %1327 = vmatpush1.bf16.msra.mxu0 %v1230
    %1328 = vmatprep.subr.bf16.mxu0 %v1233
    %1329 = vmatpush1.bf16.msra.mxu0 %v1232
    %1330 = vmatprep.subr.bf16.mxu0 %v1235
    %1331 = vmatpush1.bf16.msra.mxu0 %v1234
    %1332 = vmatprep.subr.bf16.mxu0 %v1237
    %1333 = vmatpush1.bf16.msra.mxu0 %v1236
    %1334 = vmatprep.subr.bf16.mxu0 %v1239
    %1335 = vmatpush1.bf16.msra.mxu0 %v1238
    %1336 = vmatprep.subr.bf16.mxu0 %v1241
    %1337 = vmatpush1.bf16.msra.mxu0 %v1240
    %1338 = vmatprep.subr.bf16.mxu0 %v1243
    %1339 = vmatpush1.bf16.msra.mxu0 %v1242
    %1340 = vmatprep.subr.bf16.mxu0 %v1245
    %1341 = vmatpush1.bf16.msra.mxu0 %v1244
    %1342 = vmatprep.subr.bf16.mxu0 %v1247
    %1343 = vmatpush1.bf16.msra.mxu0 %v1246
    %1344 = vmatprep.mubr.bf16.mxu0 %v1010
    %1345 = vmatmul.mubr.bf16.gmra.mrb[0].mxu0 %v1009
    %v1346 = vpop.f32.mrb[0].mxu0
    %v1347 = vadd.f32 %v1065, %v1346
    %v1348 = vpop.f32.mrb[0].mxu0
    %v1349 = vadd.f32 %v1069, %v1348
    %v1350 = vpop.f32.mrb[0].mxu0
    %v1351 = vpop.f32.mrb[0].mxu0
    %1352 = vdwg.mxu0
    %1353 = vmatprep.subr.bf16.mxu0 %v1249
    %1354 = vmatpush1.bf16.msra.mxu0 %v1248
    %1355 = vmatprep.subr.bf16.mxu0 %v1251
    %1356 = vmatpush1.bf16.msra.mxu0 %v1250
    %1357 = vmatprep.subr.bf16.mxu0 %v1253
    %1358 = vmatpush1.bf16.msra.mxu0 %v1252
    %1359 = vmatprep.subr.bf16.mxu0 %v1255
    %1360 = vmatpush1.bf16.msra.mxu0 %v1254
    %1361 = vmatprep.subr.bf16.mxu0 %v1257
    %1362 = vmatpush1.bf16.msra.mxu0 %v1256
    %1363 = vmatprep.subr.bf16.mxu0 %v1259
    %1364 = vmatpush1.bf16.msra.mxu0 %v1258
    %1365 = vmatprep.subr.bf16.mxu0 %v1261
    %1366 = vmatpush1.bf16.msra.mxu0 %v1260
    %1367 = vmatprep.subr.bf16.mxu0 %v1263
    %1368 = vmatpush1.bf16.msra.mxu0 %v1262
    %1369 = vmatprep.subr.bf16.mxu0 0
    %1370 = vmatpush1.bf16.msra.mxu0 0
    %1371 = vmatprep.subr.bf16.mxu0 0
    %1372 = vmatpush1.bf16.msra.mxu0 0
    %1373 = vmatprep.subr.bf16.mxu0 0
    %1374 = vmatpush1.bf16.msra.mxu0 0
    %1375 = vmatprep.subr.bf16.mxu0 0
    %1376 = vmatpush1.bf16.msra.mxu0 0
    %1377 = vmatprep.subr.bf16.mxu0 0
    %1378 = vmatpush1.bf16.msra.mxu0 0
    %1379 = vmatprep.subr.bf16.mxu0 0
    %1380 = vmatpush1.bf16.msra.mxu0 0
    %1381 = vmatprep.subr.bf16.mxu0 0
    %1382 = vmatpush1.bf16.msra.mxu0 0
    %1383 = vmatprep.subr.bf16.mxu0 0
    %1384 = vmatpush1.bf16.msra.mxu0 0
    %1385 = vmatprep.mubr.bf16.mxu0 0
    %1386 = vmatmul.mubr.bf16.gmra.mrb[0].mxu0 %v1011
    %v1387 = vpop.f32.mrb[0].mxu0
    %v1388 = vadd.f32 %v1347, %v1387
    %v1389 = vpop.f32.mrb[0].mxu0
    %v1390 = vadd.f32 %v1349, %v1389
    %v1391 = vpop.f32.mrb[0].mxu0
    %v1392 = vpop.f32.mrb[0].mxu0
    %1393 = vdwg.mxu0
    %v1394 = vmax.f32 %v1388, 0.0
    %v1395 = vmax.f32 %v1390, 0.0
    %v1396 = vpack.c.bf16 %v1394, %v1394
    %v1397 = vpack.c.bf16 %v1395, %v1395
    %v1398 = vld [vmem:[%s6] sm:$0xff]
    %v1399 = vld [vmem:[%s6 + $0x8] sm:$0xff]
    %v1400 = vld [vmem:[%s6 + $0x10] sm:$0xff]
    %v1401 = vld [vmem:[%s6 + $0x18] sm:$0xff]
    %v1402 = vld [vmem:[%s6 + $0x20] sm:$0xff]
    %v1403 = vld [vmem:[%s6 + $0x28] sm:$0xff]
    %v1404 = vld [vmem:[%s6 + $0x30] sm:$0xff]
    %v1405 = vld [vmem:[%s6 + $0x38] sm:$0xff]
    %v1406 = vld [vmem:[%s6 + $0x40] sm:$0xff]
    %v1407 = vld [vmem:[%s6 + $0x48] sm:$0xff]
    %v1408 = vld [vmem:[%s6 + $0x50] sm:$0xff]
    %v1409 = vld [vmem:[%s6 + $0x58] sm:$0xff]
    %v1410 = vld [vmem:[%s6 + $0x60] sm:$0xff]
    %v1411 = vld [vmem:[%s6 + $0x68] sm:$0xff]
    %v1412 = vld [vmem:[%s6 + $0x70] sm:$0xff]
    %v1413 = vld [vmem:[%s6 + $0x78] sm:$0xff]
    %v1414 = vld [vmem:[%s6 + $0x80] sm:$0xff]
    %v1415 = vld [vmem:[%s6 + $0x88] sm:$0xff]
    %v1416 = vld [vmem:[%s6 + $0x90] sm:$0xff]
    %v1417 = vld [vmem:[%s6 + $0x98] sm:$0xff]
    %v1418 = vld [vmem:[%s6 + $0xa0] sm:$0xff]
    %v1419 = vld [vmem:[%s6 + $0xa8] sm:$0xff]
    %v1420 = vld [vmem:[%s6 + $0xb0] sm:$0xff]
    %v1421 = vld [vmem:[%s6 + $0xb8] sm:$0xff]
    %v1422 = vld [vmem:[%s6 + $0xc0] sm:$0xff]
    %v1423 = vld [vmem:[%s6 + $0xc8] sm:$0xff]
    %v1424 = vld [vmem:[%s6 + $0xd0] sm:$0xff]
    %v1425 = vld [vmem:[%s6 + $0xd8] sm:$0xff]
    %v1426 = vld [vmem:[%s6 + $0xe0] sm:$0xff]
    %v1427 = vld [vmem:[%s6 + $0xe8] sm:$0xff]
    %v1428 = vld [vmem:[%s6 + $0xf0] sm:$0xff]
    %v1429 = vld [vmem:[%s6 + $0xf8] sm:$0xff]
    %v1430 = vld [vmem:[%s7] sm:$0x3]
    %v1432 = vlaneseq
    %v1433 = vshrl.u32 %v1432, 7
    %v1434 = vsub.s32 0, %v1433
    %v1435 = vrot.slane %v1430, %v1434
    %v1436 = vlaneseq
    %v1437 = vshrl.u32 %v1436, 7
    %v1438 = vsub.s32 1, %v1437
    %v1439 = vrot.slane %v1430, %v1438
    %v1474 = vunpack.c.l.b16 %v1398
    %v1475 = vunpack.c.h.b16 %v1398
    %v1476 = vunpack.c.l.b16 %v1399
    %v1477 = vunpack.c.h.b16 %v1399
    %v1478 = vunpack.c.l.b16 %v1400
    %v1479 = vunpack.c.h.b16 %v1400
    %v1480 = vunpack.c.l.b16 %v1401
    %v1481 = vunpack.c.h.b16 %v1401
    %v1482 = vunpack.c.l.b16 %v1402
    %v1483 = vunpack.c.h.b16 %v1402
    %v1484 = vunpack.c.l.b16 %v1403
    %v1485 = vunpack.c.h.b16 %v1403
    %v1486 = vunpack.c.l.b16 %v1404
    %v1487 = vunpack.c.h.b16 %v1404
    %v1488 = vunpack.c.l.b16 %v1405
    %v1489 = vunpack.c.h.b16 %v1405
    %v1490 = vunpack.c.l.b16 %v1406
    %v1491 = vunpack.c.h.b16 %v1406
    %v1492 = vunpack.c.l.b16 %v1407
    %v1493 = vunpack.c.h.b16 %v1407
    %v1494 = vunpack.c.l.b16 %v1408
    %v1495 = vunpack.c.h.b16 %v1408
    %v1496 = vunpack.c.l.b16 %v1409
    %v1497 = vunpack.c.h.b16 %v1409
    %v1498 = vunpack.c.l.b16 %v1410
    %v1499 = vunpack.c.h.b16 %v1410
    %v1500 = vunpack.c.l.b16 %v1411
    %v1501 = vunpack.c.h.b16 %v1411
    %v1502 = vunpack.c.l.b16 %v1412
    %v1503 = vunpack.c.h.b16 %v1412
    %v1504 = vunpack.c.l.b16 %v1413
    %v1505 = vunpack.c.h.b16 %v1413
    %v1506 = vunpack.c.l.b16 %v1414
    %v1507 = vunpack.c.h.b16 %v1414
    %v1508 = vunpack.c.l.b16 %v1415
    %v1509 = vunpack.c.h.b16 %v1415
    %v1510 = vunpack.c.l.b16 %v1416
    %v1511 = vunpack.c.h.b16 %v1416
    %v1512 = vunpack.c.l.b16 %v1417
    %v1513 = vunpack.c.h.b16 %v1417
    %v1514 = vunpack.c.l.b16 %v1418
    %v1515 = vunpack.c.h.b16 %v1418
    %v1516 = vunpack.c.l.b16 %v1419
    %v1517 = vunpack.c.h.b16 %v1419
    %v1518 = vunpack.c.l.b16 %v1420
    %v1519 = vunpack.c.h.b16 %v1420
    %v1520 = vunpack.c.l.b16 %v1421
    %v1521 = vunpack.c.h.b16 %v1421
    %v1522 = vunpack.c.l.b16 %v1422
    %v1523 = vunpack.c.h.b16 %v1422
    %v1524 = vunpack.c.l.b16 %v1423
    %v1525 = vunpack.c.h.b16 %v1423
    %v1526 = vunpack.c.l.b16 %v1424
    %v1527 = vunpack.c.h.b16 %v1424
    %v1528 = vunpack.c.l.b16 %v1425
    %v1529 = vunpack.c.h.b16 %v1425
    %v1530 = vunpack.c.l.b16 %v1426
    %v1531 = vunpack.c.h.b16 %v1426
    %v1532 = vunpack.c.l.b16 %v1427
    %v1533 = vunpack.c.h.b16 %v1427
    %v1534 = vunpack.c.l.b16 %v1428
    %v1535 = vunpack.c.h.b16 %v1428
    %v1536 = vunpack.c.l.b16 %v1429
    %v1537 = vunpack.c.h.b16 %v1429
    %v1538 = vpack.c.b16 %v1476, %v1474
    %v1539 = vpack.c.b16 %v1477, %v1475
    %v1540 = vpack.c.b16 %v1480, %v1478
    %v1541 = vpack.c.b16 %v1481, %v1479
    %v1542 = vpack.c.b16 %v1484, %v1482
    %v1543 = vpack.c.b16 %v1485, %v1483
    %v1544 = vpack.c.b16 %v1488, %v1486
    %v1545 = vpack.c.b16 %v1489, %v1487
    %v1546 = vpack.c.b16 %v1492, %v1490
    %v1547 = vpack.c.b16 %v1493, %v1491
    %v1548 = vpack.c.b16 %v1496, %v1494
    %v1549 = vpack.c.b16 %v1497, %v1495
    %v1550 = vpack.c.b16 %v1500, %v1498
    %v1551 = vpack.c.b16 %v1501, %v1499
    %v1552 = vpack.c.b16 %v1504, %v1502
    %v1553 = vpack.c.b16 %v1505, %v1503
    %v1554 = vpack.c.b16 %v1508, %v1506
    %v1555 = vpack.c.b16 %v1509, %v1507
    %v1556 = vpack.c.b16 %v1512, %v1510
    %v1557 = vpack.c.b16 %v1513, %v1511
    %v1558 = vpack.c.b16 %v1516, %v1514
    %v1559 = vpack.c.b16 %v1517, %v1515
    %v1560 = vpack.c.b16 %v1520, %v1518
    %v1561 = vpack.c.b16 %v1521, %v1519
    %v1562 = vpack.c.b16 %v1524, %v1522
    %v1563 = vpack.c.b16 %v1525, %v1523
    %v1564 = vpack.c.b16 %v1528, %v1526
    %v1565 = vpack.c.b16 %v1529, %v1527
    %v1566 = vpack.c.b16 %v1532, %v1530
    %v1567 = vpack.c.b16 %v1533, %v1531
    %v1568 = vpack.c.b16 %v1536, %v1534
    %v1569 = vpack.c.b16 %v1537, %v1535
    %1602 = vmatprep.subr.bf16.mxu0 %v1539
    %1603 = vmatpush1.bf16.msra.mxu0 %v1538
    %1604 = vmatprep.subr.bf16.mxu0 %v1541
    %1605 = vmatpush1.bf16.msra.mxu0 %v1540
    %1606 = vmatprep.subr.bf16.mxu0 %v1543
    %1607 = vmatpush1.bf16.msra.mxu0 %v1542
    %1608 = vmatprep.subr.bf16.mxu0 %v1545
    %1609 = vmatpush1.bf16.msra.mxu0 %v1544
    %1610 = vmatprep.subr.bf16.mxu0 %v1547
    %1611 = vmatpush1.bf16.msra.mxu0 %v1546
    %1612 = vmatprep.subr.bf16.mxu0 %v1549
    %1613 = vmatpush1.bf16.msra.mxu0 %v1548
    %1614 = vmatprep.subr.bf16.mxu0 %v1551
    %1615 = vmatpush1.bf16.msra.mxu0 %v1550
    %1616 = vmatprep.subr.bf16.mxu0 %v1553
    %1617 = vmatpush1.bf16.msra.mxu0 %v1552
    %1618 = vmatprep.subr.bf16.mxu0 %v1555
    %1619 = vmatpush1.bf16.msra.mxu0 %v1554
    %1620 = vmatprep.subr.bf16.mxu0 %v1557
    %1621 = vmatpush1.bf16.msra.mxu0 %v1556
    %1622 = vmatprep.subr.bf16.mxu0 %v1559
    %1623 = vmatpush1.bf16.msra.mxu0 %v1558
    %1624 = vmatprep.subr.bf16.mxu0 %v1561
    %1625 = vmatpush1.bf16.msra.mxu0 %v1560
    %1626 = vmatprep.subr.bf16.mxu0 %v1563
    %1627 = vmatpush1.bf16.msra.mxu0 %v1562
    %1628 = vmatprep.subr.bf16.mxu0 %v1565
    %1629 = vmatpush1.bf16.msra.mxu0 %v1564
    %1630 = vmatprep.subr.bf16.mxu0 %v1567
    %1631 = vmatpush1.bf16.msra.mxu0 %v1566
    %1632 = vmatprep.subr.bf16.mxu0 %v1569
    %1633 = vmatpush1.bf16.msra.mxu0 %v1568
    %1634 = vmatprep.mubr.bf16.mxu0 %v1397
    %1635 = vmatmul.mubr.bf16.gmra.mrb[0].mxu0 %v1396
    %v1636 = vpop.f32.mrb[0].mxu0
    %v1637 = vadd.f32 %v1435, %v1636
    %v1638 = vpop.f32.mrb[0].mxu0
    %v1639 = vadd.f32 %v1439, %v1638
    %v1640 = vpop.f32.mrb[0].mxu0
    %v1641 = vpop.f32.mrb[0].mxu0
    %1642 = vdwg.mxu0
    %v1643 = vmax.f32 %v1637, 0.0
    %v1644 = vmax.f32 %v1639, 0.0
    %v1645 = vld [vmem:[%s8] sm:$0x3]
    %v1647 = vlaneseq
    %v1648 = vshrl.u32 %v1647, 7
    %v1649 = vsub.s32 0, %v1648
    %v1650 = vrot.slane %v1645, %v1649
    %v1651 = vlaneseq
    %v1652 = vshrl.u32 %v1651, 7
    %v1653 = vsub.s32 1, %v1652
    %v1654 = vrot.slane %v1645, %v1653
    %v1657 = vmul.f32 %v1643, %v1650
    %v1658 = vmul.f32 %v1644, %v1654
    %v1659 = vsel %vm89, %v1657, 0.0
    %v1660 = vsel %vm89, %v1658, 0.0
    %v1661 = vadd.f32 %v1659, %v1660
    %1662 = vadd.xlane.f32.xlu0 %v1661
    %v1663 = vpop.xlane.xlu0 %1662
    %v1664 = vld [vmem:[#allocation2] sm:$0x1]
    %v1666 = vlaneseq
    %v1667 = vshrl.u32 %v1666, 7
    %v1668 = vsub.s32 0, %v1667
    %v1669 = vrot.slane %v1664, %v1668
    %v1671 = vadd.f32 %v1663, %v1669
    %vm1672 = vcmask 1024
    %1673 = vst.msk [vmem:[%s11] sm:$0x3] %vm1672, %v1671
    // Predicated region
    $region42: #{contrastive_multi_mlp_forward.3} parent=1 // pred_check
      _
    $region43: #{contrastive_multi_mlp_forward.3} parent=1 // pred_check_branch
      %1675 = sbr.rel (0) target = $region45
    $region44: #{contrastive_multi_mlp_forward.3} parent=1 // pred_region
      %s1677 = ssub.s32 96, 96
      %1678 = vsyncadd [#allocation4], %s1677
      %s1680 = sshll.u32 [#allocation3], 4
      %s1681 = int_to_ptr.vmem [resolvable:$true] %s1680
      %1683 = dma.vmem_to_hbm [thread:$0]  %s1681, 96, %s10, [#allocation4]
    $region45: #{contrastive_multi_mlp_forward.3} parent=1 // pred_fallthru
      _
    // Predicated region
    $region46: #{contrastive_multi_mlp_forward.3} parent=1 // pred_check
      _
    $region47: #{contrastive_multi_mlp_forward.3} parent=1 // pred_check_branch
      %1685 = sbr.rel (0) target = $region49
    $region48: #{contrastive_multi_mlp_forward.3} parent=1 // pred_region
      _
    $region49: #{contrastive_multi_mlp_forward.3} parent=1 // pred_fallthru
      _
    // Predicated region
    $region50: #{contrastive_multi_mlp_forward.3} parent=1 // pred_check
      _
    $region51: #{contrastive_multi_mlp_forward.3} parent=1 // pred_check_branch
      %1687 = sbr.rel (0) target = $region53
    $region52: #{contrastive_multi_mlp_forward.3} parent=1 // pred_region
      %1688 = dma.done [#allocation4], 96
    $region53: #{contrastive_multi_mlp_forward.3} parent=1 // pred_fallthru
      _
    // Predicated region
    $region54: #{contrastive_multi_mlp_forward.3} parent=1 // pred_check
      _
    $region55: #{contrastive_multi_mlp_forward.3} parent=1 // pred_check_branch
      %1690 = sbr.rel (0) target = $region57
    $region56: #{contrastive_multi_mlp_forward.3} parent=1 // pred_region
      _
    $region57: #{contrastive_multi_mlp_forward.3} parent=1 // pred_fallthru
      _
    %1691 = vsyncpa [#allocation4], 1

// kernel: contrastive_multi_mlp_forward.2
$region0: #{contrastive_multi_mlp_forward.2}
  #allocation0 [shape = 'u32[]', space=smem, size = 0x4, offset = 0x4, fixed_abs, tag = 'smem constant byte address 0x4 - core index']
  #allocation1 [shape = 'u32[144,128]{1,0:T(1,128)}', space=vmem, size = 0x12000, scoped, tag = 'internal scratch']
  #allocation2 [shape = 's32[1]{0}', space=sflag, size = 0x4, scoped, tag = 'scoped memory for contrastive_multi_mlp_forward.2']
  #allocation3 [shape = 'u8[512]{0}', space=smem, size = 0x200, scoped, tag = 'prefetched SMEM operand 0']
  %s0 = inlined_call_operand.vmem [shape: s32[3], index: 0, kind: input, shape index: {}]
  %s1 = inlined_call_operand.vmem [shape: bf16[48,384], index: 1, kind: input, shape index: {}]
  %s2 = inlined_call_operand.hbm [shape: bf16[9,384,384], index: 2, kind: input, shape index: {}]
  %s3 = inlined_call_operand.hbm [shape: f32[9,1,384], index: 3, kind: input, shape index: {}]
  %s4 = inlined_call_operand.vmem [shape: f32[48,384], index: 4, kind: output, shape index: {}]
  %s5 = sld [smem:[#allocation0]]
  $region53: #{contrastive_multi_mlp_forward.2} parent=0
    _
  %s7 = ssub.s32 1, %s5
  %s8 = scalar_select 0, %s7, %s5
  %s9 = sshll.u32 %s0, 4
  %s10 = int_to_ptr.vmem [resolvable:$true] %s9
  %12 = dma.vmem_to_smem %s10, 16, [#allocation3], [#allocation2]
  %13 = dma.done [#allocation2], 16
  %14 = sfence
  $region1: #{contrastive_multi_mlp_forward.2} parent=0
    #allocation4 [shape = 'u8[2654208]{0}', space=vmem, size = 0x288000, scoped, tag = 'input window, operand 2, single buffered']
    #allocation5 [shape = 's32[2]{0}', space=sflag, size = 0x8, scoped, tag = 'scoped memory for contrastive_multi_mlp_forward.2']
    #allocation6 [shape = 'u8[13824]{0}', space=vmem, size = 0x3800, scoped, tag = 'input window, operand 3, single buffered']
    #allocation7 [shape = 's32[1]{0}', space=sflag, size = 0x4, scoped, tag = 'scoped memory for contrastive_multi_mlp_forward.2']
    %15 = vsyncpa [#allocation5], 0
    %16 = vsyncpa [#allocation7], 0
    loop: start=0, step=1, limit=5
    $region2: #{contrastive_multi_mlp_forward.2} parent=1 // loop_pre_header
      _
    $region3: #{contrastive_multi_mlp_forward.2} parent=1 // loop_header
      %s18 = sphi 0, %s22
      %p19 = scmp.ge.s32.totalorder %s18, 5
      %s28 = sphi 0, %s30
      %s31 = sphi 0, %s28
      %s32 = sphi 0, %s31
      %s48 = sphi 0, %s32
      %s52 = sphi 0, %s52
      %s54 = sphi 0, %s52
      %s55 = sphi 0, %s54
      %s69 = sphi 0, %s55
      %s73 = sphi 0, %s73
      %s75 = sphi 0, %s73
      %s76 = sphi 0, %s75
      %s90 = sphi 0, %s76
      %s96 = sphi 0, %s98
      %s99 = sphi 0, %s96
      %s100 = sphi 0, %s99
      %s116 = sphi 0, %s100
    $region4: #{contrastive_multi_mlp_forward.2} parent=1 // loop_header_branch
      %21 = sbr.rel (%p19) target = $region8
    $region5: #{contrastive_multi_mlp_forward.2} parent=1 // loop_body
      %s23 = ssub.s32 %s18, 1
      %s24 = ssub.s32 %s18, 2
      %s25 = sadd.s32 %s18, 1
      %s26 = ssub.s32 %s18, %s25
      %p27 = scmp.eq.s32.totalorder %s26, 0
      %s29 = sadd.s32 %s28, 1
      %s30 = scalar_select %p27, %s28, %s29
      %p33 = pneg %p27
      %p34 = scmp.eq.s32.totalorder %s18, 2
      %p35 = por %p33, %p34
      %p36 = scmp.ne.s32.totalorder %s28, %s31
      %p37 = scmp.eq.s32.totalorder %s18, 0
      %p38 = por %p36, %p37
      %p39 = scmp.ne.s32.totalorder %s28, %s31
      %p40 = scmp.eq.s32.totalorder %s23, 2
      %p41 = por %p39, %p40
      %p42 = scmp.ne.s32.totalorder %s31, %s32
      %p43 = scmp.eq.s32.totalorder %s23, 0
      %p44 = por %p42, %p43
      %p45 = scmp.ne.s32.totalorder %s31, %s32
      %p46 = scmp.eq.s32.totalorder %s24, 2
      %p47 = por %p45, %p46
      %p49 = scmp.ne.s32.totalorder %s32, %s48
      %p50 = scmp.eq.s32.totalorder %s24, 0
      %p51 = por %p49, %p50
      %s53 = sadd.s32 %s52, 1
      %p56 = scmp.eq.s32.totalorder %s18, 2
      %p57 = scmp.ne.s32.totalorder %s52, %s54
      %p58 = scmp.eq.s32.totalorder %s18, 0
      %p59 = por %p57, %p58
      %p60 = scmp.ne.s32.totalorder %s52, %s54
      %p61 = scmp.eq.s32.totalorder %s23, 2
      %p62 = por %p60, %p61
      %p63 = scmp.ne.s32.totalorder %s54, %s55
      %p64 = scmp.eq.s32.totalorder %s23, 0
      %p65 = por %p63, %p64
      %p66 = scmp.ne.s32.totalorder %s54, %s55
      %p67 = scmp.eq.s32.totalorder %s24, 2
      %p68 = por %p66, %p67
      %p70 = scmp.ne.s32.totalorder %s55, %s69
      %p71 = scmp.eq.s32.totalorder %s24, 0
      %p72 = por %p70, %p71
      %s74 = sadd.s32 %s73, 1
      %p77 = scmp.eq.s32.totalorder %s18, 2
      %p78 = scmp.ne.s32.totalorder %s73, %s75
      %p79 = scmp.eq.s32.totalorder %s18, 0
      %p80 = por %p78, %p79
      %p81 = scmp.ne.s32.totalorder %s73, %s75
      %p82 = scmp.eq.s32.totalorder %s23, 2
      %p83 = por %p81, %p82
      %p84 = scmp.ne.s32.totalorder %s75, %s76
      %p85 = scmp.eq.s32.totalorder %s23, 0
      %p86 = por %p84, %p85
      %p87 = scmp.ne.s32.totalorder %s75, %s76
      %p88 = scmp.eq.s32.totalorder %s24, 2
      %p89 = por %p87, %p88
      %p91 = scmp.ne.s32.totalorder %s76, %s90
      %p92 = scmp.eq.s32.totalorder %s24, 0
      %p93 = por %p91, %p92
      %s94 = ssub.s32 %s18, %s25
      %p95 = scmp.eq.s32.totalorder %s94, 0
      %s97 = sadd.s32 %s96, 1
      %s98 = scalar_select %p95, %s96, %s97
      %p101 = pneg %p95
      %p102 = scmp.eq.s32.totalorder %s18, 2
      %p103 = por %p101, %p102
      %p104 = scmp.ne.s32.totalorder %s96, %s99
      %p105 = scmp.eq.s32.totalorder %s18, 0
      %p106 = por %p104, %p105
      %p107 = scmp.ne.s32.totalorder %s96, %s99
      %p108 = scmp.eq.s32.totalorder %s23, 2
      %p109 = por %p107, %p108
      %p110 = scmp.ne.s32.totalorder %s99, %s100
      %p111 = scmp.eq.s32.totalorder %s23, 0
      %p112 = por %p110, %p111
      %p113 = scmp.ne.s32.totalorder %s99, %s100
      %p114 = scmp.eq.s32.totalorder %s24, 2
      %p115 = por %p113, %p114
      %p117 = scmp.ne.s32.totalorder %s100, %s116
      %p118 = scmp.eq.s32.totalorder %s24, 0
      %p119 = por %p117, %p118
      %p120 = scmp.le.s32.totalorder 1, %s18
      %p121 = scmp.lt.s32.totalorder %s18, 4
      %p122 = pnand %p120, %p121
      %p123 = pneg %p122
      // Predicated region
      $region9: #{contrastive_multi_mlp_forward.2} parent=5 // pred_check
        _
      $region10: #{contrastive_multi_mlp_forward.2} parent=5 // pred_check_branch
        %125 = sbr.rel (%p122) target = $region12
      $region11: #{contrastive_multi_mlp_forward.2} parent=5 // pred_region
        %s126 = ssub.s32 %s18, 1
        // Predicated region
        $region13: #{contrastive_multi_mlp_forward.2} parent=11 // pred_check
          %p127 = pneg %p65
        $region14: #{contrastive_multi_mlp_forward.2} parent=11 // pred_check_branch
          %129 = sbr.rel (%p127) target = $region16
        $region15: #{contrastive_multi_mlp_forward.2} parent=11 // pred_region
          %s131 = ssub.s32 82944, 82944
          %132 = vsyncadd [#allocation5], %s131
          %s133 = sshll.u32 [#allocation4], 4
          %s134 = int_to_ptr.vmem [resolvable:$true] %s133
          %139 = dma.hbm_to_vmem [thread:$0]  %s2, 82944, %s134, [#allocation5], 192, 192, 12
        $region16: #{contrastive_multi_mlp_forward.2} parent=11 // pred_fallthru
          _
        // Predicated region
        $region17: #{contrastive_multi_mlp_forward.2} parent=11 // pred_check
          %p140 = pneg %p86
        $region18: #{contrastive_multi_mlp_forward.2} parent=11 // pred_check_branch
          %142 = sbr.rel (%p140) target = $region20
        $region19: #{contrastive_multi_mlp_forward.2} parent=11 // pred_region
          %s144 = ssub.s32 432, 432
          %145 = vsyncadd [#allocation7], %s144
          %s146 = sshll.u32 [#allocation6], 4
          %s147 = int_to_ptr.vmem [resolvable:$true] %s146
          %152 = dma.hbm_to_vmem [thread:$0]  %s3, 432, %s147, [#allocation7], 48, 48, 3
        $region20: #{contrastive_multi_mlp_forward.2} parent=11 // pred_fallthru
          _
      $region12: #{contrastive_multi_mlp_forward.2} parent=5 // pred_fallthru
        _
      %p153 = scmp.lt.s32.totalorder %s18, 3
      // Predicated region
      $region21: #{contrastive_multi_mlp_forward.2} parent=5 // pred_check
        %p154 = pneg %p153
      $region22: #{contrastive_multi_mlp_forward.2} parent=5 // pred_check_branch
        %156 = sbr.rel (%p154) target = $region24
      $region23: #{contrastive_multi_mlp_forward.2} parent=5 // pred_region
        // Predicated region
        $region25: #{contrastive_multi_mlp_forward.2} parent=23 // pred_check
          %p157 = pneg %p38
        $region26: #{contrastive_multi_mlp_forward.2} parent=23 // pred_check_branch
          %159 = sbr.rel (%p157) target = $region28
        $region27: #{contrastive_multi_mlp_forward.2} parent=23 // pred_region
          %s160 = smul.u32 2, %s18
          %p161 = scmp.lt.s32.totalorder %s160, 5
          %s162 = scalar_select %p161, %s160, 5
          %s163 = smul.addr %s162, 3
          %s164 = smul.addr %s163, 4
          %s165 = scalar_lea.vmem %s1, %s164
          %s166 = smul.u32 2, %s18
        $region28: #{contrastive_multi_mlp_forward.2} parent=23 // pred_fallthru
          _
      $region24: #{contrastive_multi_mlp_forward.2} parent=5 // pred_fallthru
        _
      %p167 = scmp.le.s32.totalorder 1, %s18
      %p168 = scmp.lt.s32.totalorder %s18, 4
      %p169 = pnand %p167, %p168
      %p170 = pneg %p169
      // Predicated region
      $region29: #{contrastive_multi_mlp_forward.2} parent=5 // pred_check
        _
      $region30: #{contrastive_multi_mlp_forward.2} parent=5 // pred_check_branch
        %172 = sbr.rel (%p169) target = $region32
      $region31: #{contrastive_multi_mlp_forward.2} parent=5 // pred_region
        %s173 = ssub.s32 %s18, 1
        // Predicated region
        $region33: #{contrastive_multi_mlp_forward.2} parent=31 // pred_check
          %p174 = pneg %p65
        $region34: #{contrastive_multi_mlp_forward.2} parent=31 // pred_check_branch
          %176 = sbr.rel (%p174) target = $region36
        $region35: #{contrastive_multi_mlp_forward.2} parent=31 // pred_region
          %177 = dma.done [#allocation5], 82944
        $region36: #{contrastive_multi_mlp_forward.2} parent=31 // pred_fallthru
          _
        // Predicated region
        $region37: #{contrastive_multi_mlp_forward.2} parent=31 // pred_check
          %p178 = pneg %p86
        $region38: #{contrastive_multi_mlp_forward.2} parent=31 // pred_check_branch
          %180 = sbr.rel (%p178) target = $region40
        $region39: #{contrastive_multi_mlp_forward.2} parent=31 // pred_region
          %181 = dma.done [#allocation7], 432
        $region40: #{contrastive_multi_mlp_forward.2} parent=31 // pred_fallthru
          _
        %s182 = smul.u32 2, %s23
        %p183 = scmp.lt.s32.totalorder %s182, 5
        %s184 = scalar_select %p183, %s182, 5
        %s185 = smul.addr %s184, 3
        %s186 = smul.addr %s185, 4
        %s187 = scalar_lea.vmem %s1, %s186
        %p188 = pneg %p44
        %p189 = pneg %p41
        %p190 = pneg %p65
        %p191 = pneg %p62
        %p192 = pneg %p86
        %p193 = pneg %p83
        %p194 = pneg %p112
        %p195 = pneg %p109
        %s196 = smul.u32 2, %s23
        %p197 = scmp.lt.s32.totalorder %s196, 5
        %s198 = scalar_select %p197, %s196, 5
        %s199 = smul.addr %s198, 3
        %s200 = smul.addr %s199, 8
        %s201 = scalar_lea.vmem %s4, %s200
        %s202 = smul.u32 2, %s23
        %p203 = scmp.lt.s32.totalorder %s202, 5
        %s204 = scalar_select %p203, %s202, 5
        %s205 = smul.addr %s204, 3
        %s206 = smul.addr %s205, 4
        %s207 = scalar_lea.vmem %s1, %s206
        %s208 = smul.u32 2, %s23
        %s209 = smul.u32 2, %s23
        %p210 = scmp.lt.s32.totalorder %s209, 5
        %s211 = scalar_select %p210, %s209, 5
        %s212 = smul.addr %s211, 3
        %s213 = smul.addr %s212, 8
        %s214 = scalar_lea.vmem %s4, %s213
        %s215 = smul.u32 2, %s23
        %s217 = sld [smem:[#allocation3 + %s23]]
        %v218 = vld [vmem:[%s207] sm:$0xff]
        %v219 = vld [vmem:[%s207 + $0x8] sm:$0xf]
        %v220 = vld [vmem:[%s207 + $0xc] sm:$0xff]
        %v221 = vld [vmem:[%s207 + $0x14] sm:$0xf]
        %s222 = smul.u32 %s217, 3
        %s223 = smul.u32 %s222, 144
        %s224 = smul.addr %s223, 4
        %s225 = scalar_lea.vmem [#allocation4], %s224
        %v226 = vld [vmem:[%s225] sm:$0xff]
        %v227 = vld [vmem:[%s225 + $0x8] sm:$0xf]
        %v228 = vld [vmem:[%s225 + $0xc] sm:$0xff]
        %v229 = vld [vmem:[%s225 + $0x14] sm:$0xf]
        %v230 = vld [vmem:[%s225 + $0x18] sm:$0xff]
        %v231 = vld [vmem:[%s225 + $0x20] sm:$0xf]
        %v232 = vld [vmem:[%s225 + $0x24] sm:$0xff]
        %v233 = vld [vmem:[%s225 + $0x2c] sm:$0xf]
        %v234 = vld [vmem:[%s225 + $0x30] sm:$0xff]
        %v235 = vld [vmem:[%s225 + $0x38] sm:$0xf]
        %v236 = vld [vmem:[%s225 + $0x3c] sm:$0xff]
        %v237 = vld [vmem:[%s225 + $0x44] sm:$0xf]
        %v238 = vld [vmem:[%s225 + $0x48] sm:$0xff]
        %v239 = vld [vmem:[%s225 + $0x50] sm:$0xf]
        %v240 = vld [vmem:[%s225 + $0x54] sm:$0xff]
        %v241 = vld [vmem:[%s225 + $0x5c] sm:$0xf]
        %v242 = vld [vmem:[%s225 + $0x60] sm:$0xff]
        %v243 = vld [vmem:[%s225 + $0x68] sm:$0xf]
        %v244 = vld [vmem:[%s225 + $0x6c] sm:$0xff]
        %v245 = vld [vmem:[%s225 + $0x74] sm:$0xf]
        %v246 = vld [vmem:[%s225 + $0x78] sm:$0xff]
        %v247 = vld [vmem:[%s225 + $0x80] sm:$0xf]
        %v248 = vld [vmem:[%s225 + $0x84] sm:$0xff]
        %v249 = vld [vmem:[%s225 + $0x8c] sm:$0xf]
        %v250 = vld [vmem:[%s225 + $0x90] sm:$0xff]
        %v251 = vld [vmem:[%s225 + $0x98] sm:$0xf]
        %v252 = vld [vmem:[%s225 + $0x9c] sm:$0xff]
        %v253 = vld [vmem:[%s225 + $0xa4] sm:$0xf]
        %v254 = vld [vmem:[%s225 + $0xa8] sm:$0xff]
        %v255 = vld [vmem:[%s225 + $0xb0] sm:$0xf]
        %v256 = vld [vmem:[%s225 + $0xb4] sm:$0xff]
        %v257 = vld [vmem:[%s225 + $0xbc] sm:$0xf]
        %v258 = vld [vmem:[%s225 + $0xc0] sm:$0xff]
        %v259 = vld [vmem:[%s225 + $0xc8] sm:$0xf]
        %v260 = vld [vmem:[%s225 + $0xcc] sm:$0xff]
        %v261 = vld [vmem:[%s225 + $0xd4] sm:$0xf]
        %v262 = vld [vmem:[%s225 + $0xd8] sm:$0xff]
        %v263 = vld [vmem:[%s225 + $0xe0] sm:$0xf]
        %v264 = vld [vmem:[%s225 + $0xe4] sm:$0xff]
        %v265 = vld [vmem:[%s225 + $0xec] sm:$0xf]
        %v266 = vld [vmem:[%s225 + $0xf0] sm:$0xff]
        %v267 = vld [vmem:[%s225 + $0xf8] sm:$0xf]
        %v268 = vld [vmem:[%s225 + $0xfc] sm:$0xff]
        %v269 = vld [vmem:[%s225 + $0x104] sm:$0xf]
        %v270 = vld [vmem:[%s225 + $0x108] sm:$0xff]
        %v271 = vld [vmem:[%s225 + $0x110] sm:$0xf]
        %v272 = vld [vmem:[%s225 + $0x114] sm:$0xff]
        %v273 = vld [vmem:[%s225 + $0x11c] sm:$0xf]
        %v274 = vld [vmem:[%s225 + $0x120] sm:$0xff]
        %v275 = vld [vmem:[%s225 + $0x128] sm:$0xf]
        %v276 = vld [vmem:[%s225 + $0x12c] sm:$0xff]
        %v277 = vld [vmem:[%s225 + $0x134] sm:$0xf]
        %v278 = vld [vmem:[%s225 + $0x138] sm:$0xff]
        %v279 = vld [vmem:[%s225 + $0x140] sm:$0xf]
        %v280 = vld [vmem:[%s225 + $0x144] sm:$0xff]
        %v281 = vld [vmem:[%s225 + $0x14c] sm:$0xf]
        %v282 = vld [vmem:[%s225 + $0x150] sm:$0xff]
        %v283 = vld [vmem:[%s225 + $0x158] sm:$0xf]
        %v284 = vld [vmem:[%s225 + $0x15c] sm:$0xff]
        %v285 = vld [vmem:[%s225 + $0x164] sm:$0xf]
        %v286 = vld [vmem:[%s225 + $0x168] sm:$0xff]
        %v287 = vld [vmem:[%s225 + $0x170] sm:$0xf]
        %v288 = vld [vmem:[%s225 + $0x174] sm:$0xff]
        %v289 = vld [vmem:[%s225 + $0x17c] sm:$0xf]
        %v290 = vld [vmem:[%s225 + $0x180] sm:$0xff]
        %v291 = vld [vmem:[%s225 + $0x188] sm:$0xf]
        %v292 = vld [vmem:[%s225 + $0x18c] sm:$0xff]
        %v293 = vld [vmem:[%s225 + $0x194] sm:$0xf]
        %v294 = vld [vmem:[%s225 + $0x198] sm:$0xff]
        %v295 = vld [vmem:[%s225 + $0x1a0] sm:$0xf]
        %v296 = vld [vmem:[%s225 + $0x1a4] sm:$0xff]
        %v297 = vld [vmem:[%s225 + $0x1ac] sm:$0xf]
        %v298 = vld [vmem:[%s225 + $0x1b0] sm:$0xff]
        %v299 = vld [vmem:[%s225 + $0x1b8] sm:$0xf]
        %v300 = vld [vmem:[%s225 + $0x1bc] sm:$0xff]
        %v301 = vld [vmem:[%s225 + $0x1c4] sm:$0xf]
        %v302 = vld [vmem:[%s225 + $0x1c8] sm:$0xff]
        %v303 = vld [vmem:[%s225 + $0x1d0] sm:$0xf]
        %v304 = vld [vmem:[%s225 + $0x1d4] sm:$0xff]
        %v305 = vld [vmem:[%s225 + $0x1dc] sm:$0xf]
        %v306 = vld [vmem:[%s225 + $0x1e0] sm:$0xff]
        %v307 = vld [vmem:[%s225 + $0x1e8] sm:$0xf]
        %v308 = vld [vmem:[%s225 + $0x1ec] sm:$0xff]
        %v309 = vld [vmem:[%s225 + $0x1f4] sm:$0xf]
        %v310 = vld [vmem:[%s225 + $0x1f8] sm:$0xff]
        %v311 = vld [vmem:[%s225 + $0x200] sm:$0xf]
        %v312 = vld [vmem:[%s225 + $0x204] sm:$0xff]
        %v313 = vld [vmem:[%s225 + $0x20c] sm:$0xf]
        %v314 = vld [vmem:[%s225 + $0x210] sm:$0xff]
        %v315 = vld [vmem:[%s225 + $0x218] sm:$0xf]
        %v316 = vld [vmem:[%s225 + $0x21c] sm:$0xff]
        %v317 = vld [vmem:[%s225 + $0x224] sm:$0xf]
        %v318 = vld [vmem:[%s225 + $0x228] sm:$0xff]
        %v319 = vld [vmem:[%s225 + $0x230] sm:$0xf]
        %v320 = vld [vmem:[%s225 + $0x234] sm:$0xff]
        %v321 = vld [vmem:[%s225 + $0x23c] sm:$0xf]
        %s322 = smul.u32 %s222, 3
        %s323 = scalar_lea.vmem [#allocation6], %s322
        %v324 = vld [vmem:[%s323] sm:$0x7]
        %v326 = vlaneseq
        %v327 = vshrl.u32 %v326, 7
        %v328 = vsub.s32 0, %v327
        %v329 = vrot.slane %v324, %v328
        %v330 = vlaneseq
        %v331 = vshrl.u32 %v330, 7
        %v332 = vsub.s32 1, %v331
        %v333 = vrot.slane %v324, %v332
        %v334 = vlaneseq
        %v335 = vshrl.u32 %v334, 7
        %v336 = vsub.s32 2, %v335
        %v337 = vrot.slane %v324, %v336
        %v345 = vunpack.c.l.b16 %v218
        %v346 = vunpack.c.h.b16 %v218
        %v347 = vunpack.c.l.b16 %v219
        %v348 = vunpack.c.l.b16 %v220
        %v349 = vunpack.c.h.b16 %v220
        %v350 = vunpack.c.l.b16 %v221
        %v351 = vpack.c.b16 %v348, %v345
        %v352 = vpack.c.b16 %v349, %v346
        %v353 = vpack.c.b16 %v350, %v347
        %v453 = vunpack.c.l.b16 %v226
        %v454 = vunpack.c.h.b16 %v226
        %v455 = vunpack.c.l.b16 %v227
        %v456 = vunpack.c.l.b16 %v228
        %v457 = vunpack.c.h.b16 %v228
        %v458 = vunpack.c.l.b16 %v229
        %v459 = vunpack.c.l.b16 %v230
        %v460 = vunpack.c.h.b16 %v230
        %v461 = vunpack.c.l.b16 %v231
        %v462 = vunpack.c.l.b16 %v232
        %v463 = vunpack.c.h.b16 %v232
        %v464 = vunpack.c.l.b16 %v233
        %v465 = vunpack.c.l.b16 %v234
        %v466 = vunpack.c.h.b16 %v234
        %v467 = vunpack.c.l.b16 %v235
        %v468 = vunpack.c.l.b16 %v236
        %v469 = vunpack.c.h.b16 %v236
        %v470 = vunpack.c.l.b16 %v237
        %v471 = vunpack.c.l.b16 %v238
        %v472 = vunpack.c.h.b16 %v238
        %v473 = vunpack.c.l.b16 %v239
        %v474 = vunpack.c.l.b16 %v240
        %v475 = vunpack.c.h.b16 %v240
        %v476 = vunpack.c.l.b16 %v241
        %v477 = vunpack.c.l.b16 %v242
        %v478 = vunpack.c.h.b16 %v242
        %v479 = vunpack.c.l.b16 %v243
        %v480 = vunpack.c.l.b16 %v244
        %v481 = vunpack.c.h.b16 %v244
        %v482 = vunpack.c.l.b16 %v245
        %v483 = vunpack.c.l.b16 %v246
        %v484 = vunpack.c.h.b16 %v246
        %v485 = vunpack.c.l.b16 %v247
        %v486 = vunpack.c.l.b16 %v248
        %v487 = vunpack.c.h.b16 %v248
        %v488 = vunpack.c.l.b16 %v249
        %v489 = vunpack.c.l.b16 %v250
        %v490 = vunpack.c.h.b16 %v250
        %v491 = vunpack.c.l.b16 %v251
        %v492 = vunpack.c.l.b16 %v252
        %v493 = vunpack.c.h.b16 %v252
        %v494 = vunpack.c.l.b16 %v253
        %v495 = vunpack.c.l.b16 %v254
        %v496 = vunpack.c.h.b16 %v254
        %v497 = vunpack.c.l.b16 %v255
        %v498 = vunpack.c.l.b16 %v256
        %v499 = vunpack.c.h.b16 %v256
        %v500 = vunpack.c.l.b16 %v257
        %v501 = vunpack.c.l.b16 %v258
        %v502 = vunpack.c.h.b16 %v258
        %v503 = vunpack.c.l.b16 %v259
        %v504 = vunpack.c.l.b16 %v260
        %v505 = vunpack.c.h.b16 %v260
        %v506 = vunpack.c.l.b16 %v261
        %v507 = vunpack.c.l.b16 %v262
        %v508 = vunpack.c.h.b16 %v262
        %v509 = vunpack.c.l.b16 %v263
        %v510 = vunpack.c.l.b16 %v264
        %v511 = vunpack.c.h.b16 %v264
        %v512 = vunpack.c.l.b16 %v265
        %v513 = vunpack.c.l.b16 %v266
        %v514 = vunpack.c.h.b16 %v266
        %v515 = vunpack.c.l.b16 %v267
        %v516 = vunpack.c.l.b16 %v268
        %v517 = vunpack.c.h.b16 %v268
        %v518 = vunpack.c.l.b16 %v269
        %v519 = vunpack.c.l.b16 %v270
        %v520 = vunpack.c.h.b16 %v270
        %v521 = vunpack.c.l.b16 %v271
        %v522 = vunpack.c.l.b16 %v272
        %v523 = vunpack.c.h.b16 %v272
        %v524 = vunpack.c.l.b16 %v273
        %v525 = vunpack.c.l.b16 %v274
        %v526 = vunpack.c.h.b16 %v274
        %v527 = vunpack.c.l.b16 %v275
        %v528 = vunpack.c.l.b16 %v276
        %v529 = vunpack.c.h.b16 %v276
        %v530 = vunpack.c.l.b16 %v277
        %v531 = vunpack.c.l.b16 %v278
        %v532 = vunpack.c.h.b16 %v278
        %v533 = vunpack.c.l.b16 %v279
        %v534 = vunpack.c.l.b16 %v280
        %v535 = vunpack.c.h.b16 %v280
        %v536 = vunpack.c.l.b16 %v281
        %v537 = vunpack.c.l.b16 %v282
        %v538 = vunpack.c.h.b16 %v282
        %v539 = vunpack.c.l.b16 %v283
        %v540 = vunpack.c.l.b16 %v284
        %v541 = vunpack.c.h.b16 %v284
        %v542 = vunpack.c.l.b16 %v285
        %v543 = vunpack.c.l.b16 %v286
        %v544 = vunpack.c.h.b16 %v286
        %v545 = vunpack.c.l.b16 %v287
        %v546 = vunpack.c.l.b16 %v288
        %v547 = vunpack.c.h.b16 %v288
        %v548 = vunpack.c.l.b16 %v289
        %v549 = vunpack.c.l.b16 %v290
        %v550 = vunpack.c.h.b16 %v290
        %v551 = vunpack.c.l.b16 %v291
        %v552 = vunpack.c.l.b16 %v292
        %v553 = vunpack.c.h.b16 %v292
        %v554 = vunpack.c.l.b16 %v293
        %v555 = vunpack.c.l.b16 %v294
        %v556 = vunpack.c.h.b16 %v294
        %v557 = vunpack.c.l.b16 %v295
        %v558 = vunpack.c.l.b16 %v296
        %v559 = vunpack.c.h.b16 %v296
        %v560 = vunpack.c.l.b16 %v297
        %v561 = vunpack.c.l.b16 %v298
        %v562 = vunpack.c.h.b16 %v298
        %v563 = vunpack.c.l.b16 %v299
        %v564 = vunpack.c.l.b16 %v300
        %v565 = vunpack.c.h.b16 %v300
        %v566 = vunpack.c.l.b16 %v301
        %v567 = vunpack.c.l.b16 %v302
        %v568 = vunpack.c.h.b16 %v302
        %v569 = vunpack.c.l.b16 %v303
        %v570 = vunpack.c.l.b16 %v304
        %v571 = vunpack.c.h.b16 %v304
        %v572 = vunpack.c.l.b16 %v305
        %v573 = vunpack.c.l.b16 %v306
        %v574 = vunpack.c.h.b16 %v306
        %v575 = vunpack.c.l.b16 %v307
        %v576 = vunpack.c.l.b16 %v308
        %v577 = vunpack.c.h.b16 %v308
        %v578 = vunpack.c.l.b16 %v309
        %v579 = vunpack.c.l.b16 %v310
        %v580 = vunpack.c.h.b16 %v310
        %v581 = vunpack.c.l.b16 %v311
        %v582 = vunpack.c.l.b16 %v312
        %v583 = vunpack.c.h.b16 %v312
        %v584 = vunpack.c.l.b16 %v313
        %v585 = vunpack.c.l.b16 %v314
        %v586 = vunpack.c.h.b16 %v314
        %v587 = vunpack.c.l.b16 %v315
        %v588 = vunpack.c.l.b16 %v316
        %v589 = vunpack.c.h.b16 %v316
        %v590 = vunpack.c.l.b16 %v317
        %v591 = vunpack.c.l.b16 %v318
        %v592 = vunpack.c.h.b16 %v318
        %v593 = vunpack.c.l.b16 %v319
        %v594 = vunpack.c.l.b16 %v320
        %v595 = vunpack.c.h.b16 %v320
        %v596 = vunpack.c.l.b16 %v321
        %v597 = vpack.c.b16 %v456, %v453
        %v598 = vpack.c.b16 %v457, %v454
        %v599 = vpack.c.b16 %v458, %v455
        %v600 = vpack.c.b16 %v462, %v459
        %v601 = vpack.c.b16 %v463, %v460
        %v602 = vpack.c.b16 %v464, %v461
        %v603 = vpack.c.b16 %v468, %v465
        %v604 = vpack.c.b16 %v469, %v466
        %v605 = vpack.c.b16 %v470, %v467
        %v606 = vpack.c.b16 %v474, %v471
        %v607 = vpack.c.b16 %v475, %v472
        %v608 = vpack.c.b16 %v476, %v473
        %v609 = vpack.c.b16 %v480, %v477
        %v610 = vpack.c.b16 %v481, %v478
        %v611 = vpack.c.b16 %v482, %v479
        %v612 = vpack.c.b16 %v486, %v483
        %v613 = vpack.c.b16 %v487, %v484
        %v614 = vpack.c.b16 %v488, %v485
        %v615 = vpack.c.b16 %v492, %v489
        %v616 = vpack.c.b16 %v493, %v490
        %v617 = vpack.c.b16 %v494, %v491
        %v618 = vpack.c.b16 %v498, %v495
        %v619 = vpack.c.b16 %v499, %v496
        %v620 = vpack.c.b16 %v500, %v497
        %v621 = vpack.c.b16 %v504, %v501
        %v622 = vpack.c.b16 %v505, %v502
        %v623 = vpack.c.b16 %v506, %v503
        %v624 = vpack.c.b16 %v510, %v507
        %v625 = vpack.c.b16 %v511, %v508
        %v626 = vpack.c.b16 %v512, %v509
        %v627 = vpack.c.b16 %v516, %v513
        %v628 = vpack.c.b16 %v517, %v514
        %v629 = vpack.c.b16 %v518, %v515
        %v630 = vpack.c.b16 %v522, %v519
        %v631 = vpack.c.b16 %v523, %v520
        %v632 = vpack.c.b16 %v524, %v521
        %v633 = vpack.c.b16 %v528, %v525
        %v634 = vpack.c.b16 %v529, %v526
        %v635 = vpack.c.b16 %v530, %v527
        %v636 = vpack.c.b16 %v534, %v531
        %v637 = vpack.c.b16 %v535, %v532
        %v638 = vpack.c.b16 %v536, %v533
        %v639 = vpack.c.b16 %v540, %v537
        %v640 = vpack.c.b16 %v541, %v538
        %v641 = vpack.c.b16 %v542, %v539
        %v642 = vpack.c.b16 %v546, %v543
        %v643 = vpack.c.b16 %v547, %v544
        %v644 = vpack.c.b16 %v548, %v545
        %v645 = vpack.c.b16 %v552, %v549
        %v646 = vpack.c.b16 %v553, %v550
        %v647 = vpack.c.b16 %v554, %v551
        %v648 = vpack.c.b16 %v558, %v555
        %v649 = vpack.c.b16 %v559, %v556
        %v650 = vpack.c.b16 %v560, %v557
        %v651 = vpack.c.b16 %v564, %v561
        %v652 = vpack.c.b16 %v565, %v562
        %v653 = vpack.c.b16 %v566, %v563
        %v654 = vpack.c.b16 %v570, %v567
        %v655 = vpack.c.b16 %v571, %v568
        %v656 = vpack.c.b16 %v572, %v569
        %v657 = vpack.c.b16 %v576, %v573
        %v658 = vpack.c.b16 %v577, %v574
        %v659 = vpack.c.b16 %v578, %v575
        %v660 = vpack.c.b16 %v582, %v579
        %v661 = vpack.c.b16 %v583, %v580
        %v662 = vpack.c.b16 %v584, %v581
        %v663 = vpack.c.b16 %v588, %v585
        %v664 = vpack.c.b16 %v589, %v586
        %v665 = vpack.c.b16 %v590, %v587
        %v666 = vpack.c.b16 %v594, %v591
        %v667 = vpack.c.b16 %v595, %v592
        %v668 = vpack.c.b16 %v596, %v593
        %741 = vmatprep.subr.bf16.mxu0 %v598
        %742 = vmatpush1.bf16.msra.mxu0 %v597
        %743 = vmatprep.subr.bf16.mxu0 %v601
        %744 = vmatpush1.bf16.msra.mxu0 %v600
        %745 = vmatprep.subr.bf16.mxu0 %v604
        %746 = vmatpush1.bf16.msra.mxu0 %v603
        %747 = vmatprep.subr.bf16.mxu0 %v607
        %748 = vmatpush1.bf16.msra.mxu0 %v606
        %749 = vmatprep.subr.bf16.mxu0 %v610
        %750 = vmatpush1.bf16.msra.mxu0 %v609
        %751 = vmatprep.subr.bf16.mxu0 %v613
        %752 = vmatpush1.bf16.msra.mxu0 %v612
        %753 = vmatprep.subr.bf16.mxu0 %v616
        %754 = vmatpush1.bf16.msra.mxu0 %v615
        %755 = vmatprep.subr.bf16.mxu0 %v619
        %756 = vmatpush1.bf16.msra.mxu0 %v618
        %757 = vmatprep.subr.bf16.mxu0 %v622
        %758 = vmatpush1.bf16.msra.mxu0 %v621
        %759 = vmatprep.subr.bf16.mxu0 %v625
        %760 = vmatpush1.bf16.msra.mxu0 %v624
        %761 = vmatprep.subr.bf16.mxu0 %v628
        %762 = vmatpush1.bf16.msra.mxu0 %v627
        %763 = vmatprep.subr.bf16.mxu0 %v631
        %764 = vmatpush1.bf16.msra.mxu0 %v630
        %765 = vmatprep.subr.bf16.mxu0 %v634
        %766 = vmatpush1.bf16.msra.mxu0 %v633
        %767 = vmatprep.subr.bf16.mxu0 %v637
        %768 = vmatpush1.bf16.msra.mxu0 %v636
        %769 = vmatprep.subr.bf16.mxu0 %v640
        %770 = vmatpush1.bf16.msra.mxu0 %v639
        %771 = vmatprep.subr.bf16.mxu0 %v643
        %772 = vmatpush1.bf16.msra.mxu0 %v642
        %773 = vmatprep.mubr.bf16.mxu0 %v352
        %774 = vmatmul.mubr.bf16.gmra.mrb[0].mxu0 %v351
        %v775 = vpop.f32.mrb[0].mxu0
        %v776 = vadd.f32 %v329, %v775
        %v777 = vpop.f32.mrb[0].mxu0
        %v778 = vadd.f32 %v333, %v777
        %v779 = vpop.f32.mrb[0].mxu0
        %v780 = vadd.f32 %v329, %v779
        %v781 = vpop.f32.mrb[0].mxu0
        %v782 = vadd.f32 %v333, %v781
        %783 = vdwg.mxu0
        %784 = vmatprep.subr.bf16.mxu0 %v646
        %785 = vmatpush1.bf16.msra.mxu0 %v645
        %786 = vmatprep.subr.bf16.mxu0 %v649
        %787 = vmatpush1.bf16.msra.mxu0 %v648
        %788 = vmatprep.subr.bf16.mxu0 %v652
        %789 = vmatpush1.bf16.msra.mxu0 %v651
        %790 = vmatprep.subr.bf16.mxu0 %v655
        %791 = vmatpush1.bf16.msra.mxu0 %v654
        %792 = vmatprep.subr.bf16.mxu0 %v658
        %793 = vmatpush1.bf16.msra.mxu0 %v657
        %794 = vmatprep.subr.bf16.mxu0 %v661
        %795 = vmatpush1.bf16.msra.mxu0 %v660
        %796 = vmatprep.subr.bf16.mxu0 %v664
        %797 = vmatpush1.bf16.msra.mxu0 %v663
        %798 = vmatprep.subr.bf16.mxu0 %v667
        %799 = vmatpush1.bf16.msra.mxu0 %v666
        %800 = vmatprep.subr.bf16.mxu0 0
        %801 = vmatpush1.bf16.msra.mxu0 0
        %802 = vmatprep.subr.bf16.mxu0 0
        %803 = vmatpush1.bf16.msra.mxu0 0
        %804 = vmatprep.subr.bf16.mxu0 0
        %805 = vmatpush1.bf16.msra.mxu0 0
        %806 = vmatprep.subr.bf16.mxu0 0
        %807 = vmatpush1.bf16.msra.mxu0 0
        %808 = vmatprep.subr.bf16.mxu0 0
        %809 = vmatpush1.bf16.msra.mxu0 0
        %810 = vmatprep.subr.bf16.mxu0 0
        %811 = vmatpush1.bf16.msra.mxu0 0
        %812 = vmatprep.subr.bf16.mxu0 0
        %813 = vmatpush1.bf16.msra.mxu0 0
        %814 = vmatprep.subr.bf16.mxu0 0
        %815 = vmatpush1.bf16.msra.mxu0 0
        %816 = vmatprep.mubr.bf16.mxu0 0
        %817 = vmatmul.mubr.bf16.gmra.mrb[0].mxu0 %v353
        %v818 = vpop.f32.mrb[0].mxu0
        %v819 = vadd.f32 %v776, %v818
        %v820 = vpop.f32.mrb[0].mxu0
        %v821 = vadd.f32 %v778, %v820
        %v822 = vpop.f32.mrb[0].mxu0
        %v823 = vadd.f32 %v780, %v822
        %v824 = vpop.f32.mrb[0].mxu0
        %v825 = vadd.f32 %v782, %v824
        %826 = vdwg.mxu0
        %827 = vmatprep.subr.bf16.mxu0 0
        %828 = vmatpush1.bf16.msra.mxu0 %v599
        %829 = vmatprep.subr.bf16.mxu0 0
        %830 = vmatpush1.bf16.msra.mxu0 %v602
        %831 = vmatprep.subr.bf16.mxu0 0
        %832 = vmatpush1.bf16.msra.mxu0 %v605
        %833 = vmatprep.subr.bf16.mxu0 0
        %834 = vmatpush1.bf16.msra.mxu0 %v608
        %835 = vmatprep.subr.bf16.mxu0 0
        %836 = vmatpush1.bf16.msra.mxu0 %v611
        %837 = vmatprep.subr.bf16.mxu0 0
        %838 = vmatpush1.bf16.msra.mxu0 %v614
        %839 = vmatprep.subr.bf16.mxu0 0
        %840 = vmatpush1.bf16.msra.mxu0 %v617
        %841 = vmatprep.subr.bf16.mxu0 0
        %842 = vmatpush1.bf16.msra.mxu0 %v620
        %843 = vmatprep.subr.bf16.mxu0 0
        %844 = vmatpush1.bf16.msra.mxu0 %v623
        %845 = vmatprep.subr.bf16.mxu0 0
        %846 = vmatpush1.bf16.msra.mxu0 %v626
        %847 = vmatprep.subr.bf16.mxu0 0
        %848 = vmatpush1.bf16.msra.mxu0 %v629
        %849 = vmatprep.subr.bf16.mxu0 0
        %850 = vmatpush1.bf16.msra.mxu0 %v632
        %851 = vmatprep.subr.bf16.mxu0 0
        %852 = vmatpush1.bf16.msra.mxu0 %v635
        %853 = vmatprep.subr.bf16.mxu0 0
        %854 = vmatpush1.bf16.msra.mxu0 %v638
        %855 = vmatprep.subr.bf16.mxu0 0
        %856 = vmatpush1.bf16.msra.mxu0 %v641
        %857 = vmatprep.subr.bf16.mxu0 0
        %858 = vmatpush1.bf16.msra.mxu0 %v644
        %859 = vmatprep.mubr.bf16.mxu0 %v352
        %860 = vmatmul.mubr.bf16.gmra.mrb[0].mxu0 %v351
        %v861 = vpop.f32.mrb[0].mxu0
        %v862 = vadd.f32 %v337, %v861
        %v863 = vpop.f32.mrb[0].mxu0
        %v864 = vpop.f32.mrb[0].mxu0
        %v865 = vadd.f32 %v337, %v864
        %v866 = vpop.f32.mrb[0].mxu0
        %867 = vdwg.mxu0
        %868 = vmatprep.subr.bf16.mxu0 0
        %869 = vmatpush1.bf16.msra.mxu0 %v647
        %870 = vmatprep.subr.bf16.mxu0 0
        %871 = vmatpush1.bf16.msra.mxu0 %v650
        %872 = vmatprep.subr.bf16.mxu0 0
        %873 = vmatpush1.bf16.msra.mxu0 %v653
        %874 = vmatprep.subr.bf16.mxu0 0
        %875 = vmatpush1.bf16.msra.mxu0 %v656
        %876 = vmatprep.subr.bf16.mxu0 0
        %877 = vmatpush1.bf16.msra.mxu0 %v659
        %878 = vmatprep.subr.bf16.mxu0 0
        %879 = vmatpush1.bf16.msra.mxu0 %v662
        %880 = vmatprep.subr.bf16.mxu0 0
        %881 = vmatpush1.bf16.msra.mxu0 %v665
        %882 = vmatprep.subr.bf16.mxu0 0
        %883 = vmatpush1.bf16.msra.mxu0 %v668
        %884 = vmatprep.subr.bf16.mxu0 0
        %885 = vmatpush1.bf16.msra.mxu0 0
        %886 = vmatprep.subr.bf16.mxu0 0
        %887 = vmatpush1.bf16.msra.mxu0 0
        %888 = vmatprep.subr.bf16.mxu0 0
        %889 = vmatpush1.bf16.msra.mxu0 0
        %890 = vmatprep.subr.bf16.mxu0 0
        %891 = vmatpush1.bf16.msra.mxu0 0
        %892 = vmatprep.subr.bf16.mxu0 0
        %893 = vmatpush1.bf16.msra.mxu0 0
        %894 = vmatprep.subr.bf16.mxu0 0
        %895 = vmatpush1.bf16.msra.mxu0 0
        %896 = vmatprep.subr.bf16.mxu0 0
        %897 = vmatpush1.bf16.msra.mxu0 0
        %898 = vmatprep.subr.bf16.mxu0 0
        %899 = vmatpush1.bf16.msra.mxu0 0
        %900 = vmatprep.mubr.bf16.mxu0 0
        %901 = vmatmul.mubr.bf16.gmra.mrb[0].mxu0 %v353
        %v902 = vpop.f32.mrb[0].mxu0
        %v903 = vadd.f32 %v862, %v902
        %v904 = vpop.f32.mrb[0].mxu0
        %v905 = vpop.f32.mrb[0].mxu0
        %v906 = vadd.f32 %v865, %v905
        %v907 = vpop.f32.mrb[0].mxu0
        %908 = vdwg.mxu0
        %v909 = vmax.f32 %v819, 0.0
        %v910 = vmax.f32 %v821, 0.0
        %v911 = vmax.f32 %v903, 0.0
        %v912 = vmax.f32 %v823, 0.0
        %v913 = vmax.f32 %v825, 0.0
        %v914 = vmax.f32 %v906, 0.0
        %v915 = vpack.c.bf16 %v912, %v909
        %v916 = vpack.c.bf16 %v913, %v910
        %v917 = vpack.c.bf16 %v914, %v911
        %s918 = sadd.s32 %s222, 1
        %s919 = smul.u32 %s918, 144
        %s920 = smul.addr %s919, 4
        %s921 = scalar_lea.vmem [#allocation4], %s920
        %v922 = vld [vmem:[%s921] sm:$0xff]
        %v923 = vld [vmem:[%s921 + $0x8] sm:$0xf]
        %v924 = vld [vmem:[%s921 + $0xc] sm:$0xff]
        %v925 = vld [vmem:[%s921 + $0x14] sm:$0xf]
        %v926 = vld [vmem:[%s921 + $0x18] sm:$0xff]
        %v927 = vld [vmem:[%s921 + $0x20] sm:$0xf]
        %v928 = vld [vmem:[%s921 + $0x24] sm:$0xff]
        %v929 = vld [vmem:[%s921 + $0x2c] sm:$0xf]
        %v930 = vld [vmem:[%s921 + $0x30] sm:$0xff]
        %v931 = vld [vmem:[%s921 + $0x38] sm:$0xf]
        %v932 = vld [vmem:[%s921 + $0x3c] sm:$0xff]
        %v933 = vld [vmem:[%s921 + $0x44] sm:$0xf]
        %v934 = vld [vmem:[%s921 + $0x48] sm:$0xff]
        %v935 = vld [vmem:[%s921 + $0x50] sm:$0xf]
        %v936 = vld [vmem:[%s921 + $0x54] sm:$0xff]
        %v937 = vld [vmem:[%s921 + $0x5c] sm:$0xf]
        %v938 = vld [vmem:[%s921 + $0x60] sm:$0xff]
        %v939 = vld [vmem:[%s921 + $0x68] sm:$0xf]
        %v940 = vld [vmem:[%s921 + $0x6c] sm:$0xff]
        %v941 = vld [vmem:[%s921 + $0x74] sm:$0xf]
        %v942 = vld [vmem:[%s921 + $0x78] sm:$0xff]
        %v943 = vld [vmem:[%s921 + $0x80] sm:$0xf]
        %v944 = vld [vmem:[%s921 + $0x84] sm:$0xff]
        %v945 = vld [vmem:[%s921 + $0x8c] sm:$0xf]
        %v946 = vld [vmem:[%s921 + $0x90] sm:$0xff]
        %v947 = vld [vmem:[%s921 + $0x98] sm:$0xf]
        %v948 = vld [vmem:[%s921 + $0x9c] sm:$0xff]
        %v949 = vld [vmem:[%s921 + $0xa4] sm:$0xf]
        %v950 = vld [vmem:[%s921 + $0xa8] sm:$0xff]
        %v951 = vld [vmem:[%s921 + $0xb0] sm:$0xf]
        %v952 = vld [vmem:[%s921 + $0xb4] sm:$0xff]
        %v953 = vld [vmem:[%s921 + $0xbc] sm:$0xf]
        %v954 = vld [vmem:[%s921 + $0xc0] sm:$0xff]
        %v955 = vld [vmem:[%s921 + $0xc8] sm:$0xf]
        %v956 = vld [vmem:[%s921 + $0xcc] sm:$0xff]
        %v957 = vld [vmem:[%s921 + $0xd4] sm:$0xf]
        %v958 = vld [vmem:[%s921 + $0xd8] sm:$0xff]
        %v959 = vld [vmem:[%s921 + $0xe0] sm:$0xf]
        %v960 = vld [vmem:[%s921 + $0xe4] sm:$0xff]
        %v961 = vld [vmem:[%s921 + $0xec] sm:$0xf]
        %v962 = vld [vmem:[%s921 + $0xf0] sm:$0xff]
        %v963 = vld [vmem:[%s921 + $0xf8] sm:$0xf]
        %v964 = vld [vmem:[%s921 + $0xfc] sm:$0xff]
        %v965 = vld [vmem:[%s921 + $0x104] sm:$0xf]
        %v966 = vld [vmem:[%s921 + $0x108] sm:$0xff]
        %v967 = vld [vmem:[%s921 + $0x110] sm:$0xf]
        %v968 = vld [vmem:[%s921 + $0x114] sm:$0xff]
        %v969 = vld [vmem:[%s921 + $0x11c] sm:$0xf]
        %v970 = vld [vmem:[%s921 + $0x120] sm:$0xff]
        %v971 = vld [vmem:[%s921 + $0x128] sm:$0xf]
        %v972 = vld [vmem:[%s921 + $0x12c] sm:$0xff]
        %v973 = vld [vmem:[%s921 + $0x134] sm:$0xf]
        %v974 = vld [vmem:[%s921 + $0x138] sm:$0xff]
        %v975 = vld [vmem:[%s921 + $0x140] sm:$0xf]
        %v976 = vld [vmem:[%s921 + $0x144] sm:$0xff]
        %v977 = vld [vmem:[%s921 + $0x14c] sm:$0xf]
        %v978 = vld [vmem:[%s921 + $0x150] sm:$0xff]
        %v979 = vld [vmem:[%s921 + $0x158] sm:$0xf]
        %v980 = vld [vmem:[%s921 + $0x15c] sm:$0xff]
        %v981 = vld [vmem:[%s921 + $0x164] sm:$0xf]
        %v982 = vld [vmem:[%s921 + $0x168] sm:$0xff]
        %v983 = vld [vmem:[%s921 + $0x170] sm:$0xf]
        %v984 = vld [vmem:[%s921 + $0x174] sm:$0xff]
        %v985 = vld [vmem:[%s921 + $0x17c] sm:$0xf]
        %v986 = vld [vmem:[%s921 + $0x180] sm:$0xff]
        %v987 = vld [vmem:[%s921 + $0x188] sm:$0xf]
        %v988 = vld [vmem:[%s921 + $0x18c] sm:$0xff]
        %v989 = vld [vmem:[%s921 + $0x194] sm:$0xf]
        %v990 = vld [vmem:[%s921 + $0x198] sm:$0xff]
        %v991 = vld [vmem:[%s921 + $0x1a0] sm:$0xf]
        %v992 = vld [vmem:[%s921 + $0x1a4] sm:$0xff]
        %v993 = vld [vmem:[%s921 + $0x1ac] sm:$0xf]
        %v994 = vld [vmem:[%s921 + $0x1b0] sm:$0xff]
        %v995 = vld [vmem:[%s921 + $0x1b8] sm:$0xf]
        %v996 = vld [vmem:[%s921 + $0x1bc] sm:$0xff]
        %v997 = vld [vmem:[%s921 + $0x1c4] sm:$0xf]
        %v998 = vld [vmem:[%s921 + $0x1c8] sm:$0xff]
        %v999 = vld [vmem:[%s921 + $0x1d0] sm:$0xf]
        %v1000 = vld [vmem:[%s921 + $0x1d4] sm:$0xff]
        %v1001 = vld [vmem:[%s921 + $0x1dc] sm:$0xf]
        %v1002 = vld [vmem:[%s921 + $0x1e0] sm:$0xff]
        %v1003 = vld [vmem:[%s921 + $0x1e8] sm:$0xf]
        %v1004 = vld [vmem:[%s921 + $0x1ec] sm:$0xff]
        %v1005 = vld [vmem:[%s921 + $0x1f4] sm:$0xf]
        %v1006 = vld [vmem:[%s921 + $0x1f8] sm:$0xff]
        %v1007 = vld [vmem:[%s921 + $0x200] sm:$0xf]
        %v1008 = vld [vmem:[%s921 + $0x204] sm:$0xff]
        %v1009 = vld [vmem:[%s921 + $0x20c] sm:$0xf]
        %v1010 = vld [vmem:[%s921 + $0x210] sm:$0xff]
        %v1011 = vld [vmem:[%s921 + $0x218] sm:$0xf]
        %v1012 = vld [vmem:[%s921 + $0x21c] sm:$0xff]
        %v1013 = vld [vmem:[%s921 + $0x224] sm:$0xf]
        %v1014 = vld [vmem:[%s921 + $0x228] sm:$0xff]
        %v1015 = vld [vmem:[%s921 + $0x230] sm:$0xf]
        %v1016 = vld [vmem:[%s921 + $0x234] sm:$0xff]
        %v1017 = vld [vmem:[%s921 + $0x23c] sm:$0xf]
        %s1018 = smul.u32 %s918, 3
        %s1019 = scalar_lea.vmem [#allocation6], %s1018
        %v1020 = vld [vmem:[%s1019] sm:$0x7]
        %v1022 = vlaneseq
        %v1023 = vshrl.u32 %v1022, 7
        %v1024 = vsub.s32 0, %v1023
        %v1025 = vrot.slane %v1020, %v1024
        %v1026 = vlaneseq
        %v1027 = vshrl.u32 %v1026, 7
        %v1028 = vsub.s32 1, %v1027
        %v1029 = vrot.slane %v1020, %v1028
        %v1030 = vlaneseq
        %v1031 = vshrl.u32 %v1030, 7
        %v1032 = vsub.s32 2, %v1031
        %v1033 = vrot.slane %v1020, %v1032
        %v1133 = vunpack.c.l.b16 %v922
        %v1134 = vunpack.c.h.b16 %v922
        %v1135 = vunpack.c.l.b16 %v923
        %v1136 = vunpack.c.l.b16 %v924
        %v1137 = vunpack.c.h.b16 %v924
        %v1138 = vunpack.c.l.b16 %v925
        %v1139 = vunpack.c.l.b16 %v926
        %v1140 = vunpack.c.h.b16 %v926
        %v1141 = vunpack.c.l.b16 %v927
        %v1142 = vunpack.c.l.b16 %v928
        %v1143 = vunpack.c.h.b16 %v928
        %v1144 = vunpack.c.l.b16 %v929
        %v1145 = vunpack.c.l.b16 %v930
        %v1146 = vunpack.c.h.b16 %v930
        %v1147 = vunpack.c.l.b16 %v931
        %v1148 = vunpack.c.l.b16 %v932
        %v1149 = vunpack.c.h.b16 %v932
        %v1150 = vunpack.c.l.b16 %v933
        %v1151 = vunpack.c.l.b16 %v934
        %v1152 = vunpack.c.h.b16 %v934
        %v1153 = vunpack.c.l.b16 %v935
        %v1154 = vunpack.c.l.b16 %v936
        %v1155 = vunpack.c.h.b16 %v936
        %v1156 = vunpack.c.l.b16 %v937
        %v1157 = vunpack.c.l.b16 %v938
        %v1158 = vunpack.c.h.b16 %v938
        %v1159 = vunpack.c.l.b16 %v939
        %v1160 = vunpack.c.l.b16 %v940
        %v1161 = vunpack.c.h.b16 %v940
        %v1162 = vunpack.c.l.b16 %v941
        %v1163 = vunpack.c.l.b16 %v942
        %v1164 = vunpack.c.h.b16 %v942
        %v1165 = vunpack.c.l.b16 %v943
        %v1166 = vunpack.c.l.b16 %v944
        %v1167 = vunpack.c.h.b16 %v944
        %v1168 = vunpack.c.l.b16 %v945
        %v1169 = vunpack.c.l.b16 %v946
        %v1170 = vunpack.c.h.b16 %v946
        %v1171 = vunpack.c.l.b16 %v947
        %v1172 = vunpack.c.l.b16 %v948
        %v1173 = vunpack.c.h.b16 %v948
        %v1174 = vunpack.c.l.b16 %v949
        %v1175 = vunpack.c.l.b16 %v950
        %v1176 = vunpack.c.h.b16 %v950
        %v1177 = vunpack.c.l.b16 %v951
        %v1178 = vunpack.c.l.b16 %v952
        %v1179 = vunpack.c.h.b16 %v952
        %v1180 = vunpack.c.l.b16 %v953
        %v1181 = vunpack.c.l.b16 %v954
        %v1182 = vunpack.c.h.b16 %v954
        %v1183 = vunpack.c.l.b16 %v955
        %v1184 = vunpack.c.l.b16 %v956
        %v1185 = vunpack.c.h.b16 %v956
        %v1186 = vunpack.c.l.b16 %v957
        %v1187 = vunpack.c.l.b16 %v958
        %v1188 = vunpack.c.h.b16 %v958
        %v1189 = vunpack.c.l.b16 %v959
        %v1190 = vunpack.c.l.b16 %v960
        %v1191 = vunpack.c.h.b16 %v960
        %v1192 = vunpack.c.l.b16 %v961
        %v1193 = vunpack.c.l.b16 %v962
        %v1194 = vunpack.c.h.b16 %v962
        %v1195 = vunpack.c.l.b16 %v963
        %v1196 = vunpack.c.l.b16 %v964
        %v1197 = vunpack.c.h.b16 %v964
        %v1198 = vunpack.c.l.b16 %v965
        %v1199 = vunpack.c.l.b16 %v966
        %v1200 = vunpack.c.h.b16 %v966
        %v1201 = vunpack.c.l.b16 %v967
        %v1202 = vunpack.c.l.b16 %v968
        %v1203 = vunpack.c.h.b16 %v968
        %v1204 = vunpack.c.l.b16 %v969
        %v1205 = vunpack.c.l.b16 %v970
        %v1206 = vunpack.c.h.b16 %v970
        %v1207 = vunpack.c.l.b16 %v971
        %v1208 = vunpack.c.l.b16 %v972
        %v1209 = vunpack.c.h.b16 %v972
        %v1210 = vunpack.c.l.b16 %v973
        %v1211 = vunpack.c.l.b16 %v974
        %v1212 = vunpack.c.h.b16 %v974
        %v1213 = vunpack.c.l.b16 %v975
        %v1214 = vunpack.c.l.b16 %v976
        %v1215 = vunpack.c.h.b16 %v976
        %v1216 = vunpack.c.l.b16 %v977
        %v1217 = vunpack.c.l.b16 %v978
        %v1218 = vunpack.c.h.b16 %v978
        %v1219 = vunpack.c.l.b16 %v979
        %v1220 = vunpack.c.l.b16 %v980
        %v1221 = vunpack.c.h.b16 %v980
        %v1222 = vunpack.c.l.b16 %v981
        %v1223 = vunpack.c.l.b16 %v982
        %v1224 = vunpack.c.h.b16 %v982
        %v1225 = vunpack.c.l.b16 %v983
        %v1226 = vunpack.c.l.b16 %v984
        %v1227 = vunpack.c.h.b16 %v984
        %v1228 = vunpack.c.l.b16 %v985
        %v1229 = vunpack.c.l.b16 %v986
        %v1230 = vunpack.c.h.b16 %v986
        %v1231 = vunpack.c.l.b16 %v987
        %v1232 = vunpack.c.l.b16 %v988
        %v1233 = vunpack.c.h.b16 %v988
        %v1234 = vunpack.c.l.b16 %v989
        %v1235 = vunpack.c.l.b16 %v990
        %v1236 = vunpack.c.h.b16 %v990
        %v1237 = vunpack.c.l.b16 %v991
        %v1238 = vunpack.c.l.b16 %v992
        %v1239 = vunpack.c.h.b16 %v992
        %v1240 = vunpack.c.l.b16 %v993
        %v1241 = vunpack.c.l.b16 %v994
        %v1242 = vunpack.c.h.b16 %v994
        %v1243 = vunpack.c.l.b16 %v995
        %v1244 = vunpack.c.l.b16 %v996
        %v1245 = vunpack.c.h.b16 %v996
        %v1246 = vunpack.c.l.b16 %v997
        %v1247 = vunpack.c.l.b16 %v998
        %v1248 = vunpack.c.h.b16 %v998
        %v1249 = vunpack.c.l.b16 %v999
        %v1250 = vunpack.c.l.b16 %v1000
        %v1251 = vunpack.c.h.b16 %v1000
        %v1252 = vunpack.c.l.b16 %v1001
        %v1253 = vunpack.c.l.b16 %v1002
        %v1254 = vunpack.c.h.b16 %v1002
        %v1255 = vunpack.c.l.b16 %v1003
        %v1256 = vunpack.c.l.b16 %v1004
        %v1257 = vunpack.c.h.b16 %v1004
        %v1258 = vunpack.c.l.b16 %v1005
        %v1259 = vunpack.c.l.b16 %v1006
        %v1260 = vunpack.c.h.b16 %v1006
        %v1261 = vunpack.c.l.b16 %v1007
        %v1262 = vunpack.c.l.b16 %v1008
        %v1263 = vunpack.c.h.b16 %v1008
        %v1264 = vunpack.c.l.b16 %v1009
        %v1265 = vunpack.c.l.b16 %v1010
        %v1266 = vunpack.c.h.b16 %v1010
        %v1267 = vunpack.c.l.b16 %v1011
        %v1268 = vunpack.c.l.b16 %v1012
        %v1269 = vunpack.c.h.b16 %v1012
        %v1270 = vunpack.c.l.b16 %v1013
        %v1271 = vunpack.c.l.b16 %v1014
        %v1272 = vunpack.c.h.b16 %v1014
        %v1273 = vunpack.c.l.b16 %v1015
        %v1274 = vunpack.c.l.b16 %v1016
        %v1275 = vunpack.c.h.b16 %v1016
        %v1276 = vunpack.c.l.b16 %v1017
        %v1277 = vpack.c.b16 %v1136, %v1133
        %v1278 = vpack.c.b16 %v1137, %v1134
        %v1279 = vpack.c.b16 %v1138, %v1135
        %v1280 = vpack.c.b16 %v1142, %v1139
        %v1281 = vpack.c.b16 %v1143, %v1140
        %v1282 = vpack.c.b16 %v1144, %v1141
        %v1283 = vpack.c.b16 %v1148, %v1145
        %v1284 = vpack.c.b16 %v1149, %v1146
        %v1285 = vpack.c.b16 %v1150, %v1147
        %v1286 = vpack.c.b16 %v1154, %v1151
        %v1287 = vpack.c.b16 %v1155, %v1152
        %v1288 = vpack.c.b16 %v1156, %v1153
        %v1289 = vpack.c.b16 %v1160, %v1157
        %v1290 = vpack.c.b16 %v1161, %v1158
        %v1291 = vpack.c.b16 %v1162, %v1159
        %v1292 = vpack.c.b16 %v1166, %v1163
        %v1293 = vpack.c.b16 %v1167, %v1164
        %v1294 = vpack.c.b16 %v1168, %v1165
        %v1295 = vpack.c.b16 %v1172, %v1169
        %v1296 = vpack.c.b16 %v1173, %v1170
        %v1297 = vpack.c.b16 %v1174, %v1171
        %v1298 = vpack.c.b16 %v1178, %v1175
        %v1299 = vpack.c.b16 %v1179, %v1176
        %v1300 = vpack.c.b16 %v1180, %v1177
        %v1301 = vpack.c.b16 %v1184, %v1181
        %v1302 = vpack.c.b16 %v1185, %v1182
        %v1303 = vpack.c.b16 %v1186, %v1183
        %v1304 = vpack.c.b16 %v1190, %v1187
        %v1305 = vpack.c.b16 %v1191, %v1188
        %v1306 = vpack.c.b16 %v1192, %v1189
        %v1307 = vpack.c.b16 %v1196, %v1193
        %v1308 = vpack.c.b16 %v1197, %v1194
        %v1309 = vpack.c.b16 %v1198, %v1195
        %v1310 = vpack.c.b16 %v1202, %v1199
        %v1311 = vpack.c.b16 %v1203, %v1200
        %v1312 = vpack.c.b16 %v1204, %v1201
        %v1313 = vpack.c.b16 %v1208, %v1205
        %v1314 = vpack.c.b16 %v1209, %v1206
        %v1315 = vpack.c.b16 %v1210, %v1207
        %v1316 = vpack.c.b16 %v1214, %v1211
        %v1317 = vpack.c.b16 %v1215, %v1212
        %v1318 = vpack.c.b16 %v1216, %v1213
        %v1319 = vpack.c.b16 %v1220, %v1217
        %v1320 = vpack.c.b16 %v1221, %v1218
        %v1321 = vpack.c.b16 %v1222, %v1219
        %v1322 = vpack.c.b16 %v1226, %v1223
        %v1323 = vpack.c.b16 %v1227, %v1224
        %v1324 = vpack.c.b16 %v1228, %v1225
        %v1325 = vpack.c.b16 %v1232, %v1229
        %v1326 = vpack.c.b16 %v1233, %v1230
        %v1327 = vpack.c.b16 %v1234, %v1231
        %v1328 = vpack.c.b16 %v1238, %v1235
        %v1329 = vpack.c.b16 %v1239, %v1236
        %v1330 = vpack.c.b16 %v1240, %v1237
        %v1331 = vpack.c.b16 %v1244, %v1241
        %v1332 = vpack.c.b16 %v1245, %v1242
        %v1333 = vpack.c.b16 %v1246, %v1243
        %v1334 = vpack.c.b16 %v1250, %v1247
        %v1335 = vpack.c.b16 %v1251, %v1248
        %v1336 = vpack.c.b16 %v1252, %v1249
        %v1337 = vpack.c.b16 %v1256, %v1253
        %v1338 = vpack.c.b16 %v1257, %v1254
        %v1339 = vpack.c.b16 %v1258, %v1255
        %v1340 = vpack.c.b16 %v1262, %v1259
        %v1341 = vpack.c.b16 %v1263, %v1260
        %v1342 = vpack.c.b16 %v1264, %v1261
        %v1343 = vpack.c.b16 %v1268, %v1265
        %v1344 = vpack.c.b16 %v1269, %v1266
        %v1345 = vpack.c.b16 %v1270, %v1267
        %v1346 = vpack.c.b16 %v1274, %v1271
        %v1347 = vpack.c.b16 %v1275, %v1272
        %v1348 = vpack.c.b16 %v1276, %v1273
        %1421 = vmatprep.subr.bf16.mxu0 %v1278
        %1422 = vmatpush1.bf16.msra.mxu0 %v1277
        %1423 = vmatprep.subr.bf16.mxu0 %v1281
        %1424 = vmatpush1.bf16.msra.mxu0 %v1280
        %1425 = vmatprep.subr.bf16.mxu0 %v1284
        %1426 = vmatpush1.bf16.msra.mxu0 %v1283
        %1427 = vmatprep.subr.bf16.mxu0 %v1287
        %1428 = vmatpush1.bf16.msra.mxu0 %v1286
        %1429 = vmatprep.subr.bf16.mxu0 %v1290
        %1430 = vmatpush1.bf16.msra.mxu0 %v1289
        %1431 = vmatprep.subr.bf16.mxu0 %v1293
        %1432 = vmatpush1.bf16.msra.mxu0 %v1292
        %1433 = vmatprep.subr.bf16.mxu0 %v1296
        %1434 = vmatpush1.bf16.msra.mxu0 %v1295
        %1435 = vmatprep.subr.bf16.mxu0 %v1299
        %1436 = vmatpush1.bf16.msra.mxu0 %v1298
        %1437 = vmatprep.subr.bf16.mxu0 %v1302
        %1438 = vmatpush1.bf16.msra.mxu0 %v1301
        %1439 = vmatprep.subr.bf16.mxu0 %v1305
        %1440 = vmatpush1.bf16.msra.mxu0 %v1304
        %1441 = vmatprep.subr.bf16.mxu0 %v1308
        %1442 = vmatpush1.bf16.msra.mxu0 %v1307
        %1443 = vmatprep.subr.bf16.mxu0 %v1311
        %1444 = vmatpush1.bf16.msra.mxu0 %v1310
        %1445 = vmatprep.subr.bf16.mxu0 %v1314
        %1446 = vmatpush1.bf16.msra.mxu0 %v1313
        %1447 = vmatprep.subr.bf16.mxu0 %v1317
        %1448 = vmatpush1.bf16.msra.mxu0 %v1316
        %1449 = vmatprep.subr.bf16.mxu0 %v1320
        %1450 = vmatpush1.bf16.msra.mxu0 %v1319
        %1451 = vmatprep.subr.bf16.mxu0 %v1323
        %1452 = vmatpush1.bf16.msra.mxu0 %v1322
        %1453 = vmatprep.mubr.bf16.mxu0 %v916
        %1454 = vmatmul.mubr.bf16.gmra.mrb[0].mxu0 %v915
        %v1455 = vpop.f32.mrb[0].mxu0
        %v1456 = vadd.f32 %v1025, %v1455
        %v1457 = vpop.f32.mrb[0].mxu0
        %v1458 = vadd.f32 %v1029, %v1457
        %v1459 = vpop.f32.mrb[0].mxu0
        %v1460 = vadd.f32 %v1025, %v1459
        %v1461 = vpop.f32.mrb[0].mxu0
        %v1462 = vadd.f32 %v1029, %v1461
        %1463 = vdwg.mxu0
        %1464 = vmatprep.subr.bf16.mxu0 %v1326
        %1465 = vmatpush1.bf16.msra.mxu0 %v1325
        %1466 = vmatprep.subr.bf16.mxu0 %v1329
        %1467 = vmatpush1.bf16.msra.mxu0 %v1328
        %1468 = vmatprep.subr.bf16.mxu0 %v1332
        %1469 = vmatpush1.bf16.msra.mxu0 %v1331
        %1470 = vmatprep.subr.bf16.mxu0 %v1335
        %1471 = vmatpush1.bf16.msra.mxu0 %v1334
        %1472 = vmatprep.subr.bf16.mxu0 %v1338
        %1473 = vmatpush1.bf16.msra.mxu0 %v1337
        %1474 = vmatprep.subr.bf16.mxu0 %v1341
        %1475 = vmatpush1.bf16.msra.mxu0 %v1340
        %1476 = vmatprep.subr.bf16.mxu0 %v1344
        %1477 = vmatpush1.bf16.msra.mxu0 %v1343
        %1478 = vmatprep.subr.bf16.mxu0 %v1347
        %1479 = vmatpush1.bf16.msra.mxu0 %v1346
        %1480 = vmatprep.subr.bf16.mxu0 0
        %1481 = vmatpush1.bf16.msra.mxu0 0
        %1482 = vmatprep.subr.bf16.mxu0 0
        %1483 = vmatpush1.bf16.msra.mxu0 0
        %1484 = vmatprep.subr.bf16.mxu0 0
        %1485 = vmatpush1.bf16.msra.mxu0 0
        %1486 = vmatprep.subr.bf16.mxu0 0
        %1487 = vmatpush1.bf16.msra.mxu0 0
        %1488 = vmatprep.subr.bf16.mxu0 0
        %1489 = vmatpush1.bf16.msra.mxu0 0
        %1490 = vmatprep.subr.bf16.mxu0 0
        %1491 = vmatpush1.bf16.msra.mxu0 0
        %1492 = vmatprep.subr.bf16.mxu0 0
        %1493 = vmatpush1.bf16.msra.mxu0 0
        %1494 = vmatprep.subr.bf16.mxu0 0
        %1495 = vmatpush1.bf16.msra.mxu0 0
        %1496 = vmatprep.mubr.bf16.mxu0 0
        %1497 = vmatmul.mubr.bf16.gmra.mrb[0].mxu0 %v917
        %v1498 = vpop.f32.mrb[0].mxu0
        %v1499 = vadd.f32 %v1456, %v1498
        %v1500 = vpop.f32.mrb[0].mxu0
        %v1501 = vadd.f32 %v1458, %v1500
        %v1502 = vpop.f32.mrb[0].mxu0
        %v1503 = vadd.f32 %v1460, %v1502
        %v1504 = vpop.f32.mrb[0].mxu0
        %v1505 = vadd.f32 %v1462, %v1504
        %1506 = vdwg.mxu0
        %1507 = vmatprep.subr.bf16.mxu0 0
        %1508 = vmatpush1.bf16.msra.mxu0 %v1279
        %1509 = vmatprep.subr.bf16.mxu0 0
        %1510 = vmatpush1.bf16.msra.mxu0 %v1282
        %1511 = vmatprep.subr.bf16.mxu0 0
        %1512 = vmatpush1.bf16.msra.mxu0 %v1285
        %1513 = vmatprep.subr.bf16.mxu0 0
        %1514 = vmatpush1.bf16.msra.mxu0 %v1288
        %1515 = vmatprep.subr.bf16.mxu0 0
        %1516 = vmatpush1.bf16.msra.mxu0 %v1291
        %1517 = vmatprep.subr.bf16.mxu0 0
        %1518 = vmatpush1.bf16.msra.mxu0 %v1294
        %1519 = vmatprep.subr.bf16.mxu0 0
        %1520 = vmatpush1.bf16.msra.mxu0 %v1297
        %1521 = vmatprep.subr.bf16.mxu0 0
        %1522 = vmatpush1.bf16.msra.mxu0 %v1300
        %1523 = vmatprep.subr.bf16.mxu0 0
        %1524 = vmatpush1.bf16.msra.mxu0 %v1303
        %1525 = vmatprep.subr.bf16.mxu0 0
        %1526 = vmatpush1.bf16.msra.mxu0 %v1306
        %1527 = vmatprep.subr.bf16.mxu0 0
        %1528 = vmatpush1.bf16.msra.mxu0 %v1309
        %1529 = vmatprep.subr.bf16.mxu0 0
        %1530 = vmatpush1.bf16.msra.mxu0 %v1312
        %1531 = vmatprep.subr.bf16.mxu0 0
        %1532 = vmatpush1.bf16.msra.mxu0 %v1315
        %1533 = vmatprep.subr.bf16.mxu0 0
        %1534 = vmatpush1.bf16.msra.mxu0 %v1318
        %1535 = vmatprep.subr.bf16.mxu0 0
        %1536 = vmatpush1.bf16.msra.mxu0 %v1321
        %1537 = vmatprep.subr.bf16.mxu0 0
        %1538 = vmatpush1.bf16.msra.mxu0 %v1324
        %1539 = vmatprep.mubr.bf16.mxu0 %v916
        %1540 = vmatmul.mubr.bf16.gmra.mrb[0].mxu0 %v915
        %v1541 = vpop.f32.mrb[0].mxu0
        %v1542 = vadd.f32 %v1033, %v1541
        %v1543 = vpop.f32.mrb[0].mxu0
        %v1544 = vpop.f32.mrb[0].mxu0
        %v1545 = vadd.f32 %v1033, %v1544
        %v1546 = vpop.f32.mrb[0].mxu0
        %1547 = vdwg.mxu0
        %1548 = vmatprep.subr.bf16.mxu0 0
        %1549 = vmatpush1.bf16.msra.mxu0 %v1327
        %1550 = vmatprep.subr.bf16.mxu0 0
        %1551 = vmatpush1.bf16.msra.mxu0 %v1330
        %1552 = vmatprep.subr.bf16.mxu0 0
        %1553 = vmatpush1.bf16.msra.mxu0 %v1333
        %1554 = vmatprep.subr.bf16.mxu0 0
        %1555 = vmatpush1.bf16.msra.mxu0 %v1336
        %1556 = vmatprep.subr.bf16.mxu0 0
        %1557 = vmatpush1.bf16.msra.mxu0 %v1339
        %1558 = vmatprep.subr.bf16.mxu0 0
        %1559 = vmatpush1.bf16.msra.mxu0 %v1342
        %1560 = vmatprep.subr.bf16.mxu0 0
        %1561 = vmatpush1.bf16.msra.mxu0 %v1345
        %1562 = vmatprep.subr.bf16.mxu0 0
        %1563 = vmatpush1.bf16.msra.mxu0 %v1348
        %1564 = vmatprep.subr.bf16.mxu0 0
        %1565 = vmatpush1.bf16.msra.mxu0 0
        %1566 = vmatprep.subr.bf16.mxu0 0
        %1567 = vmatpush1.bf16.msra.mxu0 0
        %1568 = vmatprep.subr.bf16.mxu0 0
        %1569 = vmatpush1.bf16.msra.mxu0 0
        %1570 = vmatprep.subr.bf16.mxu0 0
        %1571 = vmatpush1.bf16.msra.mxu0 0
        %1572 = vmatprep.subr.bf16.mxu0 0
        %1573 = vmatpush1.bf16.msra.mxu0 0
        %1574 = vmatprep.subr.bf16.mxu0 0
        %1575 = vmatpush1.bf16.msra.mxu0 0
        %1576 = vmatprep.subr.bf16.mxu0 0
        %1577 = vmatpush1.bf16.msra.mxu0 0
        %1578 = vmatprep.subr.bf16.mxu0 0
        %1579 = vmatpush1.bf16.msra.mxu0 0
        %1580 = vmatprep.mubr.bf16.mxu0 0
        %1581 = vmatmul.mubr.bf16.gmra.mrb[0].mxu0 %v917
        %v1582 = vpop.f32.mrb[0].mxu0
        %v1583 = vadd.f32 %v1542, %v1582
        %v1584 = vpop.f32.mrb[0].mxu0
        %v1585 = vpop.f32.mrb[0].mxu0
        %v1586 = vadd.f32 %v1545, %v1585
        %v1587 = vpop.f32.mrb[0].mxu0
        %1588 = vdwg.mxu0
        %v1589 = vmax.f32 %v1499, 0.0
        %v1590 = vmax.f32 %v1501, 0.0
        %v1591 = vmax.f32 %v1583, 0.0
        %v1592 = vmax.f32 %v1503, 0.0
        %v1593 = vmax.f32 %v1505, 0.0
        %v1594 = vmax.f32 %v1586, 0.0
        %v1595 = vpack.c.bf16 %v1592, %v1589
        %v1596 = vpack.c.bf16 %v1593, %v1590
        %v1597 = vpack.c.bf16 %v1594, %v1591
        %s1598 = sadd.s32 %s222, 2
        %s1599 = smul.u32 %s1598, 144
        %s1600 = smul.addr %s1599, 4
        %s1601 = scalar_lea.vmem [#allocation4], %s1600
        %v1602 = vld [vmem:[%s1601] sm:$0xff]
        %v1603 = vld [vmem:[%s1601 + $0x8] sm:$0xf]
        %v1604 = vld [vmem:[%s1601 + $0xc] sm:$0xff]
        %v1605 = vld [vmem:[%s1601 + $0x14] sm:$0xf]
        %v1606 = vld [vmem:[%s1601 + $0x18] sm:$0xff]
        %v1607 = vld [vmem:[%s1601 + $0x20] sm:$0xf]
        %v1608 = vld [vmem:[%s1601 + $0x24] sm:$0xff]
        %v1609 = vld [vmem:[%s1601 + $0x2c] sm:$0xf]
        %v1610 = vld [vmem:[%s1601 + $0x30] sm:$0xff]
        %v1611 = vld [vmem:[%s1601 + $0x38] sm:$0xf]
        %v1612 = vld [vmem:[%s1601 + $0x3c] sm:$0xff]
        %v1613 = vld [vmem:[%s1601 + $0x44] sm:$0xf]
        %v1614 = vld [vmem:[%s1601 + $0x48] sm:$0xff]
        %v1615 = vld [vmem:[%s1601 + $0x50] sm:$0xf]
        %v1616 = vld [vmem:[%s1601 + $0x54] sm:$0xff]
        %v1617 = vld [vmem:[%s1601 + $0x5c] sm:$0xf]
        %v1618 = vld [vmem:[%s1601 + $0x60] sm:$0xff]
        %v1619 = vld [vmem:[%s1601 + $0x68] sm:$0xf]
        %v1620 = vld [vmem:[%s1601 + $0x6c] sm:$0xff]
        %v1621 = vld [vmem:[%s1601 + $0x74] sm:$0xf]
        %v1622 = vld [vmem:[%s1601 + $0x78] sm:$0xff]
        %v1623 = vld [vmem:[%s1601 + $0x80] sm:$0xf]
        %v1624 = vld [vmem:[%s1601 + $0x84] sm:$0xff]
        %v1625 = vld [vmem:[%s1601 + $0x8c] sm:$0xf]
        %v1626 = vld [vmem:[%s1601 + $0x90] sm:$0xff]
        %v1627 = vld [vmem:[%s1601 + $0x98] sm:$0xf]
        %v1628 = vld [vmem:[%s1601 + $0x9c] sm:$0xff]
        %v1629 = vld [vmem:[%s1601 + $0xa4] sm:$0xf]
        %v1630 = vld [vmem:[%s1601 + $0xa8] sm:$0xff]
        %v1631 = vld [vmem:[%s1601 + $0xb0] sm:$0xf]
        %v1632 = vld [vmem:[%s1601 + $0xb4] sm:$0xff]
        %v1633 = vld [vmem:[%s1601 + $0xbc] sm:$0xf]
        %v1634 = vld [vmem:[%s1601 + $0xc0] sm:$0xff]
        %v1635 = vld [vmem:[%s1601 + $0xc8] sm:$0xf]
        %v1636 = vld [vmem:[%s1601 + $0xcc] sm:$0xff]
        %v1637 = vld [vmem:[%s1601 + $0xd4] sm:$0xf]
        %v1638 = vld [vmem:[%s1601 + $0xd8] sm:$0xff]
        %v1639 = vld [vmem:[%s1601 + $0xe0] sm:$0xf]
        %v1640 = vld [vmem:[%s1601 + $0xe4] sm:$0xff]
        %v1641 = vld [vmem:[%s1601 + $0xec] sm:$0xf]
        %v1642 = vld [vmem:[%s1601 + $0xf0] sm:$0xff]
        %v1643 = vld [vmem:[%s1601 + $0xf8] sm:$0xf]
        %v1644 = vld [vmem:[%s1601 + $0xfc] sm:$0xff]
        %v1645 = vld [vmem:[%s1601 + $0x104] sm:$0xf]
        %v1646 = vld [vmem:[%s1601 + $0x108] sm:$0xff]
        %v1647 = vld [vmem:[%s1601 + $0x110] sm:$0xf]
        %v1648 = vld [vmem:[%s1601 + $0x114] sm:$0xff]
        %v1649 = vld [vmem:[%s1601 + $0x11c] sm:$0xf]
        %v1650 = vld [vmem:[%s1601 + $0x120] sm:$0xff]
        %v1651 = vld [vmem:[%s1601 + $0x128] sm:$0xf]
        %v1652 = vld [vmem:[%s1601 + $0x12c] sm:$0xff]
        %v1653 = vld [vmem:[%s1601 + $0x134] sm:$0xf]
        %v1654 = vld [vmem:[%s1601 + $0x138] sm:$0xff]
        %v1655 = vld [vmem:[%s1601 + $0x140] sm:$0xf]
        %v1656 = vld [vmem:[%s1601 + $0x144] sm:$0xff]
        %v1657 = vld [vmem:[%s1601 + $0x14c] sm:$0xf]
        %v1658 = vld [vmem:[%s1601 + $0x150] sm:$0xff]
        %v1659 = vld [vmem:[%s1601 + $0x158] sm:$0xf]
        %v1660 = vld [vmem:[%s1601 + $0x15c] sm:$0xff]
        %v1661 = vld [vmem:[%s1601 + $0x164] sm:$0xf]
        %v1662 = vld [vmem:[%s1601 + $0x168] sm:$0xff]
        %v1663 = vld [vmem:[%s1601 + $0x170] sm:$0xf]
        %v1664 = vld [vmem:[%s1601 + $0x174] sm:$0xff]
        %v1665 = vld [vmem:[%s1601 + $0x17c] sm:$0xf]
        %v1666 = vld [vmem:[%s1601 + $0x180] sm:$0xff]
        %v1667 = vld [vmem:[%s1601 + $0x188] sm:$0xf]
        %v1668 = vld [vmem:[%s1601 + $0x18c] sm:$0xff]
        %v1669 = vld [vmem:[%s1601 + $0x194] sm:$0xf]
        %v1670 = vld [vmem:[%s1601 + $0x198] sm:$0xff]
        %v1671 = vld [vmem:[%s1601 + $0x1a0] sm:$0xf]
        %v1672 = vld [vmem:[%s1601 + $0x1a4] sm:$0xff]
        %v1673 = vld [vmem:[%s1601 + $0x1ac] sm:$0xf]
        %v1674 = vld [vmem:[%s1601 + $0x1b0] sm:$0xff]
        %v1675 = vld [vmem:[%s1601 + $0x1b8] sm:$0xf]
        %v1676 = vld [vmem:[%s1601 + $0x1bc] sm:$0xff]
        %v1677 = vld [vmem:[%s1601 + $0x1c4] sm:$0xf]
        %v1678 = vld [vmem:[%s1601 + $0x1c8] sm:$0xff]
        %v1679 = vld [vmem:[%s1601 + $0x1d0] sm:$0xf]
        %v1680 = vld [vmem:[%s1601 + $0x1d4] sm:$0xff]
        %v1681 = vld [vmem:[%s1601 + $0x1dc] sm:$0xf]
        %v1682 = vld [vmem:[%s1601 + $0x1e0] sm:$0xff]
        %v1683 = vld [vmem:[%s1601 + $0x1e8] sm:$0xf]
        %v1684 = vld [vmem:[%s1601 + $0x1ec] sm:$0xff]
        %v1685 = vld [vmem:[%s1601 + $0x1f4] sm:$0xf]
        %v1686 = vld [vmem:[%s1601 + $0x1f8] sm:$0xff]
        %v1687 = vld [vmem:[%s1601 + $0x200] sm:$0xf]
        %v1688 = vld [vmem:[%s1601 + $0x204] sm:$0xff]
        %v1689 = vld [vmem:[%s1601 + $0x20c] sm:$0xf]
        %v1690 = vld [vmem:[%s1601 + $0x210] sm:$0xff]
        %v1691 = vld [vmem:[%s1601 + $0x218] sm:$0xf]
        %v1692 = vld [vmem:[%s1601 + $0x21c] sm:$0xff]
        %v1693 = vld [vmem:[%s1601 + $0x224] sm:$0xf]
        %v1694 = vld [vmem:[%s1601 + $0x228] sm:$0xff]
        %v1695 = vld [vmem:[%s1601 + $0x230] sm:$0xf]
        %v1696 = vld [vmem:[%s1601 + $0x234] sm:$0xff]
        %v1697 = vld [vmem:[%s1601 + $0x23c] sm:$0xf]
        %s1698 = smul.u32 %s1598, 3
        %s1699 = scalar_lea.vmem [#allocation6], %s1698
        %v1700 = vld [vmem:[%s1699] sm:$0x7]
        %v1702 = vlaneseq
        %v1703 = vshrl.u32 %v1702, 7
        %v1704 = vsub.s32 0, %v1703
        %v1705 = vrot.slane %v1700, %v1704
        %v1706 = vlaneseq
        %v1707 = vshrl.u32 %v1706, 7
        %v1708 = vsub.s32 1, %v1707
        %v1709 = vrot.slane %v1700, %v1708
        %v1710 = vlaneseq
        %v1711 = vshrl.u32 %v1710, 7
        %v1712 = vsub.s32 2, %v1711
        %v1713 = vrot.slane %v1700, %v1712
        %v1813 = vunpack.c.l.b16 %v1602
        %v1814 = vunpack.c.h.b16 %v1602
        %v1815 = vunpack.c.l.b16 %v1603
        %v1816 = vunpack.c.l.b16 %v1604
        %v1817 = vunpack.c.h.b16 %v1604
        %v1818 = vunpack.c.l.b16 %v1605
        %v1819 = vunpack.c.l.b16 %v1606
        %v1820 = vunpack.c.h.b16 %v1606
        %v1821 = vunpack.c.l.b16 %v1607
        %v1822 = vunpack.c.l.b16 %v1608
        %v1823 = vunpack.c.h.b16 %v1608
        %v1824 = vunpack.c.l.b16 %v1609
        %v1825 = vunpack.c.l.b16 %v1610
        %v1826 = vunpack.c.h.b16 %v1610
        %v1827 = vunpack.c.l.b16 %v1611
        %v1828 = vunpack.c.l.b16 %v1612
        %v1829 = vunpack.c.h.b16 %v1612
        %v1830 = vunpack.c.l.b16 %v1613
        %v1831 = vunpack.c.l.b16 %v1614
        %v1832 = vunpack.c.h.b16 %v1614
        %v1833 = vunpack.c.l.b16 %v1615
        %v1834 = vunpack.c.l.b16 %v1616
        %v1835 = vunpack.c.h.b16 %v1616
        %v1836 = vunpack.c.l.b16 %v1617
        %v1837 = vunpack.c.l.b16 %v1618
        %v1838 = vunpack.c.h.b16 %v1618
        %v1839 = vunpack.c.l.b16 %v1619
        %v1840 = vunpack.c.l.b16 %v1620
        %v1841 = vunpack.c.h.b16 %v1620
        %v1842 = vunpack.c.l.b16 %v1621
        %v1843 = vunpack.c.l.b16 %v1622
        %v1844 = vunpack.c.h.b16 %v1622
        %v1845 = vunpack.c.l.b16 %v1623
        %v1846 = vunpack.c.l.b16 %v1624
        %v1847 = vunpack.c.h.b16 %v1624
        %v1848 = vunpack.c.l.b16 %v1625
        %v1849 = vunpack.c.l.b16 %v1626
        %v1850 = vunpack.c.h.b16 %v1626
        %v1851 = vunpack.c.l.b16 %v1627
        %v1852 = vunpack.c.l.b16 %v1628
        %v1853 = vunpack.c.h.b16 %v1628
        %v1854 = vunpack.c.l.b16 %v1629
        %v1855 = vunpack.c.l.b16 %v1630
        %v1856 = vunpack.c.h.b16 %v1630
        %v1857 = vunpack.c.l.b16 %v1631
        %v1858 = vunpack.c.l.b16 %v1632
        %v1859 = vunpack.c.h.b16 %v1632
        %v1860 = vunpack.c.l.b16 %v1633
        %v1861 = vunpack.c.l.b16 %v1634
        %v1862 = vunpack.c.h.b16 %v1634
        %v1863 = vunpack.c.l.b16 %v1635
        %v1864 = vunpack.c.l.b16 %v1636
        %v1865 = vunpack.c.h.b16 %v1636
        %v1866 = vunpack.c.l.b16 %v1637
        %v1867 = vunpack.c.l.b16 %v1638
        %v1868 = vunpack.c.h.b16 %v1638
        %v1869 = vunpack.c.l.b16 %v1639
        %v1870 = vunpack.c.l.b16 %v1640
        %v1871 = vunpack.c.h.b16 %v1640
        %v1872 = vunpack.c.l.b16 %v1641
        %v1873 = vunpack.c.l.b16 %v1642
        %v1874 = vunpack.c.h.b16 %v1642
        %v1875 = vunpack.c.l.b16 %v1643
        %v1876 = vunpack.c.l.b16 %v1644
        %v1877 = vunpack.c.h.b16 %v1644
        %v1878 = vunpack.c.l.b16 %v1645
        %v1879 = vunpack.c.l.b16 %v1646
        %v1880 = vunpack.c.h.b16 %v1646
        %v1881 = vunpack.c.l.b16 %v1647
        %v1882 = vunpack.c.l.b16 %v1648
        %v1883 = vunpack.c.h.b16 %v1648
        %v1884 = vunpack.c.l.b16 %v1649
        %v1885 = vunpack.c.l.b16 %v1650
        %v1886 = vunpack.c.h.b16 %v1650
        %v1887 = vunpack.c.l.b16 %v1651
        %v1888 = vunpack.c.l.b16 %v1652
        %v1889 = vunpack.c.h.b16 %v1652
        %v1890 = vunpack.c.l.b16 %v1653
        %v1891 = vunpack.c.l.b16 %v1654
        %v1892 = vunpack.c.h.b16 %v1654
        %v1893 = vunpack.c.l.b16 %v1655
        %v1894 = vunpack.c.l.b16 %v1656
        %v1895 = vunpack.c.h.b16 %v1656
        %v1896 = vunpack.c.l.b16 %v1657
        %v1897 = vunpack.c.l.b16 %v1658
        %v1898 = vunpack.c.h.b16 %v1658
        %v1899 = vunpack.c.l.b16 %v1659
        %v1900 = vunpack.c.l.b16 %v1660
        %v1901 = vunpack.c.h.b16 %v1660
        %v1902 = vunpack.c.l.b16 %v1661
        %v1903 = vunpack.c.l.b16 %v1662
        %v1904 = vunpack.c.h.b16 %v1662
        %v1905 = vunpack.c.l.b16 %v1663
        %v1906 = vunpack.c.l.b16 %v1664
        %v1907 = vunpack.c.h.b16 %v1664
        %v1908 = vunpack.c.l.b16 %v1665
        %v1909 = vunpack.c.l.b16 %v1666
        %v1910 = vunpack.c.h.b16 %v1666
        %v1911 = vunpack.c.l.b16 %v1667
        %v1912 = vunpack.c.l.b16 %v1668
        %v1913 = vunpack.c.h.b16 %v1668
        %v1914 = vunpack.c.l.b16 %v1669
        %v1915 = vunpack.c.l.b16 %v1670
        %v1916 = vunpack.c.h.b16 %v1670
        %v1917 = vunpack.c.l.b16 %v1671
        %v1918 = vunpack.c.l.b16 %v1672
        %v1919 = vunpack.c.h.b16 %v1672
        %v1920 = vunpack.c.l.b16 %v1673
        %v1921 = vunpack.c.l.b16 %v1674
        %v1922 = vunpack.c.h.b16 %v1674
        %v1923 = vunpack.c.l.b16 %v1675
        %v1924 = vunpack.c.l.b16 %v1676
        %v1925 = vunpack.c.h.b16 %v1676
        %v1926 = vunpack.c.l.b16 %v1677
        %v1927 = vunpack.c.l.b16 %v1678
        %v1928 = vunpack.c.h.b16 %v1678
        %v1929 = vunpack.c.l.b16 %v1679
        %v1930 = vunpack.c.l.b16 %v1680
        %v1931 = vunpack.c.h.b16 %v1680
        %v1932 = vunpack.c.l.b16 %v1681
        %v1933 = vunpack.c.l.b16 %v1682
        %v1934 = vunpack.c.h.b16 %v1682
        %v1935 = vunpack.c.l.b16 %v1683
        %v1936 = vunpack.c.l.b16 %v1684
        %v1937 = vunpack.c.h.b16 %v1684
        %v1938 = vunpack.c.l.b16 %v1685
        %v1939 = vunpack.c.l.b16 %v1686
        %v1940 = vunpack.c.h.b16 %v1686
        %v1941 = vunpack.c.l.b16 %v1687
        %v1942 = vunpack.c.l.b16 %v1688
        %v1943 = vunpack.c.h.b16 %v1688
        %v1944 = vunpack.c.l.b16 %v1689
        %v1945 = vunpack.c.l.b16 %v1690
        %v1946 = vunpack.c.h.b16 %v1690
        %v1947 = vunpack.c.l.b16 %v1691
        %v1948 = vunpack.c.l.b16 %v1692
        %v1949 = vunpack.c.h.b16 %v1692
        %v1950 = vunpack.c.l.b16 %v1693
        %v1951 = vunpack.c.l.b16 %v1694
        %v1952 = vunpack.c.h.b16 %v1694
        %v1953 = vunpack.c.l.b16 %v1695
        %v1954 = vunpack.c.l.b16 %v1696
        %v1955 = vunpack.c.h.b16 %v1696
        %v1956 = vunpack.c.l.b16 %v1697
        %v1957 = vpack.c.b16 %v1816, %v1813
        %v1958 = vpack.c.b16 %v1817, %v1814
        %v1959 = vpack.c.b16 %v1818, %v1815
        %v1960 = vpack.c.b16 %v1822, %v1819
        %v1961 = vpack.c.b16 %v1823, %v1820
        %v1962 = vpack.c.b16 %v1824, %v1821
        %v1963 = vpack.c.b16 %v1828, %v1825
        %v1964 = vpack.c.b16 %v1829, %v1826
        %v1965 = vpack.c.b16 %v1830, %v1827
        %v1966 = vpack.c.b16 %v1834, %v1831
        %v1967 = vpack.c.b16 %v1835, %v1832
        %v1968 = vpack.c.b16 %v1836, %v1833
        %v1969 = vpack.c.b16 %v1840, %v1837
        %v1970 = vpack.c.b16 %v1841, %v1838
        %v1971 = vpack.c.b16 %v1842, %v1839
        %v1972 = vpack.c.b16 %v1846, %v1843
        %v1973 = vpack.c.b16 %v1847, %v1844
        %v1974 = vpack.c.b16 %v1848, %v1845
        %v1975 = vpack.c.b16 %v1852, %v1849
        %v1976 = vpack.c.b16 %v1853, %v1850
        %v1977 = vpack.c.b16 %v1854, %v1851
        %v1978 = vpack.c.b16 %v1858, %v1855
        %v1979 = vpack.c.b16 %v1859, %v1856
        %v1980 = vpack.c.b16 %v1860, %v1857
        %v1981 = vpack.c.b16 %v1864, %v1861
        %v1982 = vpack.c.b16 %v1865, %v1862
        %v1983 = vpack.c.b16 %v1866, %v1863
        %v1984 = vpack.c.b16 %v1870, %v1867
        %v1985 = vpack.c.b16 %v1871, %v1868
        %v1986 = vpack.c.b16 %v1872, %v1869
        %v1987 = vpack.c.b16 %v1876, %v1873
        %v1988 = vpack.c.b16 %v1877, %v1874
        %v1989 = vpack.c.b16 %v1878, %v1875
        %v1990 = vpack.c.b16 %v1882, %v1879
        %v1991 = vpack.c.b16 %v1883, %v1880
        %v1992 = vpack.c.b16 %v1884, %v1881
        %v1993 = vpack.c.b16 %v1888, %v1885
        %v1994 = vpack.c.b16 %v1889, %v1886
        %v1995 = vpack.c.b16 %v1890, %v1887
        %v1996 = vpack.c.b16 %v1894, %v1891
        %v1997 = vpack.c.b16 %v1895, %v1892
        %v1998 = vpack.c.b16 %v1896, %v1893
        %v1999 = vpack.c.b16 %v1900, %v1897
        %v2000 = vpack.c.b16 %v1901, %v1898
        %v2001 = vpack.c.b16 %v1902, %v1899
        %v2002 = vpack.c.b16 %v1906, %v1903
        %v2003 = vpack.c.b16 %v1907, %v1904
        %v2004 = vpack.c.b16 %v1908, %v1905
        %v2005 = vpack.c.b16 %v1912, %v1909
        %v2006 = vpack.c.b16 %v1913, %v1910
        %v2007 = vpack.c.b16 %v1914, %v1911
        %v2008 = vpack.c.b16 %v1918, %v1915
        %v2009 = vpack.c.b16 %v1919, %v1916
        %v2010 = vpack.c.b16 %v1920, %v1917
        %v2011 = vpack.c.b16 %v1924, %v1921
        %v2012 = vpack.c.b16 %v1925, %v1922
        %v2013 = vpack.c.b16 %v1926, %v1923
        %v2014 = vpack.c.b16 %v1930, %v1927
        %v2015 = vpack.c.b16 %v1931, %v1928
        %v2016 = vpack.c.b16 %v1932, %v1929
        %v2017 = vpack.c.b16 %v1936, %v1933
        %v2018 = vpack.c.b16 %v1937, %v1934
        %v2019 = vpack.c.b16 %v1938, %v1935
        %v2020 = vpack.c.b16 %v1942, %v1939
        %v2021 = vpack.c.b16 %v1943, %v1940
        %v2022 = vpack.c.b16 %v1944, %v1941
        %v2023 = vpack.c.b16 %v1948, %v1945
        %v2024 = vpack.c.b16 %v1949, %v1946
        %v2025 = vpack.c.b16 %v1950, %v1947
        %v2026 = vpack.c.b16 %v1954, %v1951
        %v2027 = vpack.c.b16 %v1955, %v1952
        %v2028 = vpack.c.b16 %v1956, %v1953
        %2101 = vmatprep.subr.bf16.mxu0 %v1958
        %2102 = vmatpush1.bf16.msra.mxu0 %v1957
        %2103 = vmatprep.subr.bf16.mxu0 %v1961
        %2104 = vmatpush1.bf16.msra.mxu0 %v1960
        %2105 = vmatprep.subr.bf16.mxu0 %v1964
        %2106 = vmatpush1.bf16.msra.mxu0 %v1963
        %2107 = vmatprep.subr.bf16.mxu0 %v1967
        %2108 = vmatpush1.bf16.msra.mxu0 %v1966
        %2109 = vmatprep.subr.bf16.mxu0 %v1970
        %2110 = vmatpush1.bf16.msra.mxu0 %v1969
        %2111 = vmatprep.subr.bf16.mxu0 %v1973
        %2112 = vmatpush1.bf16.msra.mxu0 %v1972
        %2113 = vmatprep.subr.bf16.mxu0 %v1976
        %2114 = vmatpush1.bf16.msra.mxu0 %v1975
        %2115 = vmatprep.subr.bf16.mxu0 %v1979
        %2116 = vmatpush1.bf16.msra.mxu0 %v1978
        %2117 = vmatprep.subr.bf16.mxu0 %v1982
        %2118 = vmatpush1.bf16.msra.mxu0 %v1981
        %2119 = vmatprep.subr.bf16.mxu0 %v1985
        %2120 = vmatpush1.bf16.msra.mxu0 %v1984
        %2121 = vmatprep.subr.bf16.mxu0 %v1988
        %2122 = vmatpush1.bf16.msra.mxu0 %v1987
        %2123 = vmatprep.subr.bf16.mxu0 %v1991
        %2124 = vmatpush1.bf16.msra.mxu0 %v1990
        %2125 = vmatprep.subr.bf16.mxu0 %v1994
        %2126 = vmatpush1.bf16.msra.mxu0 %v1993
        %2127 = vmatprep.subr.bf16.mxu0 %v1997
        %2128 = vmatpush1.bf16.msra.mxu0 %v1996
        %2129 = vmatprep.subr.bf16.mxu0 %v2000
        %2130 = vmatpush1.bf16.msra.mxu0 %v1999
        %2131 = vmatprep.subr.bf16.mxu0 %v2003
        %2132 = vmatpush1.bf16.msra.mxu0 %v2002
        %2133 = vmatprep.mubr.bf16.mxu0 %v1596
        %2134 = vmatmul.mubr.bf16.gmra.mrb[0].mxu0 %v1595
        %v2135 = vpop.f32.mrb[0].mxu0
        %v2136 = vadd.f32 %v1705, %v2135
        %v2137 = vpop.f32.mrb[0].mxu0
        %v2138 = vadd.f32 %v1709, %v2137
        %v2139 = vpop.f32.mrb[0].mxu0
        %v2140 = vadd.f32 %v1705, %v2139
        %v2141 = vpop.f32.mrb[0].mxu0
        %v2142 = vadd.f32 %v1709, %v2141
        %2143 = vdwg.mxu0
        %2144 = vmatprep.subr.bf16.mxu0 %v2006
        %2145 = vmatpush1.bf16.msra.mxu0 %v2005
        %2146 = vmatprep.subr.bf16.mxu0 %v2009
        %2147 = vmatpush1.bf16.msra.mxu0 %v2008
        %2148 = vmatprep.subr.bf16.mxu0 %v2012
        %2149 = vmatpush1.bf16.msra.mxu0 %v2011
        %2150 = vmatprep.subr.bf16.mxu0 %v2015
        %2151 = vmatpush1.bf16.msra.mxu0 %v2014
        %2152 = vmatprep.subr.bf16.mxu0 %v2018
        %2153 = vmatpush1.bf16.msra.mxu0 %v2017
        %2154 = vmatprep.subr.bf16.mxu0 %v2021
        %2155 = vmatpush1.bf16.msra.mxu0 %v2020
        %2156 = vmatprep.subr.bf16.mxu0 %v2024
        %2157 = vmatpush1.bf16.msra.mxu0 %v2023
        %2158 = vmatprep.subr.bf16.mxu0 %v2027
        %2159 = vmatpush1.bf16.msra.mxu0 %v2026
        %2160 = vmatprep.subr.bf16.mxu0 0
        %2161 = vmatpush1.bf16.msra.mxu0 0
        %2162 = vmatprep.subr.bf16.mxu0 0
        %2163 = vmatpush1.bf16.msra.mxu0 0
        %2164 = vmatprep.subr.bf16.mxu0 0
        %2165 = vmatpush1.bf16.msra.mxu0 0
        %2166 = vmatprep.subr.bf16.mxu0 0
        %2167 = vmatpush1.bf16.msra.mxu0 0
        %2168 = vmatprep.subr.bf16.mxu0 0
        %2169 = vmatpush1.bf16.msra.mxu0 0
        %2170 = vmatprep.subr.bf16.mxu0 0
        %2171 = vmatpush1.bf16.msra.mxu0 0
        %2172 = vmatprep.subr.bf16.mxu0 0
        %2173 = vmatpush1.bf16.msra.mxu0 0
        %2174 = vmatprep.subr.bf16.mxu0 0
        %2175 = vmatpush1.bf16.msra.mxu0 0
        %2176 = vmatprep.mubr.bf16.mxu0 0
        %2177 = vmatmul.mubr.bf16.gmra.mrb[0].mxu0 %v1597
        %v2178 = vpop.f32.mrb[0].mxu0
        %v2179 = vadd.f32 %v2136, %v2178
        %v2180 = vpop.f32.mrb[0].mxu0
        %v2181 = vadd.f32 %v2138, %v2180
        %v2182 = vpop.f32.mrb[0].mxu0
        %v2183 = vadd.f32 %v2140, %v2182
        %v2184 = vpop.f32.mrb[0].mxu0
        %v2185 = vadd.f32 %v2142, %v2184
        %2186 = vdwg.mxu0
        %2187 = vmatprep.subr.bf16.mxu0 0
        %2188 = vmatpush1.bf16.msra.mxu0 %v1959
        %2189 = vmatprep.subr.bf16.mxu0 0
        %2190 = vmatpush1.bf16.msra.mxu0 %v1962
        %2191 = vmatprep.subr.bf16.mxu0 0
        %2192 = vmatpush1.bf16.msra.mxu0 %v1965
        %2193 = vmatprep.subr.bf16.mxu0 0
        %2194 = vmatpush1.bf16.msra.mxu0 %v1968
        %2195 = vmatprep.subr.bf16.mxu0 0
        %2196 = vmatpush1.bf16.msra.mxu0 %v1971
        %2197 = vmatprep.subr.bf16.mxu0 0
        %2198 = vmatpush1.bf16.msra.mxu0 %v1974
        %2199 = vmatprep.subr.bf16.mxu0 0
        %2200 = vmatpush1.bf16.msra.mxu0 %v1977
        %2201 = vmatprep.subr.bf16.mxu0 0
        %2202 = vmatpush1.bf16.msra.mxu0 %v1980
        %2203 = vmatprep.subr.bf16.mxu0 0
        %2204 = vmatpush1.bf16.msra.mxu0 %v1983
        %2205 = vmatprep.subr.bf16.mxu0 0
        %2206 = vmatpush1.bf16.msra.mxu0 %v1986
        %2207 = vmatprep.subr.bf16.mxu0 0
        %2208 = vmatpush1.bf16.msra.mxu0 %v1989
        %2209 = vmatprep.subr.bf16.mxu0 0
        %2210 = vmatpush1.bf16.msra.mxu0 %v1992
        %2211 = vmatprep.subr.bf16.mxu0 0
        %2212 = vmatpush1.bf16.msra.mxu0 %v1995
        %2213 = vmatprep.subr.bf16.mxu0 0
        %2214 = vmatpush1.bf16.msra.mxu0 %v1998
        %2215 = vmatprep.subr.bf16.mxu0 0
        %2216 = vmatpush1.bf16.msra.mxu0 %v2001
        %2217 = vmatprep.subr.bf16.mxu0 0
        %2218 = vmatpush1.bf16.msra.mxu0 %v2004
        %2219 = vmatprep.mubr.bf16.mxu0 %v1596
        %2220 = vmatmul.mubr.bf16.gmra.mrb[0].mxu0 %v1595
        %v2221 = vpop.f32.mrb[0].mxu0
        %v2222 = vadd.f32 %v1713, %v2221
        %v2223 = vpop.f32.mrb[0].mxu0
        %v2224 = vpop.f32.mrb[0].mxu0
        %v2225 = vadd.f32 %v1713, %v2224
        %v2226 = vpop.f32.mrb[0].mxu0
        %2227 = vdwg.mxu0
        %2228 = vmatprep.subr.bf16.mxu0 0
        %2229 = vmatpush1.bf16.msra.mxu0 %v2007
        %2230 = vmatprep.subr.bf16.mxu0 0
        %2231 = vmatpush1.bf16.msra.mxu0 %v2010
        %2232 = vmatprep.subr.bf16.mxu0 0
        %2233 = vmatpush1.bf16.msra.mxu0 %v2013
        %2234 = vmatprep.subr.bf16.mxu0 0
        %2235 = vmatpush1.bf16.msra.mxu0 %v2016
        %2236 = vmatprep.subr.bf16.mxu0 0
        %2237 = vmatpush1.bf16.msra.mxu0 %v2019
        %2238 = vmatprep.subr.bf16.mxu0 0
        %2239 = vmatpush1.bf16.msra.mxu0 %v2022
        %2240 = vmatprep.subr.bf16.mxu0 0
        %2241 = vmatpush1.bf16.msra.mxu0 %v2025
        %2242 = vmatprep.subr.bf16.mxu0 0
        %2243 = vmatpush1.bf16.msra.mxu0 %v2028
        %2244 = vmatprep.subr.bf16.mxu0 0
        %2245 = vmatpush1.bf16.msra.mxu0 0
        %2246 = vmatprep.subr.bf16.mxu0 0
        %2247 = vmatpush1.bf16.msra.mxu0 0
        %2248 = vmatprep.subr.bf16.mxu0 0
        %2249 = vmatpush1.bf16.msra.mxu0 0
        %2250 = vmatprep.subr.bf16.mxu0 0
        %2251 = vmatpush1.bf16.msra.mxu0 0
        %2252 = vmatprep.subr.bf16.mxu0 0
        %2253 = vmatpush1.bf16.msra.mxu0 0
        %2254 = vmatprep.subr.bf16.mxu0 0
        %2255 = vmatpush1.bf16.msra.mxu0 0
        %2256 = vmatprep.subr.bf16.mxu0 0
        %2257 = vmatpush1.bf16.msra.mxu0 0
        %2258 = vmatprep.subr.bf16.mxu0 0
        %2259 = vmatpush1.bf16.msra.mxu0 0
        %2260 = vmatprep.mubr.bf16.mxu0 0
        %2261 = vmatmul.mubr.bf16.gmra.mrb[0].mxu0 %v1597
        %v2262 = vpop.f32.mrb[0].mxu0
        %v2263 = vadd.f32 %v2222, %v2262
        %v2264 = vpop.f32.mrb[0].mxu0
        %v2265 = vpop.f32.mrb[0].mxu0
        %v2266 = vadd.f32 %v2225, %v2265
        %v2267 = vpop.f32.mrb[0].mxu0
        %2268 = vdwg.mxu0
        %v2269 = vmax.f32 %v2179, 0.0
        %v2270 = vmax.f32 %v2181, 0.0
        %v2271 = vmax.f32 %v2263, 0.0
        %v2272 = vmax.f32 %v2183, 0.0
        %v2273 = vmax.f32 %v2185, 0.0
        %v2274 = vmax.f32 %v2266, 0.0
        %2275 = vst [vmem:[%s214] sm:$0xff] %v2269
        %2276 = vst [vmem:[%s214 + $0x8] sm:$0xff] %v2270
        %2277 = vst [vmem:[%s214 + $0x10] sm:$0xff] %v2271
        %2278 = vst [vmem:[%s214 + $0x18] sm:$0xff] %v2272
        %2279 = vst [vmem:[%s214 + $0x20] sm:$0xff] %v2273
        %2280 = vst [vmem:[%s214 + $0x28] sm:$0xff] %v2274
        %s2281 = smul.u32 2, %s23
        %p2282 = scmp.lt.s32.totalorder %s2281, 5
        %s2283 = scalar_select %p2282, %s2281, 5
        %s2284 = smul.addr %s2283, 3
        %s2285 = smul.addr %s2284, 8
        %s2286 = scalar_lea.vmem %s4, %s2285
        // Predicated region
        $region41: #{contrastive_multi_mlp_forward.2} parent=31 // pred_check
          %p2287 = pneg %p109
        $region42: #{contrastive_multi_mlp_forward.2} parent=31 // pred_check_branch
          %2289 = sbr.rel (%p2287) target = $region44
        $region43: #{contrastive_multi_mlp_forward.2} parent=31 // pred_region
          %s2290 = smul.u32 2, %s23
        $region44: #{contrastive_multi_mlp_forward.2} parent=31 // pred_fallthru
          _
      $region32: #{contrastive_multi_mlp_forward.2} parent=5 // pred_fallthru
        _
      %p2291 = scmp.le.s32.totalorder 2, %s18
      // Predicated region
      $region45: #{contrastive_multi_mlp_forward.2} parent=5 // pred_check
        %p2292 = pneg %p2291
      $region46: #{contrastive_multi_mlp_forward.2} parent=5 // pred_check_branch
        %2294 = sbr.rel (%p2292) target = $region48
      $region47: #{contrastive_multi_mlp_forward.2} parent=5 // pred_region
        %s2295 = ssub.s32 %s18, 2
        // Predicated region
        $region49: #{contrastive_multi_mlp_forward.2} parent=47 // pred_check
          %p2296 = pneg %p115
        $region50: #{contrastive_multi_mlp_forward.2} parent=47 // pred_check_branch
          %2298 = sbr.rel (%p2296) target = $region52
        $region51: #{contrastive_multi_mlp_forward.2} parent=47 // pred_region
          %s2299 = smul.u32 2, %s24
          %p2300 = scmp.lt.s32.totalorder %s2299, 5
          %s2301 = scalar_select %p2300, %s2299, 5
          %s2302 = smul.addr %s2301, 3
          %s2303 = smul.addr %s2302, 8
          %s2304 = scalar_lea.vmem %s4, %s2303
        $region52: #{contrastive_multi_mlp_forward.2} parent=47 // pred_fallthru
          _
      $region48: #{contrastive_multi_mlp_forward.2} parent=5 // pred_fallthru
        _
    $region6: #{contrastive_multi_mlp_forward.2} parent=1 // loop_footer
      %s22 = sadd.s32 1, %s18
    $region7: #{contrastive_multi_mlp_forward.2} parent=1 // loop_footer_branch
      %17 = sbr.rel target = $region3
    $region8: #{contrastive_multi_mlp_forward.2} parent=1 // loop_exit
      _
    %2305 = vsyncpa [#allocation5], 1
    %s2306 = scalar_lea.sflag [#allocation5], 1
    %2307 = vsyncpa %s2306, 1
    %2308 = vsyncpa [#allocation7], 1

</llo_original>
